<compile_context>
chip_gen: v6e
topology: v6e:2x2x1
jax: 0.10.0
libtpu: 0.0.40
codegen_flags: <defaults>
</compile_context>

<pallas_src>
import functools

import jax
import jax.numpy as jnp
from jax.experimental import pallas as pl
from jax.experimental.pallas import tpu as pltpu

BN_EPS = 1e-5
LANE = 128      # TPU lane width: conv output channels are padded to this
SUBLANE = 8     # sublane alignment for the K (reduction) dimension


def _round_up(x, m):
    return (x + m - 1) // m * m


# ---------------------------------------------------------------------------
# Pallas kernels: fused matmul + (BN-folded) bias [+ residual] + optional ReLU
# ---------------------------------------------------------------------------
def _mm_bias_kernel(a_ref, b_ref, bias_ref, o_ref, *, apply_relu):
    acc = jnp.dot(a_ref[...], b_ref[...], preferred_element_type=jnp.float32)
    acc = acc + bias_ref[...]
    if apply_relu:
        acc = jnp.maximum(acc, 0.0)
    o_ref[...] = acc.astype(o_ref.dtype)


def _mm_bias_res_kernel(a_ref, b_ref, bias_ref, res_ref, o_ref, *, apply_relu):
    acc = jnp.dot(a_ref[...], b_ref[...], preferred_element_type=jnp.float32)
    acc = acc + bias_ref[...] + res_ref[...].astype(jnp.float32)
    if apply_relu:
        acc = jnp.maximum(acc, 0.0)
    o_ref[...] = acc.astype(o_ref.dtype)


def _pick_tm(m):
    """Largest tile (multiple of 8) dividing M that still gives a grid of >= 2 blocks."""
    for tm in (512, 256, 128, 64, 32, 16, 8):
        if m % tm == 0 and m // tm >= 2:
            return tm
    return m


def fused_matmul(a, b, bias, res=None, relu=False):
    """out[M, NP] = relu(a @ b + bias (+ res)).

    a:    (M, K)  activation patches  -> bf16, K zero-padded to a multiple of 8
    b:    (K, N)  scale-folded weight -> bf16, N zero-padded to a multiple of 128
    bias: (N,)    folded BN bias      -> f32 row vector, zero-padded
    res:  (M, N)  optional residual   -> bf16, zero-padded to NP (only when given)
    Returns the lane-dense padded (M, NP) bf16 output; caller slices [:, :N].
    """
    M, K = a.shape
    N = b.shape[1]
    KP = _round_up(K, SUBLANE)
    NP = _round_up(N, LANE)

    a = jnp.pad(a.astype(jnp.bfloat16), ((0, 0), (0, KP - K)))
    b = jnp.pad(b.astype(jnp.bfloat16), ((0, KP - K), (0, NP - N)))
    bias = jnp.pad(bias.astype(jnp.float32), (0, NP - N)).reshape(1, NP)

    tm = _pick_tm(M)
    grid = (M // tm,)

    in_specs = [
        pl.BlockSpec((tm, KP), lambda i: (i, 0)),   # patches tile
        pl.BlockSpec((KP, NP), lambda i: (0, 0)),   # weights (resident)
        pl.BlockSpec((1, NP), lambda i: (0, 0)),    # folded BN bias (resident)
    ]
    args = [a, b, bias]
    if res is None:
        kernel = functools.partial(_mm_bias_kernel, apply_relu=relu)
    else:
        res = jnp.pad(res.astype(jnp.bfloat16), ((0, 0), (0, NP - res.shape[1])))
        in_specs.append(pl.BlockSpec((tm, NP), lambda i: (i, 0)))
        args.append(res)
        kernel = functools.partial(_mm_bias_res_kernel, apply_relu=relu)

    return pl.pallas_call(
        kernel,
        out_shape=jax.ShapeDtypeStruct((M, NP), jnp.bfloat16),
        grid_spec=pltpu.PrefetchScalarGridSpec(
            num_scalar_prefetch=0,
            grid=grid,
            in_specs=in_specs,
            out_specs=pl.BlockSpec((tm, NP), lambda i: (i, 0)),
        ),
        compiler_params=pltpu.CompilerParams(dimension_semantics=("parallel",)),
    )(*args)


# ---------------------------------------------------------------------------
# Pallas kernel: fused adaptive-avg-pool(1,1) + flatten + final linear layer
# ---------------------------------------------------------------------------
def _pool_fc_kernel(x_ref, w_ref, b_ref, logits_ref, h_ref):
    x = x_ref[...].astype(jnp.float32)      # (B, OH*OW, C)
    h = jnp.mean(x, axis=1)                 # (B, C) global average pool
    h_ref[...] = h
    logits_ref[...] = (
        jnp.dot(h, w_ref[...], preferred_element_type=jnp.float32) + b_ref[...]
    )


def avgpool_fc(x, fc_w, fc_b):
    """x: (B, OH*OW, C) bf16 -> (logits[B, out_dim] f32, h[B, C] f32) in one launch."""
    b, _, c = x.shape
    n_out = fc_w.shape[0]
    w = fc_w.T.astype(jnp.float32)                     # (C, out_dim)
    bias = fc_b.reshape(1, n_out).astype(jnp.float32)
    logits, h = pl.pallas_call(
        _pool_fc_kernel,
        out_shape=(jax.ShapeDtypeStruct((b, n_out), jnp.float32),
                   jax.ShapeDtypeStruct((b, c), jnp.float32)),
    )(x, w, bias)
    return logits, h


# ---------------------------------------------------------------------------
# Conv-as-matmul glue (plain JAX, bf16 patches)
# ---------------------------------------------------------------------------
def _im2col(x, kh, kw, stride, pad):
    """x: NHWC bf16 -> patches (N*OH*OW, KH*KW*Cin), ordered (kh, kw, cin)."""
    n, h, w, c = x.shape
    xp = jnp.pad(x, ((0, 0), (pad, pad), (pad, pad), (0, 0)))
    oh = (h + 2 * pad - kh) // stride + 1
    ow = (w + 2 * pad - kw) // stride + 1
    cols = []
    for i in range(kh):
        for j in range(kw):
            cols.append(xp[:, i:i + stride * oh:stride, j:j + stride * ow:stride, :])
    patches = jnp.concatenate(cols, axis=-1)  # (n, oh, ow, kh*kw*c) in bf16
    return patches.reshape(n * oh * ow, kh * kw * c), (n, oh, ow)


def conv_bn(x, w, bn, stride, pad, relu=False, res=None):
    """x: NHWC bf16, w: PyTorch conv weight (Cout, Cin, KH, KW), bn: eval-mode params."""
    cout, cin, kh, kw = w.shape
    wmat = jnp.transpose(w, (2, 3, 1, 0)).reshape(kh * kw * cin, cout)
    scale = bn["gamma"] / jnp.sqrt(bn["var"] + BN_EPS)
    bias = bn["beta"] - bn["mean"] * scale
    wmat = wmat * scale[None, :]            # fold BN scale into weight columns
    patches, (n, oh, ow) = _im2col(x, kh, kw, stride, pad)
    res_flat = None if res is None else res.reshape(n * oh * ow, cout)
    out = fused_matmul(patches, wmat, bias, res=res_flat, relu=relu)  # (M, NP) bf16
    return out[:, :cout].reshape(n, oh, ow, cout)


def maxpool3x3_s2_p1(x):
    """nn.MaxPool2d(kernel_size=3, stride=2, padding=1) on NHWC input (plain-JAX glue)."""
    n, h, w, c = x.shape
    xp = jnp.pad(x, ((0, 0), (1, 1), (1, 1), (0, 0)), constant_values=-jnp.inf)
    oh = (h + 2 - 3) // 2 + 1
    ow = (w + 2 - 3) // 2 + 1
    out = None
    for i in range(3):
        for j in range(3):
            s = xp[:, i:i + 2 * oh:2, j:j + 2 * ow:2, :]
            out = s if out is None else jnp.maximum(out, s)
    return out


# ---------------------------------------------------------------------------
# Parameters (deterministic, synthetic)
# ---------------------------------------------------------------------------
CHANNELS = [8, 16, 32, 64]
N_BLOCKS = [1, 1, 1, 1]
OUTPUT_DIM = 10


def init_params(key):
    keys = iter(jax.random.split(key, 64))

    def conv_w(cout, cin, k):
        fan_in = cin * k * k
        return jax.random.normal(next(keys), (cout, cin, k, k), jnp.float32) * (2.0 / fan_in) ** 0.5

    def bn_p(c):
        return dict(
            gamma=jnp.ones((c,), jnp.float32),
            beta=jnp.zeros((c,), jnp.float32),
            mean=jnp.zeros((c,), jnp.float32),
            var=jnp.ones((c,), jnp.float32),
        )

    params = {
        "conv1": conv_w(CHANNELS[0], 3, 7),
        "bn1": bn_p(CHANNELS[0]),
    }
    in_ch = CHANNELS[0]
    layers = []
    for nb, ch in zip(N_BLOCKS, CHANNELS):
        blocks = []
        for bi in range(nb):
            cin = in_ch if bi == 0 else ch
            blk = {
                "conv1": conv_w(ch, cin, 3),
                "bn1": bn_p(ch),
                "conv2": conv_w(ch, ch, 3),
                "bn2": bn_p(ch),
            }
            if bi == 0 and cin != ch:  # downsample (channel projection)
                blk["down_conv"] = conv_w(ch, cin, 1)
                blk["down_bn"] = bn_p(ch)
            blocks.append(blk)
        in_ch = ch
        layers.append(blocks)
    params["layers"] = layers
    params["fc_w"] = jax.random.normal(next(keys), (OUTPUT_DIM, in_ch), jnp.float32) * (1.0 / in_ch) ** 0.5
    params["fc_b"] = jnp.zeros((OUTPUT_DIM,), jnp.float32)
    return params


# ---------------------------------------------------------------------------
# Forward pass (matches ResNet.forward: returns (logits, pooled features h))
# ---------------------------------------------------------------------------
def resnet_forward(params, x_nchw):
    x = jnp.transpose(x_nchw, (0, 2, 3, 1)).astype(jnp.bfloat16)  # NCHW -> NHWC, bf16

    # stem: conv7x7 s2 p3 + BN + ReLU + maxpool3x3 s2 p1
    x = conv_bn(x, params["conv1"], params["bn1"], stride=2, pad=3, relu=True)
    x = maxpool3x3_s2_p1(x)

    # residual layers (BasicBlock)
    for blocks in params["layers"]:
        for blk in blocks:
            identity = x
            if "down_conv" in blk:
                identity = conv_bn(x, blk["down_conv"], blk["down_bn"],
                                   stride=1, pad=0, relu=False)
            out = conv_bn(x, blk["conv1"], blk["bn1"], stride=1, pad=1, relu=True)
            out = conv_bn(out, blk["conv2"], blk["bn2"], stride=1, pad=1,
                          relu=True, res=identity)  # += identity, then ReLU
            x = out

    # fused adaptive avg pool (1,1) + flatten + fc in a single Pallas kernel
    b, oh, ow, c = x.shape
    logits, h = avgpool_fc(x.reshape(b, oh * ow, c), params["fc_w"], params["fc_b"])
    return logits, h


if __name__ == "__main__":
    key = jax.random.PRNGKey(0)
    kp, kx = jax.random.split(key)
    params = init_params(kp)
    x = jax.random.normal(kx, (2, 3, 32, 32), jnp.float32)  # NCHW, like PyTorch

    fwd = jax.jit(resnet_forward)
    logits, h = fwd(params, x)
    jax.block_until_ready((logits, h))

    assert logits.shape == (2, OUTPUT_DIM), logits.shape
    assert h.shape == (2, CHANNELS[-1]), h.shape
    assert bool(jnp.all(jnp.isfinite(logits))) and bool(jnp.all(jnp.isfinite(h)))
    print("KERNEL_OK")
</pallas_src>

<mosaic_0001>
module attributes {stable_mosaic.version = 11 : i64} {
  func.func @_mm_bias_kernel(%arg0: i32, %arg1: memref<256x152xbf16, #tpu.memory_space<vmem>>, %arg2: memref<152x128xbf16, #tpu.memory_space<vmem>>, %arg3: memref<1x128xf32, #tpu.memory_space<vmem>>, %arg4: memref<256x128xbf16, #tpu.memory_space<vmem>>) attributes {dimension_semantics = [#tpu.dimension_semantics<parallel>], iteration_bounds = array<i64: 2>, scalar_prefetch = 0 : i64, scratch_operands = 0 : i64, tpu.core_type = #tpu.core_type<tc>, window_params = [{transform_indices = @transform_0, window_bounds = array<i64: 256, 152>}, {pipeline_mode = #tpu.pipeline_mode<synchronous>, transform_indices = @transform_1, window_bounds = array<i64: 152, 128>}, {pipeline_mode = #tpu.pipeline_mode<synchronous>, transform_indices = @transform_2, window_bounds = array<i64: 1, 128>}, {transform_indices = @transform_3, window_bounds = array<i64: 256, 128>}]} {
    %c0 = arith.constant 0 : index
    %c0_0 = arith.constant 0 : index
    %0 = vector.load %arg1[%c0, %c0_0] : memref<256x152xbf16, #tpu.memory_space<vmem>>, vector<256x152xbf16>
    %c0_1 = arith.constant 0 : index
    %c0_2 = arith.constant 0 : index
    %1 = vector.load %arg2[%c0_1, %c0_2] : memref<152x128xbf16, #tpu.memory_space<vmem>>, vector<152x128xbf16>
    %cst = arith.constant dense<0.000000e+00> : vector<256x128xf32>
    %2 = tpu.matmul %0, %1, %cst {dimension_numbers = #tpu.dot_dimension_numbers<[1], [0], [0], [1], [0, 0, 1, 1], [], []>} : vector<256x152xbf16>, vector<152x128xbf16>, vector<256x128xf32> -> vector<256x128xf32>
    %c0_3 = arith.constant 0 : index
    %c0_4 = arith.constant 0 : index
    %3 = vector.load %arg3[%c0_3, %c0_4] : memref<1x128xf32, #tpu.memory_space<vmem>>, vector<1x128xf32>
    %4 = vector.broadcast %3 : vector<1x128xf32> to vector<256x128xf32>
    %5 = arith.addf %2, %4 : vector<256x128xf32>
    %cst_5 = arith.constant 0.000000e+00 : f32
    %6 = vector.broadcast %cst_5 : f32 to vector<256x128xf32>
    %7 = arith.maximumf %5, %6 : vector<256x128xf32>
    %8 = arith.truncf %7 : vector<256x128xf32> to vector<256x128xbf16>
    %c0_6 = arith.constant 0 : index
    %c0_7 = arith.constant 0 : index
    %9 = vector.load %arg4[%c0_6, %c0_7] : memref<256x128xbf16, #tpu.memory_space<vmem>>, vector<256x128xbf16>
    tpu.vector_store %arg4[%c0_6, %c0_7], %8 {strides = array<i32>} : memref<256x128xbf16, #tpu.memory_space<vmem>>, vector<256x128xbf16>,
    return
  }
  func.func @transform_0(%arg0: i32) -> (i32, i32) {
    %c0_i32 = arith.constant 0 : i32
    %c0_i32_0 = arith.constant 0 : i32
    return %arg0, %c0_i32 : i32, i32
  }
  func.func @transform_1(%arg0: i32) -> (i32, i32) {
    %c0_i32 = arith.constant 0 : i32
    %c0_i32_0 = arith.constant 0 : i32
    %c0_i32_1 = arith.constant 0 : i32
    return %c0_i32, %c0_i32_0 : i32, i32
  }
  func.func @transform_2(%arg0: i32) -> (i32, i32) {
    %c0_i32 = arith.constant 0 : i32
    %c0_i32_0 = arith.constant 0 : i32
    %c0_i32_1 = arith.constant 0 : i32
    return %c0_i32, %c0_i32_0 : i32, i32
  }
  func.func @transform_3(%arg0: i32) -> (i32, i32) {
    %c0_i32 = arith.constant 0 : i32
    %c0_i32_0 = arith.constant 0 : i32
    return %arg0, %c0_i32 : i32, i32
  }
}

module attributes {stable_mosaic.version = 11 : i64} {
  func.func @_mm_bias_kernel(%arg0: i32, %arg1: memref<64x72xbf16, #tpu.memory_space<vmem>>, %arg2: memref<72x128xbf16, #tpu.memory_space<vmem>>, %arg3: memref<1x128xf32, #tpu.memory_space<vmem>>, %arg4: memref<64x128xbf16, #tpu.memory_space<vmem>>) attributes {dimension_semantics = [#tpu.dimension_semantics<parallel>], iteration_bounds = array<i64: 2>, scalar_prefetch = 0 : i64, scratch_operands = 0 : i64, tpu.core_type = #tpu.core_type<tc>, window_params = [{transform_indices = @transform_0, window_bounds = array<i64: 64, 72>}, {pipeline_mode = #tpu.pipeline_mode<synchronous>, transform_indices = @transform_1, window_bounds = array<i64: 72, 128>}, {pipeline_mode = #tpu.pipeline_mode<synchronous>, transform_indices = @transform_2, window_bounds = array<i64: 1, 128>}, {transform_indices = @transform_3, window_bounds = array<i64: 64, 128>}]} {
    %c0 = arith.constant 0 : index
    %c0_0 = arith.constant 0 : index
    %0 = vector.load %arg1[%c0, %c0_0] : memref<64x72xbf16, #tpu.memory_space<vmem>>, vector<64x72xbf16>
    %c0_1 = arith.constant 0 : index
    %c0_2 = arith.constant 0 : index
    %1 = vector.load %arg2[%c0_1, %c0_2] : memref<72x128xbf16, #tpu.memory_space<vmem>>, vector<72x128xbf16>
    %cst = arith.constant dense<0.000000e+00> : vector<64x128xf32>
    %2 = tpu.matmul %0, %1, %cst {dimension_numbers = #tpu.dot_dimension_numbers<[1], [0], [0], [1], [0, 0, 1, 1], [], []>} : vector<64x72xbf16>, vector<72x128xbf16>, vector<64x128xf32> -> vector<64x128xf32>
    %c0_3 = arith.constant 0 : index
    %c0_4 = arith.constant 0 : index
    %3 = vector.load %arg3[%c0_3, %c0_4] : memref<1x128xf32, #tpu.memory_space<vmem>>, vector<1x128xf32>
    %4 = vector.broadcast %3 : vector<1x128xf32> to vector<64x128xf32>
    %5 = arith.addf %2, %4 : vector<64x128xf32>
    %cst_5 = arith.constant 0.000000e+00 : f32
    %6 = vector.broadcast %cst_5 : f32 to vector<64x128xf32>
    %7 = arith.maximumf %5, %6 : vector<64x128xf32>
    %8 = arith.truncf %7 : vector<64x128xf32> to vector<64x128xbf16>
    %c0_6 = arith.constant 0 : index
    %c0_7 = arith.constant 0 : index
    %9 = vector.load %arg4[%c0_6, %c0_7] : memref<64x128xbf16, #tpu.memory_space<vmem>>, vector<64x128xbf16>
    tpu.vector_store %arg4[%c0_6, %c0_7], %8 {strides = array<i32>} : memref<64x128xbf16, #tpu.memory_space<vmem>>, vector<64x128xbf16>,
    return
  }
  func.func @transform_0(%arg0: i32) -> (i32, i32) {
    %c0_i32 = arith.constant 0 : i32
    %c0_i32_0 = arith.constant 0 : i32
    return %arg0, %c0_i32 : i32, i32
  }
  func.func @transform_1(%arg0: i32) -> (i32, i32) {
    %c0_i32 = arith.constant 0 : i32
    %c0_i32_0 = arith.constant 0 : i32
    %c0_i32_1 = arith.constant 0 : i32
    return %c0_i32, %c0_i32_0 : i32, i32
  }
  func.func @transform_2(%arg0: i32) -> (i32, i32) {
    %c0_i32 = arith.constant 0 : i32
    %c0_i32_0 = arith.constant 0 : i32
    %c0_i32_1 = arith.constant 0 : i32
    return %c0_i32, %c0_i32_0 : i32, i32
  }
  func.func @transform_3(%arg0: i32) -> (i32, i32) {
    %c0_i32 = arith.constant 0 : i32
    %c0_i32_0 = arith.constant 0 : i32
    return %arg0, %c0_i32 : i32, i32
  }
}

module attributes {stable_mosaic.version = 11 : i64} {
  func.func @_mm_bias_res_kernel(%arg0: i32, %arg1: memref<64x72xbf16, #tpu.memory_space<vmem>>, %arg2: memref<72x128xbf16, #tpu.memory_space<vmem>>, %arg3: memref<1x128xf32, #tpu.memory_space<vmem>>, %arg4: memref<64x128xbf16, #tpu.memory_space<vmem>>, %arg5: memref<64x128xbf16, #tpu.memory_space<vmem>>) attributes {dimension_semantics = [#tpu.dimension_semantics<parallel>], iteration_bounds = array<i64: 2>, scalar_prefetch = 0 : i64, scratch_operands = 0 : i64, tpu.core_type = #tpu.core_type<tc>, window_params = [{transform_indices = @transform_0, window_bounds = array<i64: 64, 72>}, {pipeline_mode = #tpu.pipeline_mode<synchronous>, transform_indices = @transform_1, window_bounds = array<i64: 72, 128>}, {pipeline_mode = #tpu.pipeline_mode<synchronous>, transform_indices = @transform_2, window_bounds = array<i64: 1, 128>}, {transform_indices = @transform_3, window_bounds = array<i64: 64, 128>}, {transform_indices = @transform_4, window_bounds = array<i64: 64, 128>}]} {
    %c0 = arith.constant 0 : index
    %c0_0 = arith.constant 0 : index
    %0 = vector.load %arg1[%c0, %c0_0] : memref<64x72xbf16, #tpu.memory_space<vmem>>, vector<64x72xbf16>
    %c0_1 = arith.constant 0 : index
    %c0_2 = arith.constant 0 : index
    %1 = vector.load %arg2[%c0_1, %c0_2] : memref<72x128xbf16, #tpu.memory_space<vmem>>, vector<72x128xbf16>
    %cst = arith.constant dense<0.000000e+00> : vector<64x128xf32>
    %2 = tpu.matmul %0, %1, %cst {dimension_numbers = #tpu.dot_dimension_numbers<[1], [0], [0], [1], [0, 0, 1, 1], [], []>} : vector<64x72xbf16>, vector<72x128xbf16>, vector<64x128xf32> -> vector<64x128xf32>
    %c0_3 = arith.constant 0 : index
    %c0_4 = arith.constant 0 : index
    %3 = vector.load %arg3[%c0_3, %c0_4] : memref<1x128xf32, #tpu.memory_space<vmem>>, vector<1x128xf32>
    %4 = vector.broadcast %3 : vector<1x128xf32> to vector<64x128xf32>
    %5 = arith.addf %2, %4 : vector<64x128xf32>
    %c0_5 = arith.constant 0 : index
    %c0_6 = arith.constant 0 : index
    %6 = vector.load %arg4[%c0_5, %c0_6] : memref<64x128xbf16, #tpu.memory_space<vmem>>, vector<64x128xbf16>
    %7 = arith.extf %6 : vector<64x128xbf16> to vector<64x128xf32>
    %8 = arith.addf %5, %7 : vector<64x128xf32>
    %cst_7 = arith.constant 0.000000e+00 : f32
    %9 = vector.broadcast %cst_7 : f32 to vector<64x128xf32>
    %10 = arith.maximumf %8, %9 : vector<64x128xf32>
    %11 = arith.truncf %10 : vector<64x128xf32> to vector<64x128xbf16>
    %c0_8 = arith.constant 0 : index
    %c0_9 = arith.constant 0 : index
    %12 = vector.load %arg5[%c0_8, %c0_9] : memref<64x128xbf16, #tpu.memory_space<vmem>>, vector<64x128xbf16>
    tpu.vector_store %arg5[%c0_8, %c0_9], %11 {strides = array<i32>} : memref<64x128xbf16, #tpu.memory_space<vmem>>, vector<64x128xbf16>,
    return
  }
  func.func @transform_0(%arg0: i32) -> (i32, i32) {
    %c0_i32 = arith.constant 0 : i32
    %c0_i32_0 = arith.constant 0 : i32
    return %arg0, %c0_i32 : i32, i32
  }
  func.func @transform_1(%arg0: i32) -> (i32, i32) {
    %c0_i32 = arith.constant 0 : i32
    %c0_i32_0 = arith.constant 0 : i32
    %c0_i32_1 = arith.constant 0 : i32
    return %c0_i32, %c0_i32_0 : i32, i32
  }
  func.func @transform_2(%arg0: i32) -> (i32, i32) {
    %c0_i32 = arith.constant 0 : i32
    %c0_i32_0 = arith.constant 0 : i32
    %c0_i32_1 = arith.constant 0 : i32
    return %c0_i32, %c0_i32_0 : i32, i32
  }
  func.func @transform_3(%arg0: i32) -> (i32, i32) {
    %c0_i32 = arith.constant 0 : i32
    %c0_i32_0 = arith.constant 0 : i32
    return %arg0, %c0_i32 : i32, i32
  }
  func.func @transform_4(%arg0: i32) -> (i32, i32) {
    %c0_i32 = arith.constant 0 : i32
    %c0_i32_0 = arith.constant 0 : i32
    return %arg0, %c0_i32 : i32, i32
  }
}

module attributes {stable_mosaic.version = 11 : i64} {
  func.func @_mm_bias_kernel(%arg0: i32, %arg1: memref<64x8xbf16, #tpu.memory_space<vmem>>, %arg2: memref<8x128xbf16, #tpu.memory_space<vmem>>, %arg3: memref<1x128xf32, #tpu.memory_space<vmem>>, %arg4: memref<64x128xbf16, #tpu.memory_space<vmem>>) attributes {dimension_semantics = [#tpu.dimension_semantics<parallel>], iteration_bounds = array<i64: 2>, scalar_prefetch = 0 : i64, scratch_operands = 0 : i64, tpu.core_type = #tpu.core_type<tc>, window_params = [{transform_indices = @transform_0, window_bounds = array<i64: 64, 8>}, {pipeline_mode = #tpu.pipeline_mode<synchronous>, transform_indices = @transform_1, window_bounds = array<i64: 8, 128>}, {pipeline_mode = #tpu.pipeline_mode<synchronous>, transform_indices = @transform_2, window_bounds = array<i64: 1, 128>}, {transform_indices = @transform_3, window_bounds = array<i64: 64, 128>}]} {
    %c0 = arith.constant 0 : index
    %c0_0 = arith.constant 0 : index
    %0 = vector.load %arg1[%c0, %c0_0] : memref<64x8xbf16, #tpu.memory_space<vmem>>, vector<64x8xbf16>
    %c0_1 = arith.constant 0 : index
    %c0_2 = arith.constant 0 : index
    %1 = vector.load %arg2[%c0_1, %c0_2] : memref<8x128xbf16, #tpu.memory_space<vmem>>, vector<8x128xbf16>
    %cst = arith.constant dense<0.000000e+00> : vector<64x128xf32>
    %2 = tpu.matmul %0, %1, %cst {dimension_numbers = #tpu.dot_dimension_numbers<[1], [0], [0], [1], [0, 0, 1, 1], [], []>} : vector<64x8xbf16>, vector<8x128xbf16>, vector<64x128xf32> -> vector<64x128xf32>
    %c0_3 = arith.constant 0 : index
    %c0_4 = arith.constant 0 : index
    %3 = vector.load %arg3[%c0_3, %c0_4] : memref<1x128xf32, #tpu.memory_space<vmem>>, vector<1x128xf32>
    %4 = vector.broadcast %3 : vector<1x128xf32> to vector<64x128xf32>
    %5 = arith.addf %2, %4 : vector<64x128xf32>
    %6 = arith.truncf %5 : vector<64x128xf32> to vector<64x128xbf16>
    %c0_5 = arith.constant 0 : index
    %c0_6 = arith.constant 0 : index
    %7 = vector.load %arg4[%c0_5, %c0_6] : memref<64x128xbf16, #tpu.memory_space<vmem>>, vector<64x128xbf16>
    tpu.vector_store %arg4[%c0_5, %c0_6], %6 {strides = array<i32>} : memref<64x128xbf16, #tpu.memory_space<vmem>>, vector<64x128xbf16>,
    return
  }
  func.func @transform_0(%arg0: i32) -> (i32, i32) {
    %c0_i32 = arith.constant 0 : i32
    %c0_i32_0 = arith.constant 0 : i32
    return %arg0, %c0_i32 : i32, i32
  }
  func.func @transform_1(%arg0: i32) -> (i32, i32) {
    %c0_i32 = arith.constant 0 : i32
    %c0_i32_0 = arith.constant 0 : i32
    %c0_i32_1 = arith.constant 0 : i32
    return %c0_i32, %c0_i32_0 : i32, i32
  }
  func.func @transform_2(%arg0: i32) -> (i32, i32) {
    %c0_i32 = arith.constant 0 : i32
    %c0_i32_0 = arith.constant 0 : i32
    %c0_i32_1 = arith.constant 0 : i32
    return %c0_i32, %c0_i32_0 : i32, i32
  }
  func.func @transform_3(%arg0: i32) -> (i32, i32) {
    %c0_i32 = arith.constant 0 : i32
    %c0_i32_0 = arith.constant 0 : i32
    return %arg0, %c0_i32 : i32, i32
  }
}

module attributes {stable_mosaic.version = 11 : i64} {
  func.func @_mm_bias_res_kernel(%arg0: i32, %arg1: memref<64x144xbf16, #tpu.memory_space<vmem>>, %arg2: memref<144x128xbf16, #tpu.memory_space<vmem>>, %arg3: memref<1x128xf32, #tpu.memory_space<vmem>>, %arg4: memref<64x128xbf16, #tpu.memory_space<vmem>>, %arg5: memref<64x128xbf16, #tpu.memory_space<vmem>>) attributes {dimension_semantics = [#tpu.dimension_semantics<parallel>], iteration_bounds = array<i64: 2>, scalar_prefetch = 0 : i64, scratch_operands = 0 : i64, tpu.core_type = #tpu.core_type<tc>, window_params = [{transform_indices = @transform_0, window_bounds = array<i64: 64, 144>}, {pipeline_mode = #tpu.pipeline_mode<synchronous>, transform_indices = @transform_1, window_bounds = array<i64: 144, 128>}, {pipeline_mode = #tpu.pipeline_mode<synchronous>, transform_indices = @transform_2, window_bounds = array<i64: 1, 128>}, {transform_indices = @transform_3, window_bounds = array<i64: 64, 128>}, {transform_indices = @transform_4, window_bounds = array<i64: 64, 128>}]} {
    %c0 = arith.constant 0 : index
    %c0_0 = arith.constant 0 : index
    %0 = vector.load %arg1[%c0, %c0_0] : memref<64x144xbf16, #tpu.memory_space<vmem>>, vector<64x144xbf16>
    %c0_1 = arith.constant 0 : index
    %c0_2 = arith.constant 0 : index
    %1 = vector.load %arg2[%c0_1, %c0_2] : memref<144x128xbf16, #tpu.memory_space<vmem>>, vector<144x128xbf16>
    %cst = arith.constant dense<0.000000e+00> : vector<64x128xf32>
    %2 = tpu.matmul %0, %1, %cst {dimension_numbers = #tpu.dot_dimension_numbers<[1], [0], [0], [1], [0, 0, 1, 1], [], []>} : vector<64x144xbf16>, vector<144x128xbf16>, vector<64x128xf32> -> vector<64x128xf32>
    %c0_3 = arith.constant 0 : index
    %c0_4 = arith.constant 0 : index
    %3 = vector.load %arg3[%c0_3, %c0_4] : memref<1x128xf32, #tpu.memory_space<vmem>>, vector<1x128xf32>
    %4 = vector.broadcast %3 : vector<1x128xf32> to vector<64x128xf32>
    %5 = arith.addf %2, %4 : vector<64x128xf32>
    %c0_5 = arith.constant 0 : index
    %c0_6 = arith.constant 0 : index
    %6 = vector.load %arg4[%c0_5, %c0_6] : memref<64x128xbf16, #tpu.memory_space<vmem>>, vector<64x128xbf16>
    %7 = arith.extf %6 : vector<64x128xbf16> to vector<64x128xf32>
    %8 = arith.addf %5, %7 : vector<64x128xf32>
    %cst_7 = arith.constant 0.000000e+00 : f32
    %9 = vector.broadcast %cst_7 : f32 to vector<64x128xf32>
    %10 = arith.maximumf %8, %9 : vector<64x128xf32>
    %11 = arith.truncf %10 : vector<64x128xf32> to vector<64x128xbf16>
    %c0_8 = arith.constant 0 : index
    %c0_9 = arith.constant 0 : index
    %12 = vector.load %arg5[%c0_8, %c0_9] : memref<64x128xbf16, #tpu.memory_space<vmem>>, vector<64x128xbf16>
    tpu.vector_store %arg5[%c0_8, %c0_9], %11 {strides = array<i32>} : memref<64x128xbf16, #tpu.memory_space<vmem>>, vector<64x128xbf16>,
    return
  }
  func.func @transform_0(%arg0: i32) -> (i32, i32) {
    %c0_i32 = arith.constant 0 : i32
    %c0_i32_0 = arith.constant 0 : i32
    return %arg0, %c0_i32 : i32, i32
  }
  func.func @transform_1(%arg0: i32) -> (i32, i32) {
    %c0_i32 = arith.constant 0 : i32
    %c0_i32_0 = arith.constant 0 : i32
    %c0_i32_1 = arith.constant 0 : i32
    return %c0_i32, %c0_i32_0 : i32, i32
  }
  func.func @transform_2(%arg0: i32) -> (i32, i32) {
    %c0_i32 = arith.constant 0 : i32
    %c0_i32_0 = arith.constant 0 : i32
    %c0_i32_1 = arith.constant 0 : i32
    return %c0_i32, %c0_i32_0 : i32, i32
  }
  func.func @transform_3(%arg0: i32) -> (i32, i32) {
    %c0_i32 = arith.constant 0 : i32
    %c0_i32_0 = arith.constant 0 : i32
    return %arg0, %c0_i32 : i32, i32
  }
  func.func @transform_4(%arg0: i32) -> (i32, i32) {
    %c0_i32 = arith.constant 0 : i32
    %c0_i32_0 = arith.constant 0 : i32
    return %arg0, %c0_i32 : i32, i32
  }
}

module attributes {stable_mosaic.version = 11 : i64} {
  func.func @_mm_bias_kernel(%arg0: i32, %arg1: memref<64x144xbf16, #tpu.memory_space<vmem>>, %arg2: memref<144x128xbf16, #tpu.memory_space<vmem>>, %arg3: memref<1x128xf32, #tpu.memory_space<vmem>>, %arg4: memref<64x128xbf16, #tpu.memory_space<vmem>>) attributes {dimension_semantics = [#tpu.dimension_semantics<parallel>], iteration_bounds = array<i64: 2>, scalar_prefetch = 0 : i64, scratch_operands = 0 : i64, tpu.core_type = #tpu.core_type<tc>, window_params = [{transform_indices = @transform_0, window_bounds = array<i64: 64, 144>}, {pipeline_mode = #tpu.pipeline_mode<synchronous>, transform_indices = @transform_1, window_bounds = array<i64: 144, 128>}, {pipeline_mode = #tpu.pipeline_mode<synchronous>, transform_indices = @transform_2, window_bounds = array<i64: 1, 128>}, {transform_indices = @transform_3, window_bounds = array<i64: 64, 128>}]} {
    %c0 = arith.constant 0 : index
    %c0_0 = arith.constant 0 : index
    %0 = vector.load %arg1[%c0, %c0_0] : memref<64x144xbf16, #tpu.memory_space<vmem>>, vector<64x144xbf16>
    %c0_1 = arith.constant 0 : index
    %c0_2 = arith.constant 0 : index
    %1 = vector.load %arg2[%c0_1, %c0_2] : memref<144x128xbf16, #tpu.memory_space<vmem>>, vector<144x128xbf16>
    %cst = arith.constant dense<0.000000e+00> : vector<64x128xf32>
    %2 = tpu.matmul %0, %1, %cst {dimension_numbers = #tpu.dot_dimension_numbers<[1], [0], [0], [1], [0, 0, 1, 1], [], []>} : vector<64x144xbf16>, vector<144x128xbf16>, vector<64x128xf32> -> vector<64x128xf32>
    %c0_3 = arith.constant 0 : index
    %c0_4 = arith.constant 0 : index
    %3 = vector.load %arg3[%c0_3, %c0_4] : memref<1x128xf32, #tpu.memory_space<vmem>>, vector<1x128xf32>
    %4 = vector.broadcast %3 : vector<1x128xf32> to vector<64x128xf32>
    %5 = arith.addf %2, %4 : vector<64x128xf32>
    %cst_5 = arith.constant 0.000000e+00 : f32
    %6 = vector.broadcast %cst_5 : f32 to vector<64x128xf32>
    %7 = arith.maximumf %5, %6 : vector<64x128xf32>
    %8 = arith.truncf %7 : vector<64x128xf32> to vector<64x128xbf16>
    %c0_6 = arith.constant 0 : index
    %c0_7 = arith.constant 0 : index
    %9 = vector.load %arg4[%c0_6, %c0_7] : memref<64x128xbf16, #tpu.memory_space<vmem>>, vector<64x128xbf16>
    tpu.vector_store %arg4[%c0_6, %c0_7], %8 {strides = array<i32>} : memref<64x128xbf16, #tpu.memory_space<vmem>>, vector<64x128xbf16>,
    return
  }
  func.func @transform_0(%arg0: i32) -> (i32, i32) {
    %c0_i32 = arith.constant 0 : i32
    %c0_i32_0 = arith.constant 0 : i32
    return %arg0, %c0_i32 : i32, i32
  }
  func.func @transform_1(%arg0: i32) -> (i32, i32) {
    %c0_i32 = arith.constant 0 : i32
    %c0_i32_0 = arith.constant 0 : i32
    %c0_i32_1 = arith.constant 0 : i32
    return %c0_i32, %c0_i32_0 : i32, i32
  }
  func.func @transform_2(%arg0: i32) -> (i32, i32) {
    %c0_i32 = arith.constant 0 : i32
    %c0_i32_0 = arith.constant 0 : i32
    %c0_i32_1 = arith.constant 0 : i32
    return %c0_i32, %c0_i32_0 : i32, i32
  }
  func.func @transform_3(%arg0: i32) -> (i32, i32) {
    %c0_i32 = arith.constant 0 : i32
    %c0_i32_0 = arith.constant 0 : i32
    return %arg0, %c0_i32 : i32, i32
  }
}

module attributes {stable_mosaic.version = 11 : i64} {
  func.func @_mm_bias_kernel(%arg0: i32, %arg1: memref<64x16xbf16, #tpu.memory_space<vmem>>, %arg2: memref<16x128xbf16, #tpu.memory_space<vmem>>, %arg3: memref<1x128xf32, #tpu.memory_space<vmem>>, %arg4: memref<64x128xbf16, #tpu.memory_space<vmem>>) attributes {dimension_semantics = [#tpu.dimension_semantics<parallel>], iteration_bounds = array<i64: 2>, scalar_prefetch = 0 : i64, scratch_operands = 0 : i64, tpu.core_type = #tpu.core_type<tc>, window_params = [{transform_indices = @transform_0, window_bounds = array<i64: 64, 16>}, {pipeline_mode = #tpu.pipeline_mode<synchronous>, transform_indices = @transform_1, window_bounds = array<i64: 16, 128>}, {pipeline_mode = #tpu.pipeline_mode<synchronous>, transform_indices = @transform_2, window_bounds = array<i64: 1, 128>}, {transform_indices = @transform_3, window_bounds = array<i64: 64, 128>}]} {
    %c0 = arith.constant 0 : index
    %c0_0 = arith.constant 0 : index
    %0 = vector.load %arg1[%c0, %c0_0] : memref<64x16xbf16, #tpu.memory_space<vmem>>, vector<64x16xbf16>
    %c0_1 = arith.constant 0 : index
    %c0_2 = arith.constant 0 : index
    %1 = vector.load %arg2[%c0_1, %c0_2] : memref<16x128xbf16, #tpu.memory_space<vmem>>, vector<16x128xbf16>
    %cst = arith.constant dense<0.000000e+00> : vector<64x128xf32>
    %2 = tpu.matmul %0, %1, %cst {dimension_numbers = #tpu.dot_dimension_numbers<[1], [0], [0], [1], [0, 0, 1, 1], [], []>} : vector<64x16xbf16>, vector<16x128xbf16>, vector<64x128xf32> -> vector<64x128xf32>
    %c0_3 = arith.constant 0 : index
    %c0_4 = arith.constant 0 : index
    %3 = vector.load %arg3[%c0_3, %c0_4] : memref<1x128xf32, #tpu.memory_space<vmem>>, vector<1x128xf32>
    %4 = vector.broadcast %3 : vector<1x128xf32> to vector<64x128xf32>
    %5 = arith.addf %2, %4 : vector<64x128xf32>
    %6 = arith.truncf %5 : vector<64x128xf32> to vector<64x128xbf16>
    %c0_5 = arith.constant 0 : index
    %c0_6 = arith.constant 0 : index
    %7 = vector.load %arg4[%c0_5, %c0_6] : memref<64x128xbf16, #tpu.memory_space<vmem>>, vector<64x128xbf16>
    tpu.vector_store %arg4[%c0_5, %c0_6], %6 {strides = array<i32>} : memref<64x128xbf16, #tpu.memory_space<vmem>>, vector<64x128xbf16>,
    return
  }
  func.func @transform_0(%arg0: i32) -> (i32, i32) {
    %c0_i32 = arith.constant 0 : i32
    %c0_i32_0 = arith.constant 0 : i32
    return %arg0, %c0_i32 : i32, i32
  }
  func.func @transform_1(%arg0: i32) -> (i32, i32) {
    %c0_i32 = arith.constant 0 : i32
    %c0_i32_0 = arith.constant 0 : i32
    %c0_i32_1 = arith.constant 0 : i32
    return %c0_i32, %c0_i32_0 : i32, i32
  }
  func.func @transform_2(%arg0: i32) -> (i32, i32) {
    %c0_i32 = arith.constant 0 : i32
    %c0_i32_0 = arith.constant 0 : i32
    %c0_i32_1 = arith.constant 0 : i32
    return %c0_i32, %c0_i32_0 : i32, i32
  }
  func.func @transform_3(%arg0: i32) -> (i32, i32) {
    %c0_i32 = arith.constant 0 : i32
    %c0_i32_0 = arith.constant 0 : i32
    return %arg0, %c0_i32 : i32, i32
  }
}

module attributes {stable_mosaic.version = 11 : i64} {
  func.func @_mm_bias_res_kernel(%arg0: i32, %arg1: memref<64x288xbf16, #tpu.memory_space<vmem>>, %arg2: memref<288x128xbf16, #tpu.memory_space<vmem>>, %arg3: memref<1x128xf32, #tpu.memory_space<vmem>>, %arg4: memref<64x128xbf16, #tpu.memory_space<vmem>>, %arg5: memref<64x128xbf16, #tpu.memory_space<vmem>>) attributes {dimension_semantics = [#tpu.dimension_semantics<parallel>], iteration_bounds = array<i64: 2>, scalar_prefetch = 0 : i64, scratch_operands = 0 : i64, tpu.core_type = #tpu.core_type<tc>, window_params = [{transform_indices = @transform_0, window_bounds = array<i64: 64, 288>}, {pipeline_mode = #tpu.pipeline_mode<synchronous>, transform_indices = @transform_1, window_bounds = array<i64: 288, 128>}, {pipeline_mode = #tpu.pipeline_mode<synchronous>, transform_indices = @transform_2, window_bounds = array<i64: 1, 128>}, {transform_indices = @transform_3, window_bounds = array<i64: 64, 128>}, {transform_indices = @transform_4, window_bounds = array<i64: 64, 128>}]} {
    %c0 = arith.constant 0 : index
    %c0_0 = arith.constant 0 : index
    %0 = vector.load %arg1[%c0, %c0_0] : memref<64x288xbf16, #tpu.memory_space<vmem>>, vector<64x288xbf16>
    %c0_1 = arith.constant 0 : index
    %c0_2 = arith.constant 0 : index
    %1 = vector.load %arg2[%c0_1, %c0_2] : memref<288x128xbf16, #tpu.memory_space<vmem>>, vector<288x128xbf16>
    %cst = arith.constant dense<0.000000e+00> : vector<64x128xf32>
    %2 = tpu.matmul %0, %1, %cst {dimension_numbers = #tpu.dot_dimension_numbers<[1], [0], [0], [1], [0, 0, 1, 1], [], []>} : vector<64x288xbf16>, vector<288x128xbf16>, vector<64x128xf32> -> vector<64x128xf32>
    %c0_3 = arith.constant 0 : index
    %c0_4 = arith.constant 0 : index
    %3 = vector.load %arg3[%c0_3, %c0_4] : memref<1x128xf32, #tpu.memory_space<vmem>>, vector<1x128xf32>
    %4 = vector.broadcast %3 : vector<1x128xf32> to vector<64x128xf32>
    %5 = arith.addf %2, %4 : vector<64x128xf32>
    %c0_5 = arith.constant 0 : index
    %c0_6 = arith.constant 0 : index
    %6 = vector.load %arg4[%c0_5, %c0_6] : memref<64x128xbf16, #tpu.memory_space<vmem>>, vector<64x128xbf16>
    %7 = arith.extf %6 : vector<64x128xbf16> to vector<64x128xf32>
    %8 = arith.addf %5, %7 : vector<64x128xf32>
    %cst_7 = arith.constant 0.000000e+00 : f32
    %9 = vector.broadcast %cst_7 : f32 to vector<64x128xf32>
    %10 = arith.maximumf %8, %9 : vector<64x128xf32>
    %11 = arith.truncf %10 : vector<64x128xf32> to vector<64x128xbf16>
    %c0_8 = arith.constant 0 : index
    %c0_9 = arith.constant 0 : index
    %12 = vector.load %arg5[%c0_8, %c0_9] : memref<64x128xbf16, #tpu.memory_space<vmem>>, vector<64x128xbf16>
    tpu.vector_store %arg5[%c0_8, %c0_9], %11 {strides = array<i32>} : memref<64x128xbf16, #tpu.memory_space<vmem>>, vector<64x128xbf16>,
    return
  }
  func.func @transform_0(%arg0: i32) -> (i32, i32) {
    %c0_i32 = arith.constant 0 : i32
    %c0_i32_0 = arith.constant 0 : i32
    return %arg0, %c0_i32 : i32, i32
  }
  func.func @transform_1(%arg0: i32) -> (i32, i32) {
    %c0_i32 = arith.constant 0 : i32
    %c0_i32_0 = arith.constant 0 : i32
    %c0_i32_1 = arith.constant 0 : i32
    return %c0_i32, %c0_i32_0 : i32, i32
  }
  func.func @transform_2(%arg0: i32) -> (i32, i32) {
    %c0_i32 = arith.constant 0 : i32
    %c0_i32_0 = arith.constant 0 : i32
    %c0_i32_1 = arith.constant 0 : i32
    return %c0_i32, %c0_i32_0 : i32, i32
  }
  func.func @transform_3(%arg0: i32) -> (i32, i32) {
    %c0_i32 = arith.constant 0 : i32
    %c0_i32_0 = arith.constant 0 : i32
    return %arg0, %c0_i32 : i32, i32
  }
  func.func @transform_4(%arg0: i32) -> (i32, i32) {
    %c0_i32 = arith.constant 0 : i32
    %c0_i32_0 = arith.constant 0 : i32
    return %arg0, %c0_i32 : i32, i32
  }
}

module attributes {stable_mosaic.version = 11 : i64} {
  func.func @_mm_bias_kernel(%arg0: i32, %arg1: memref<64x288xbf16, #tpu.memory_space<vmem>>, %arg2: memref<288x128xbf16, #tpu.memory_space<vmem>>, %arg3: memref<1x128xf32, #tpu.memory_space<vmem>>, %arg4: memref<64x128xbf16, #tpu.memory_space<vmem>>) attributes {dimension_semantics = [#tpu.dimension_semantics<parallel>], iteration_bounds = array<i64: 2>, scalar_prefetch = 0 : i64, scratch_operands = 0 : i64, tpu.core_type = #tpu.core_type<tc>, window_params = [{transform_indices = @transform_0, window_bounds = array<i64: 64, 288>}, {pipeline_mode = #tpu.pipeline_mode<synchronous>, transform_indices = @transform_1, window_bounds = array<i64: 288, 128>}, {pipeline_mode = #tpu.pipeline_mode<synchronous>, transform_indices = @transform_2, window_bounds = array<i64: 1, 128>}, {transform_indices = @transform_3, window_bounds = array<i64: 64, 128>}]} {
    %c0 = arith.constant 0 : index
    %c0_0 = arith.constant 0 : index
    %0 = vector.load %arg1[%c0, %c0_0] : memref<64x288xbf16, #tpu.memory_space<vmem>>, vector<64x288xbf16>
    %c0_1 = arith.constant 0 : index
    %c0_2 = arith.constant 0 : index
    %1 = vector.load %arg2[%c0_1, %c0_2] : memref<288x128xbf16, #tpu.memory_space<vmem>>, vector<288x128xbf16>
    %cst = arith.constant dense<0.000000e+00> : vector<64x128xf32>
    %2 = tpu.matmul %0, %1, %cst {dimension_numbers = #tpu.dot_dimension_numbers<[1], [0], [0], [1], [0, 0, 1, 1], [], []>} : vector<64x288xbf16>, vector<288x128xbf16>, vector<64x128xf32> -> vector<64x128xf32>
    %c0_3 = arith.constant 0 : index
    %c0_4 = arith.constant 0 : index
    %3 = vector.load %arg3[%c0_3, %c0_4] : memref<1x128xf32, #tpu.memory_space<vmem>>, vector<1x128xf32>
    %4 = vector.broadcast %3 : vector<1x128xf32> to vector<64x128xf32>
    %5 = arith.addf %2, %4 : vector<64x128xf32>
    %cst_5 = arith.constant 0.000000e+00 : f32
    %6 = vector.broadcast %cst_5 : f32 to vector<64x128xf32>
    %7 = arith.maximumf %5, %6 : vector<64x128xf32>
    %8 = arith.truncf %7 : vector<64x128xf32> to vector<64x128xbf16>
    %c0_6 = arith.constant 0 : index
    %c0_7 = arith.constant 0 : index
    %9 = vector.load %arg4[%c0_6, %c0_7] : memref<64x128xbf16, #tpu.memory_space<vmem>>, vector<64x128xbf16>
    tpu.vector_store %arg4[%c0_6, %c0_7], %8 {strides = array<i32>} : memref<64x128xbf16, #tpu.memory_space<vmem>>, vector<64x128xbf16>,
    return
  }
  func.func @transform_0(%arg0: i32) -> (i32, i32) {
    %c0_i32 = arith.constant 0 : i32
    %c0_i32_0 = arith.constant 0 : i32
    return %arg0, %c0_i32 : i32, i32
  }
  func.func @transform_1(%arg0: i32) -> (i32, i32) {
    %c0_i32 = arith.constant 0 : i32
    %c0_i32_0 = arith.constant 0 : i32
    %c0_i32_1 = arith.constant 0 : i32
    return %c0_i32, %c0_i32_0 : i32, i32
  }
  func.func @transform_2(%arg0: i32) -> (i32, i32) {
    %c0_i32 = arith.constant 0 : i32
    %c0_i32_0 = arith.constant 0 : i32
    %c0_i32_1 = arith.constant 0 : i32
    return %c0_i32, %c0_i32_0 : i32, i32
  }
  func.func @transform_3(%arg0: i32) -> (i32, i32) {
    %c0_i32 = arith.constant 0 : i32
    %c0_i32_0 = arith.constant 0 : i32
    return %arg0, %c0_i32 : i32, i32
  }
}

module attributes {stable_mosaic.version = 11 : i64} {
  func.func @_mm_bias_kernel(%arg0: i32, %arg1: memref<64x32xbf16, #tpu.memory_space<vmem>>, %arg2: memref<32x128xbf16, #tpu.memory_space<vmem>>, %arg3: memref<1x128xf32, #tpu.memory_space<vmem>>, %arg4: memref<64x128xbf16, #tpu.memory_space<vmem>>) attributes {dimension_semantics = [#tpu.dimension_semantics<parallel>], iteration_bounds = array<i64: 2>, scalar_prefetch = 0 : i64, scratch_operands = 0 : i64, tpu.core_type = #tpu.core_type<tc>, window_params = [{transform_indices = @transform_0, window_bounds = array<i64: 64, 32>}, {pipeline_mode = #tpu.pipeline_mode<synchronous>, transform_indices = @transform_1, window_bounds = array<i64: 32, 128>}, {pipeline_mode = #tpu.pipeline_mode<synchronous>, transform_indices = @transform_2, window_bounds = array<i64: 1, 128>}, {transform_indices = @transform_3, window_bounds = array<i64: 64, 128>}]} {
    %c0 = arith.constant 0 : index
    %c0_0 = arith.constant 0 : index
    %0 = vector.load %arg1[%c0, %c0_0] : memref<64x32xbf16, #tpu.memory_space<vmem>>, vector<64x32xbf16>
    %c0_1 = arith.constant 0 : index
    %c0_2 = arith.constant 0 : index
    %1 = vector.load %arg2[%c0_1, %c0_2] : memref<32x128xbf16, #tpu.memory_space<vmem>>, vector<32x128xbf16>
    %cst = arith.constant dense<0.000000e+00> : vector<64x128xf32>
    %2 = tpu.matmul %0, %1, %cst {dimension_numbers = #tpu.dot_dimension_numbers<[1], [0], [0], [1], [0, 0, 1, 1], [], []>} : vector<64x32xbf16>, vector<32x128xbf16>, vector<64x128xf32> -> vector<64x128xf32>
    %c0_3 = arith.constant 0 : index
    %c0_4 = arith.constant 0 : index
    %3 = vector.load %arg3[%c0_3, %c0_4] : memref<1x128xf32, #tpu.memory_space<vmem>>, vector<1x128xf32>
    %4 = vector.broadcast %3 : vector<1x128xf32> to vector<64x128xf32>
    %5 = arith.addf %2, %4 : vector<64x128xf32>
    %6 = arith.truncf %5 : vector<64x128xf32> to vector<64x128xbf16>
    %c0_5 = arith.constant 0 : index
    %c0_6 = arith.constant 0 : index
    %7 = vector.load %arg4[%c0_5, %c0_6] : memref<64x128xbf16, #tpu.memory_space<vmem>>, vector<64x128xbf16>
    tpu.vector_store %arg4[%c0_5, %c0_6], %6 {strides = array<i32>} : memref<64x128xbf16, #tpu.memory_space<vmem>>, vector<64x128xbf16>,
    return
  }
  func.func @transform_0(%arg0: i32) -> (i32, i32) {
    %c0_i32 = arith.constant 0 : i32
    %c0_i32_0 = arith.constant 0 : i32
    return %arg0, %c0_i32 : i32, i32
  }
  func.func @transform_1(%arg0: i32) -> (i32, i32) {
    %c0_i32 = arith.constant 0 : i32
    %c0_i32_0 = arith.constant 0 : i32
    %c0_i32_1 = arith.constant 0 : i32
    return %c0_i32, %c0_i32_0 : i32, i32
  }
  func.func @transform_2(%arg0: i32) -> (i32, i32) {
    %c0_i32 = arith.constant 0 : i32
    %c0_i32_0 = arith.constant 0 : i32
    %c0_i32_1 = arith.constant 0 : i32
    return %c0_i32, %c0_i32_0 : i32, i32
  }
  func.func @transform_3(%arg0: i32) -> (i32, i32) {
    %c0_i32 = arith.constant 0 : i32
    %c0_i32_0 = arith.constant 0 : i32
    return %arg0, %c0_i32 : i32, i32
  }
}

module attributes {stable_mosaic.version = 11 : i64} {
  func.func @_mm_bias_res_kernel(%arg0: i32, %arg1: memref<64x576xbf16, #tpu.memory_space<vmem>>, %arg2: memref<576x128xbf16, #tpu.memory_space<vmem>>, %arg3: memref<1x128xf32, #tpu.memory_space<vmem>>, %arg4: memref<64x128xbf16, #tpu.memory_space<vmem>>, %arg5: memref<64x128xbf16, #tpu.memory_space<vmem>>) attributes {dimension_semantics = [#tpu.dimension_semantics<parallel>], iteration_bounds = array<i64: 2>, scalar_prefetch = 0 : i64, scratch_operands = 0 : i64, tpu.core_type = #tpu.core_type<tc>, window_params = [{transform_indices = @transform_0, window_bounds = array<i64: 64, 576>}, {pipeline_mode = #tpu.pipeline_mode<synchronous>, transform_indices = @transform_1, window_bounds = array<i64: 576, 128>}, {pipeline_mode = #tpu.pipeline_mode<synchronous>, transform_indices = @transform_2, window_bounds = array<i64: 1, 128>}, {transform_indices = @transform_3, window_bounds = array<i64: 64, 128>}, {transform_indices = @transform_4, window_bounds = array<i64: 64, 128>}]} {
    %c0 = arith.constant 0 : index
    %c0_0 = arith.constant 0 : index
    %0 = vector.load %arg1[%c0, %c0_0] : memref<64x576xbf16, #tpu.memory_space<vmem>>, vector<64x576xbf16>
    %c0_1 = arith.constant 0 : index
    %c0_2 = arith.constant 0 : index
    %1 = vector.load %arg2[%c0_1, %c0_2] : memref<576x128xbf16, #tpu.memory_space<vmem>>, vector<576x128xbf16>
    %cst = arith.constant dense<0.000000e+00> : vector<64x128xf32>
    %2 = tpu.matmul %0, %1, %cst {dimension_numbers = #tpu.dot_dimension_numbers<[1], [0], [0], [1], [0, 0, 1, 1], [], []>} : vector<64x576xbf16>, vector<576x128xbf16>, vector<64x128xf32> -> vector<64x128xf32>
    %c0_3 = arith.constant 0 : index
    %c0_4 = arith.constant 0 : index
    %3 = vector.load %arg3[%c0_3, %c0_4] : memref<1x128xf32, #tpu.memory_space<vmem>>, vector<1x128xf32>
    %4 = vector.broadcast %3 : vector<1x128xf32> to vector<64x128xf32>
    %5 = arith.addf %2, %4 : vector<64x128xf32>
    %c0_5 = arith.constant 0 : index
    %c0_6 = arith.constant 0 : index
    %6 = vector.load %arg4[%c0_5, %c0_6] : memref<64x128xbf16, #tpu.memory_space<vmem>>, vector<64x128xbf16>
    %7 = arith.extf %6 : vector<64x128xbf16> to vector<64x128xf32>
    %8 = arith.addf %5, %7 : vector<64x128xf32>
    %cst_7 = arith.constant 0.000000e+00 : f32
    %9 = vector.broadcast %cst_7 : f32 to vector<64x128xf32>
    %10 = arith.maximumf %8, %9 : vector<64x128xf32>
    %11 = arith.truncf %10 : vector<64x128xf32> to vector<64x128xbf16>
    %c0_8 = arith.constant 0 : index
    %c0_9 = arith.constant 0 : index
    %12 = vector.load %arg5[%c0_8, %c0_9] : memref<64x128xbf16, #tpu.memory_space<vmem>>, vector<64x128xbf16>
    tpu.vector_store %arg5[%c0_8, %c0_9], %11 {strides = array<i32>} : memref<64x128xbf16, #tpu.memory_space<vmem>>, vector<64x128xbf16>,
    return
  }
  func.func @transform_0(%arg0: i32) -> (i32, i32) {
    %c0_i32 = arith.constant 0 : i32
    %c0_i32_0 = arith.constant 0 : i32
    return %arg0, %c0_i32 : i32, i32
  }
  func.func @transform_1(%arg0: i32) -> (i32, i32) {
    %c0_i32 = arith.constant 0 : i32
    %c0_i32_0 = arith.constant 0 : i32
    %c0_i32_1 = arith.constant 0 : i32
    return %c0_i32, %c0_i32_0 : i32, i32
  }
  func.func @transform_2(%arg0: i32) -> (i32, i32) {
    %c0_i32 = arith.constant 0 : i32
    %c0_i32_0 = arith.constant 0 : i32
    %c0_i32_1 = arith.constant 0 : i32
    return %c0_i32, %c0_i32_0 : i32, i32
  }
  func.func @transform_3(%arg0: i32) -> (i32, i32) {
    %c0_i32 = arith.constant 0 : i32
    %c0_i32_0 = arith.constant 0 : i32
    return %arg0, %c0_i32 : i32, i32
  }
  func.func @transform_4(%arg0: i32) -> (i32, i32) {
    %c0_i32 = arith.constant 0 : i32
    %c0_i32_0 = arith.constant 0 : i32
    return %arg0, %c0_i32 : i32, i32
  }
}

module attributes {stable_mosaic.version = 11 : i64} {
  func.func @_pool_fc_kernel(%arg0: memref<2x64x64xbf16, #tpu.memory_space<vmem>>, %arg1: memref<64x10xf32, #tpu.memory_space<vmem>>, %arg2: memref<1x10xf32, #tpu.memory_space<vmem>>, %arg3: memref<2x10xf32, #tpu.memory_space<vmem>>, %arg4: memref<2x64xf32, #tpu.memory_space<vmem>>) attributes {dimension_semantics = [], scalar_prefetch = 0 : i64, scratch_operands = 0 : i64, tpu.core_type = #tpu.core_type<tc>} {
    %c0 = arith.constant 0 : index
    %c0_0 = arith.constant 0 : index
    %c0_1 = arith.constant 0 : index
    %0 = vector.load %arg0[%c0, %c0_0, %c0_1] : memref<2x64x64xbf16, #tpu.memory_space<vmem>>, vector<2x64x64xbf16>
    %1 = arith.extf %0 : vector<2x64x64xbf16> to vector<2x64x64xf32>
    %cst = arith.constant dense<0.000000e+00> : vector<2x64xf32>
    %2 = vector.multi_reduction <add>, %1, %cst [1] : vector<2x64x64xf32> to vector<2x64xf32>
    %cst_2 = arith.constant 6.400000e+01 : f32
    %3 = vector.broadcast %cst_2 : f32 to vector<2x64xf32>
    %4 = arith.divf %2, %3 : vector<2x64xf32>
    %c0_3 = arith.constant 0 : index
    %c0_4 = arith.constant 0 : index
    %5 = vector.load %arg4[%c0_3, %c0_4] : memref<2x64xf32, #tpu.memory_space<vmem>>, vector<2x64xf32>
    tpu.vector_store %arg4[%c0_3, %c0_4], %4 {strides = array<i32>} : memref<2x64xf32, #tpu.memory_space<vmem>>, vector<2x64xf32>,
    %c0_5 = arith.constant 0 : index
    %c0_6 = arith.constant 0 : index
    %6 = vector.load %arg1[%c0_5, %c0_6] : memref<64x10xf32, #tpu.memory_space<vmem>>, vector<64x10xf32>
    %cst_7 = arith.constant dense<0.000000e+00> : vector<2x10xf32>
    %7 = tpu.matmul %4, %6, %cst_7 {dimension_numbers = #tpu.dot_dimension_numbers<[1], [0], [0], [1], [0, 0, 1, 1], [], []>} : vector<2x64xf32>, vector<64x10xf32>, vector<2x10xf32> -> vector<2x10xf32>
    %c0_8 = arith.constant 0 : index
    %c0_9 = arith.constant 0 : index
    %8 = vector.load %arg2[%c0_8, %c0_9] : memref<1x10xf32, #tpu.memory_space<vmem>>, vector<1x10xf32>
    %9 = vector.broadcast %8 : vector<1x10xf32> to vector<2x10xf32>
    %10 = arith.addf %7, %9 : vector<2x10xf32>
    %c0_10 = arith.constant 0 : index
    %c0_11 = arith.constant 0 : index
    %11 = vector.load %arg3[%c0_10, %c0_11] : memref<2x10xf32, #tpu.memory_space<vmem>>, vector<2x10xf32>
    tpu.vector_store %arg3[%c0_10, %c0_11], %10 {strides = array<i32>} : memref<2x10xf32, #tpu.memory_space<vmem>>, vector<2x10xf32>,
    return
  }
}

</mosaic_0001>

<llo_original>
// kernel: resnet_forward.13
$region0: #{resnet_forward.13}
  #allocation0 [shape = 'u32[]', space=smem, size = 0x4, offset = 0x4, fixed_abs, tag = 'smem constant byte address 0x4 - core index']
  #allocation1 [shape = 'u32[144,128]{1,0:T(1,128)}', space=vmem, size = 0x12000, scoped, tag = 'internal scratch']
  %s0 = inlined_call_operand.vmem [shape: bf16[512,152], index: 0, kind: input, shape index: {}]
  %s1 = inlined_call_operand.vmem [shape: bf16[152,128], index: 1, kind: input, shape index: {}]
  %s2 = inlined_call_operand.vmem [shape: f32[1,128], index: 2, kind: input, shape index: {}]
  %s3 = inlined_call_operand.vmem [shape: bf16[512,128], index: 3, kind: output, shape index: {}]
  %s4 = sld [smem:[#allocation0]]
  $region45: #{resnet_forward.13} parent=0
    _
  %s6 = ssub.s32 1, %s4
  %s7 = scalar_select 0, %s6, %s4
  loop: start=0, step=1, limit=4
  $region2: #{resnet_forward.13} parent=0 // loop_pre_header
    _
  $region3: #{resnet_forward.13} parent=0 // loop_header
    %s9 = sphi 0, %s13
    %p10 = scmp.ge.s32.totalorder %s9, 4
    %s19 = sphi 0, %s21
    %s22 = sphi 0, %s19
    %s23 = sphi 0, %s22
    %s39 = sphi 0, %s23
    %s43 = sphi 0, %s43
    %s45 = sphi 0, %s43
    %s46 = sphi 0, %s45
    %s60 = sphi 0, %s46
    %s64 = sphi 0, %s64
    %s66 = sphi 0, %s64
    %s67 = sphi 0, %s66
    %s81 = sphi 0, %s67
    %s87 = sphi 0, %s89
    %s90 = sphi 0, %s87
    %s91 = sphi 0, %s90
    %s107 = sphi 0, %s91
  $region4: #{resnet_forward.13} parent=0 // loop_header_branch
    %12 = sbr.rel (%p10) target = $region8
  $region5: #{resnet_forward.13} parent=0 // loop_body
    %s14 = ssub.s32 %s9, 1
    %s15 = ssub.s32 %s9, 2
    %s16 = sadd.s32 %s9, 1
    %s17 = ssub.s32 %s9, %s16
    %p18 = scmp.eq.s32.totalorder %s17, 0
    %s20 = sadd.s32 %s19, 1
    %s21 = scalar_select %p18, %s19, %s20
    %p24 = pneg %p18
    %p25 = scmp.eq.s32.totalorder %s9, 1
    %p26 = por %p24, %p25
    %p27 = scmp.ne.s32.totalorder %s19, %s22
    %p28 = scmp.eq.s32.totalorder %s9, 0
    %p29 = por %p27, %p28
    %p30 = scmp.ne.s32.totalorder %s19, %s22
    %p31 = scmp.eq.s32.totalorder %s14, 1
    %p32 = por %p30, %p31
    %p33 = scmp.ne.s32.totalorder %s22, %s23
    %p34 = scmp.eq.s32.totalorder %s14, 0
    %p35 = por %p33, %p34
    %p36 = scmp.ne.s32.totalorder %s22, %s23
    %p37 = scmp.eq.s32.totalorder %s15, 1
    %p38 = por %p36, %p37
    %p40 = scmp.ne.s32.totalorder %s23, %s39
    %p41 = scmp.eq.s32.totalorder %s15, 0
    %p42 = por %p40, %p41
    %s44 = sadd.s32 %s43, 1
    %p47 = scmp.eq.s32.totalorder %s9, 1
    %p48 = scmp.ne.s32.totalorder %s43, %s45
    %p49 = scmp.eq.s32.totalorder %s9, 0
    %p50 = por %p48, %p49
    %p51 = scmp.ne.s32.totalorder %s43, %s45
    %p52 = scmp.eq.s32.totalorder %s14, 1
    %p53 = por %p51, %p52
    %p54 = scmp.ne.s32.totalorder %s45, %s46
    %p55 = scmp.eq.s32.totalorder %s14, 0
    %p56 = por %p54, %p55
    %p57 = scmp.ne.s32.totalorder %s45, %s46
    %p58 = scmp.eq.s32.totalorder %s15, 1
    %p59 = por %p57, %p58
    %p61 = scmp.ne.s32.totalorder %s46, %s60
    %p62 = scmp.eq.s32.totalorder %s15, 0
    %p63 = por %p61, %p62
    %s65 = sadd.s32 %s64, 1
    %p68 = scmp.eq.s32.totalorder %s9, 1
    %p69 = scmp.ne.s32.totalorder %s64, %s66
    %p70 = scmp.eq.s32.totalorder %s9, 0
    %p71 = por %p69, %p70
    %p72 = scmp.ne.s32.totalorder %s64, %s66
    %p73 = scmp.eq.s32.totalorder %s14, 1
    %p74 = por %p72, %p73
    %p75 = scmp.ne.s32.totalorder %s66, %s67
    %p76 = scmp.eq.s32.totalorder %s14, 0
    %p77 = por %p75, %p76
    %p78 = scmp.ne.s32.totalorder %s66, %s67
    %p79 = scmp.eq.s32.totalorder %s15, 1
    %p80 = por %p78, %p79
    %p82 = scmp.ne.s32.totalorder %s67, %s81
    %p83 = scmp.eq.s32.totalorder %s15, 0
    %p84 = por %p82, %p83
    %s85 = ssub.s32 %s9, %s16
    %p86 = scmp.eq.s32.totalorder %s85, 0
    %s88 = sadd.s32 %s87, 1
    %s89 = scalar_select %p86, %s87, %s88
    %p92 = pneg %p86
    %p93 = scmp.eq.s32.totalorder %s9, 1
    %p94 = por %p92, %p93
    %p95 = scmp.ne.s32.totalorder %s87, %s90
    %p96 = scmp.eq.s32.totalorder %s9, 0
    %p97 = por %p95, %p96
    %p98 = scmp.ne.s32.totalorder %s87, %s90
    %p99 = scmp.eq.s32.totalorder %s14, 1
    %p100 = por %p98, %p99
    %p101 = scmp.ne.s32.totalorder %s90, %s91
    %p102 = scmp.eq.s32.totalorder %s14, 0
    %p103 = por %p101, %p102
    %p104 = scmp.ne.s32.totalorder %s90, %s91
    %p105 = scmp.eq.s32.totalorder %s15, 1
    %p106 = por %p104, %p105
    %p108 = scmp.ne.s32.totalorder %s91, %s107
    %p109 = scmp.eq.s32.totalorder %s15, 0
    %p110 = por %p108, %p109
    %p111 = scmp.le.s32.totalorder 1, %s9
    %p112 = scmp.lt.s32.totalorder %s9, 3
    %p113 = pnand %p111, %p112
    %p114 = pneg %p113
    // Predicated region
    $region9: #{resnet_forward.13} parent=5 // pred_check
      _
    $region10: #{resnet_forward.13} parent=5 // pred_check_branch
      %116 = sbr.rel (%p113) target = $region12
    $region11: #{resnet_forward.13} parent=5 // pred_region
      %s117 = ssub.s32 %s9, 1
      // Predicated region
      $region13: #{resnet_forward.13} parent=11 // pred_check
        %p118 = pneg %p56
      $region14: #{resnet_forward.13} parent=11 // pred_check_branch
        %120 = sbr.rel (%p118) target = $region16
      $region15: #{resnet_forward.13} parent=11 // pred_region
        _
      $region16: #{resnet_forward.13} parent=11 // pred_fallthru
        _
      // Predicated region
      $region17: #{resnet_forward.13} parent=11 // pred_check
        %p121 = pneg %p77
      $region18: #{resnet_forward.13} parent=11 // pred_check_branch
        %123 = sbr.rel (%p121) target = $region20
      $region19: #{resnet_forward.13} parent=11 // pred_region
        _
      $region20: #{resnet_forward.13} parent=11 // pred_fallthru
        _
    $region12: #{resnet_forward.13} parent=5 // pred_fallthru
      _
    %p124 = scmp.lt.s32.totalorder %s9, 2
    // Predicated region
    $region21: #{resnet_forward.13} parent=5 // pred_check
      %p125 = pneg %p124
    $region22: #{resnet_forward.13} parent=5 // pred_check_branch
      %127 = sbr.rel (%p125) target = $region24
    $region23: #{resnet_forward.13} parent=5 // pred_region
      // Predicated region
      $region25: #{resnet_forward.13} parent=23 // pred_check
        %p128 = pneg %p29
      $region26: #{resnet_forward.13} parent=23 // pred_check_branch
        %130 = sbr.rel (%p128) target = $region28
      $region27: #{resnet_forward.13} parent=23 // pred_region
        %s131 = smul.u32 32, %s9
        %p132 = scmp.lt.s32.totalorder %s131, 63
        %s133 = scalar_select %p132, %s131, 63
        %s134 = smul.addr %s133, 2
        %s135 = smul.addr %s134, 4
        %s136 = scalar_lea.vmem %s0, %s135
        %s137 = smul.u32 32, %s9
      $region28: #{resnet_forward.13} parent=23 // pred_fallthru
        _
    $region24: #{resnet_forward.13} parent=5 // pred_fallthru
      _
    %p138 = scmp.le.s32.totalorder 1, %s9
    %p139 = scmp.lt.s32.totalorder %s9, 3
    %p140 = pnand %p138, %p139
    %p141 = pneg %p140
    // Predicated region
    $region29: #{resnet_forward.13} parent=5 // pred_check
      _
    $region30: #{resnet_forward.13} parent=5 // pred_check_branch
      %143 = sbr.rel (%p140) target = $region32
    $region31: #{resnet_forward.13} parent=5 // pred_region
      %s144 = ssub.s32 %s9, 1
      %s145 = smul.u32 32, %s14
      %p146 = scmp.lt.s32.totalorder %s145, 63
      %s147 = scalar_select %p146, %s145, 63
      %s148 = smul.addr %s147, 2
      %s149 = smul.addr %s148, 4
      %s150 = scalar_lea.vmem %s0, %s149
      %p151 = pneg %p35
      %p152 = pneg %p32
      %p153 = pneg %p56
      %p154 = pneg %p53
      %p155 = pneg %p77
      %p156 = pneg %p74
      %p157 = pneg %p103
      %p158 = pneg %p100
      %s159 = smul.u32 32, %s14
      %p160 = scmp.lt.s32.totalorder %s159, 63
      %s161 = scalar_select %p160, %s159, 63
      %s162 = smul.addr %s161, 4
      %s163 = scalar_lea.vmem %s3, %s162
      %s164 = smul.u32 32, %s14
      %p165 = scmp.lt.s32.totalorder %s164, 63
      %s166 = scalar_select %p165, %s164, 63
      %s167 = smul.addr %s166, 2
      %s168 = smul.addr %s167, 4
      %s169 = scalar_lea.vmem %s0, %s168
      %s170 = smul.u32 32, %s14
      %s171 = smul.u32 32, %s14
      %p172 = scmp.lt.s32.totalorder %s171, 63
      %s173 = scalar_select %p172, %s171, 63
      %s174 = smul.addr %s173, 4
      %s175 = scalar_lea.vmem %s3, %s174
      %s176 = smul.u32 32, %s14
      %v178 = vld [vmem:[%s169] sm:$0xff]
      %v179 = vld [vmem:[%s169 + $0x8] sm:$0xff]
      %v180 = vld [vmem:[%s169 + $0x10] sm:$0xff]
      %v181 = vld [vmem:[%s169 + $0x18] sm:$0xff]
      %v182 = vld [vmem:[%s169 + $0x20] sm:$0xff]
      %v183 = vld [vmem:[%s169 + $0x28] sm:$0xff]
      %v184 = vld [vmem:[%s169 + $0x30] sm:$0xff]
      %v185 = vld [vmem:[%s169 + $0x38] sm:$0xff]
      %v186 = vld [vmem:[%s169 + $0x40] sm:$0xff]
      %v187 = vld [vmem:[%s169 + $0x48] sm:$0xff]
      %v188 = vld [vmem:[%s169 + $0x50] sm:$0xff]
      %v189 = vld [vmem:[%s169 + $0x58] sm:$0xff]
      %v190 = vld [vmem:[%s169 + $0x60] sm:$0xff]
      %v191 = vld [vmem:[%s169 + $0x68] sm:$0xff]
      %v192 = vld [vmem:[%s169 + $0x70] sm:$0xff]
      %v193 = vld [vmem:[%s169 + $0x78] sm:$0xff]
      %v194 = vld [vmem:[%s169 + $0x80] sm:$0xff]
      %v195 = vld [vmem:[%s169 + $0x88] sm:$0xff]
      %v196 = vld [vmem:[%s169 + $0x90] sm:$0xff]
      %v197 = vld [vmem:[%s169 + $0x98] sm:$0xff]
      %v198 = vld [vmem:[%s169 + $0xa0] sm:$0xff]
      %v199 = vld [vmem:[%s169 + $0xa8] sm:$0xff]
      %v200 = vld [vmem:[%s169 + $0xb0] sm:$0xff]
      %v201 = vld [vmem:[%s169 + $0xb8] sm:$0xff]
      %v202 = vld [vmem:[%s169 + $0xc0] sm:$0xff]
      %v203 = vld [vmem:[%s169 + $0xc8] sm:$0xff]
      %v204 = vld [vmem:[%s169 + $0xd0] sm:$0xff]
      %v205 = vld [vmem:[%s169 + $0xd8] sm:$0xff]
      %v206 = vld [vmem:[%s169 + $0xe0] sm:$0xff]
      %v207 = vld [vmem:[%s169 + $0xe8] sm:$0xff]
      %v208 = vld [vmem:[%s169 + $0xf0] sm:$0xff]
      %v209 = vld [vmem:[%s169 + $0xf8] sm:$0xff]
      %v210 = vld [vmem:[%s1] sm:$0xf]
      %v211 = vld [vmem:[%s1 + $0x4] sm:$0xf]
      %v212 = vld [vmem:[%s1 + $0x8] sm:$0xf]
      %v213 = vld [vmem:[%s1 + $0xc] sm:$0xf]
      %v214 = vld [vmem:[%s1 + $0x10] sm:$0xf]
      %v215 = vld [vmem:[%s1 + $0x14] sm:$0xf]
      %v216 = vld [vmem:[%s1 + $0x18] sm:$0xf]
      %v217 = vld [vmem:[%s1 + $0x1c] sm:$0xf]
      %v218 = vld [vmem:[%s1 + $0x20] sm:$0xf]
      %v219 = vld [vmem:[%s1 + $0x24] sm:$0xf]
      %v220 = vld [vmem:[%s1 + $0x28] sm:$0xf]
      %v221 = vld [vmem:[%s1 + $0x2c] sm:$0xf]
      %v222 = vld [vmem:[%s1 + $0x30] sm:$0xf]
      %v223 = vld [vmem:[%s1 + $0x34] sm:$0xf]
      %v224 = vld [vmem:[%s1 + $0x38] sm:$0xf]
      %v225 = vld [vmem:[%s1 + $0x3c] sm:$0xf]
      %v226 = vld [vmem:[%s1 + $0x40] sm:$0xf]
      %v227 = vld [vmem:[%s1 + $0x44] sm:$0xf]
      %v228 = vld [vmem:[%s1 + $0x48] sm:$0xf]
      %v229 = vld [vmem:[%s2] sm:$0x1]
      %v231 = vlaneseq
      %v232 = vshrl.u32 %v231, 7
      %v233 = vsub.s32 0, %v232
      %v234 = vrot.slane %v229, %v233
      %v268 = vunpack.c.l.b16 %v178
      %v269 = vunpack.c.h.b16 %v178
      %v270 = vunpack.c.l.b16 %v179
      %v271 = vunpack.c.h.b16 %v179
      %v272 = vunpack.c.l.b16 %v180
      %v273 = vunpack.c.h.b16 %v180
      %v274 = vunpack.c.l.b16 %v181
      %v275 = vunpack.c.h.b16 %v181
      %v276 = vunpack.c.l.b16 %v182
      %v277 = vunpack.c.h.b16 %v182
      %v278 = vunpack.c.l.b16 %v183
      %v279 = vunpack.c.h.b16 %v183
      %v280 = vunpack.c.l.b16 %v184
      %v281 = vunpack.c.h.b16 %v184
      %v282 = vunpack.c.l.b16 %v185
      %v283 = vunpack.c.h.b16 %v185
      %v284 = vunpack.c.l.b16 %v186
      %v285 = vunpack.c.h.b16 %v186
      %v286 = vunpack.c.l.b16 %v187
      %v287 = vunpack.c.h.b16 %v187
      %v288 = vunpack.c.l.b16 %v188
      %v289 = vunpack.c.h.b16 %v188
      %v290 = vunpack.c.l.b16 %v189
      %v291 = vunpack.c.h.b16 %v189
      %v292 = vunpack.c.l.b16 %v190
      %v293 = vunpack.c.h.b16 %v190
      %v294 = vunpack.c.l.b16 %v191
      %v295 = vunpack.c.h.b16 %v191
      %v296 = vunpack.c.l.b16 %v192
      %v297 = vunpack.c.h.b16 %v192
      %v298 = vunpack.c.l.b16 %v193
      %v299 = vunpack.c.h.b16 %v193
      %v300 = vunpack.c.l.b16 %v194
      %v301 = vunpack.c.h.b16 %v194
      %v302 = vunpack.c.l.b16 %v195
      %v303 = vunpack.c.h.b16 %v195
      %v304 = vunpack.c.l.b16 %v196
      %v305 = vunpack.c.h.b16 %v196
      %v306 = vunpack.c.l.b16 %v197
      %v307 = vunpack.c.h.b16 %v197
      %v308 = vunpack.c.l.b16 %v198
      %v309 = vunpack.c.h.b16 %v198
      %v310 = vunpack.c.l.b16 %v199
      %v311 = vunpack.c.h.b16 %v199
      %v312 = vunpack.c.l.b16 %v200
      %v313 = vunpack.c.h.b16 %v200
      %v314 = vunpack.c.l.b16 %v201
      %v315 = vunpack.c.h.b16 %v201
      %v316 = vunpack.c.l.b16 %v202
      %v317 = vunpack.c.h.b16 %v202
      %v318 = vunpack.c.l.b16 %v203
      %v319 = vunpack.c.h.b16 %v203
      %v320 = vunpack.c.l.b16 %v204
      %v321 = vunpack.c.h.b16 %v204
      %v322 = vunpack.c.l.b16 %v205
      %v323 = vunpack.c.h.b16 %v205
      %v324 = vunpack.c.l.b16 %v206
      %v325 = vunpack.c.h.b16 %v206
      %v326 = vunpack.c.l.b16 %v207
      %v327 = vunpack.c.h.b16 %v207
      %v328 = vunpack.c.l.b16 %v208
      %v329 = vunpack.c.h.b16 %v208
      %v330 = vunpack.c.l.b16 %v209
      %v331 = vunpack.c.h.b16 %v209
      %v332 = vpack.c.b16 %v270, %v268
      %v333 = vpack.c.b16 %v271, %v269
      %v334 = vpack.c.b16 %v274, %v272
      %v335 = vpack.c.b16 %v275, %v273
      %v336 = vpack.c.b16 %v278, %v276
      %v337 = vpack.c.b16 %v279, %v277
      %v338 = vpack.c.b16 %v282, %v280
      %v339 = vpack.c.b16 %v283, %v281
      %v340 = vpack.c.b16 %v286, %v284
      %v341 = vpack.c.b16 %v287, %v285
      %v342 = vpack.c.b16 %v290, %v288
      %v343 = vpack.c.b16 %v291, %v289
      %v344 = vpack.c.b16 %v294, %v292
      %v345 = vpack.c.b16 %v295, %v293
      %v346 = vpack.c.b16 %v298, %v296
      %v347 = vpack.c.b16 %v299, %v297
      %v348 = vpack.c.b16 %v302, %v300
      %v349 = vpack.c.b16 %v303, %v301
      %v350 = vpack.c.b16 %v306, %v304
      %v351 = vpack.c.b16 %v307, %v305
      %v352 = vpack.c.b16 %v310, %v308
      %v353 = vpack.c.b16 %v311, %v309
      %v354 = vpack.c.b16 %v314, %v312
      %v355 = vpack.c.b16 %v315, %v313
      %v356 = vpack.c.b16 %v318, %v316
      %v357 = vpack.c.b16 %v319, %v317
      %v358 = vpack.c.b16 %v322, %v320
      %v359 = vpack.c.b16 %v323, %v321
      %v360 = vpack.c.b16 %v326, %v324
      %v361 = vpack.c.b16 %v327, %v325
      %v362 = vpack.c.b16 %v330, %v328
      %v363 = vpack.c.b16 %v331, %v329
      %v399 = vunpack.c.l.b16 %v210
      %v400 = vunpack.c.l.b16 %v211
      %v401 = vunpack.c.l.b16 %v212
      %v402 = vunpack.c.l.b16 %v213
      %v403 = vunpack.c.l.b16 %v214
      %v404 = vunpack.c.l.b16 %v215
      %v405 = vunpack.c.l.b16 %v216
      %v406 = vunpack.c.l.b16 %v217
      %v407 = vunpack.c.l.b16 %v218
      %v408 = vunpack.c.l.b16 %v219
      %v409 = vunpack.c.l.b16 %v220
      %v410 = vunpack.c.l.b16 %v221
      %v411 = vunpack.c.l.b16 %v222
      %v412 = vunpack.c.l.b16 %v223
      %v413 = vunpack.c.l.b16 %v224
      %v414 = vunpack.c.l.b16 %v225
      %v415 = vunpack.c.l.b16 %v226
      %v416 = vunpack.c.l.b16 %v227
      %v417 = vunpack.c.l.b16 %v228
      %v418 = vpack.c.b16 %v400, %v399
      %v419 = vpack.c.b16 %v402, %v401
      %v420 = vpack.c.b16 %v404, %v403
      %v421 = vpack.c.b16 %v406, %v405
      %v422 = vpack.c.b16 %v408, %v407
      %v423 = vpack.c.b16 %v410, %v409
      %v424 = vpack.c.b16 %v412, %v411
      %v425 = vpack.c.b16 %v414, %v413
      %v426 = vpack.c.b16 %v416, %v415
      %v427 = vpack.c.b16 %v417, %v417
      %vm437 = vcmask 195584
      %v439 = vsel %vm437, %v333, 0
      %v442 = vsel %vm437, %v335, 0
      %v445 = vsel %vm437, %v337, 0
      %v448 = vsel %vm437, %v339, 0
      %v451 = vsel %vm437, %v341, 0
      %v454 = vsel %vm437, %v343, 0
      %v457 = vsel %vm437, %v345, 0
      %v460 = vsel %vm437, %v347, 0
      %v463 = vsel %vm437, %v349, 0
      %v466 = vsel %vm437, %v351, 0
      %v469 = vsel %vm437, %v353, 0
      %v472 = vsel %vm437, %v355, 0
      %v475 = vsel %vm437, %v357, 0
      %v478 = vsel %vm437, %v359, 0
      %v481 = vsel %vm437, %v361, 0
      %v484 = vsel %vm437, %v363, 0
      %vm486 = vcmask 1043456
      %v488 = vsel %vm486, %v427, 0
      %490 = vmatprep.subr.bf16.mxu0 0
      %491 = vmatpush1.bf16.msra.mxu0 %v425
      %492 = vmatprep.subr.bf16.mxu0 0
      %493 = vmatpush1.bf16.msra.mxu0 %v424
      %494 = vmatprep.subr.bf16.mxu0 0
      %495 = vmatpush1.bf16.msra.mxu0 %v423
      %496 = vmatprep.subr.bf16.mxu0 0
      %497 = vmatpush1.bf16.msra.mxu0 %v422
      %498 = vmatprep.subr.bf16.mxu0 0
      %499 = vmatpush1.bf16.msra.mxu0 %v421
      %500 = vmatprep.subr.bf16.mxu0 0
      %501 = vmatpush1.bf16.msra.mxu0 %v420
      %502 = vmatprep.subr.bf16.mxu0 0
      %503 = vmatpush1.bf16.msra.mxu0 %v419
      %504 = vmatprep.subr.bf16.mxu0 0
      %505 = vmatpush1.bf16.msra.mxu0 %v418
      %506 = vmatprep.subr.bf16.mxu0 0
      %507 = vmatpush2.bf16.msra.mxu0 0
      %508 = vmatprep.subr.bf16.mxu0 0
      %509 = vmatpush2.bf16.msra.mxu0 0
      %510 = vmatprep.subr.bf16.mxu0 0
      %511 = vmatpush2.bf16.msra.mxu0 0
      %512 = vmatprep.subr.bf16.mxu0 0
      %513 = vmatpush2.bf16.msra.mxu0 0
      %514 = vmatprep.subr.bf16.mxu0 0
      %515 = vmatpush2.bf16.msra.mxu0 0
      %516 = vmatprep.subr.bf16.mxu0 0
      %517 = vmatpush2.bf16.msra.mxu0 0
      %518 = vmatprep.subr.bf16.mxu0 0
      %519 = vmatpush2.bf16.msra.mxu0 %v488
      %520 = vmatprep.subr.bf16.mxu0 0
      %521 = vmatpush2.bf16.msra.mxu0 %v426
      %522 = vmatprep.mubr.bf16.mxu0 %v439
      %523 = vmatmul.mubr.bf16.gmra.mxu0 %v332
      %v524 = vpop.f32.mrf.mxu0
      %v525 = vadd.f32 %v234, %v524
      %v526 = vpop.f32.mrf.mxu0
      %v527 = vpop.f32.mrf.mxu0
      %v528 = vadd.f32 %v234, %v527
      %v529 = vpop.f32.mrf.mxu0
      %530 = vmatprep.mubr.bf16.mxu0 %v442
      %531 = vmatmul.mubr.bf16.gmra.mxu0 %v334
      %v532 = vpop.f32.mrf.mxu0
      %v533 = vadd.f32 %v234, %v532
      %v534 = vpop.f32.mrf.mxu0
      %v535 = vpop.f32.mrf.mxu0
      %v536 = vadd.f32 %v234, %v535
      %v537 = vpop.f32.mrf.mxu0
      %538 = vmatprep.mubr.bf16.mxu0 %v445
      %539 = vmatmul.mubr.bf16.gmra.mxu0 %v336
      %v540 = vpop.f32.mrf.mxu0
      %v541 = vadd.f32 %v234, %v540
      %v542 = vpop.f32.mrf.mxu0
      %v543 = vpop.f32.mrf.mxu0
      %v544 = vadd.f32 %v234, %v543
      %v545 = vpop.f32.mrf.mxu0
      %546 = vmatprep.mubr.bf16.mxu0 %v448
      %547 = vmatmul.mubr.bf16.gmra.mxu0 %v338
      %v548 = vpop.f32.mrf.mxu0
      %v549 = vadd.f32 %v234, %v548
      %v550 = vpop.f32.mrf.mxu0
      %v551 = vpop.f32.mrf.mxu0
      %v552 = vadd.f32 %v234, %v551
      %v553 = vpop.f32.mrf.mxu0
      %554 = vmatprep.mubr.bf16.mxu0 %v451
      %555 = vmatmul.mubr.bf16.gmra.mxu0 %v340
      %v556 = vpop.f32.mrf.mxu0
      %v557 = vadd.f32 %v234, %v556
      %v558 = vpop.f32.mrf.mxu0
      %v559 = vpop.f32.mrf.mxu0
      %v560 = vadd.f32 %v234, %v559
      %v561 = vpop.f32.mrf.mxu0
      %562 = vmatprep.mubr.bf16.mxu0 %v454
      %563 = vmatmul.mubr.bf16.gmra.mxu0 %v342
      %v564 = vpop.f32.mrf.mxu0
      %v565 = vadd.f32 %v234, %v564
      %v566 = vpop.f32.mrf.mxu0
      %v567 = vpop.f32.mrf.mxu0
      %v568 = vadd.f32 %v234, %v567
      %v569 = vpop.f32.mrf.mxu0
      %570 = vmatprep.mubr.bf16.mxu0 %v457
      %571 = vmatmul.mubr.bf16.gmra.mxu0 %v344
      %v572 = vpop.f32.mrf.mxu0
      %v573 = vadd.f32 %v234, %v572
      %v574 = vpop.f32.mrf.mxu0
      %v575 = vpop.f32.mrf.mxu0
      %v576 = vadd.f32 %v234, %v575
      %v577 = vpop.f32.mrf.mxu0
      %578 = vmatprep.mubr.bf16.mxu0 %v460
      %579 = vmatmul.mubr.bf16.gmra.mxu0 %v346
      %v580 = vpop.f32.mrf.mxu0
      %v581 = vadd.f32 %v234, %v580
      %v582 = vpop.f32.mrf.mxu0
      %v583 = vpop.f32.mrf.mxu0
      %v584 = vadd.f32 %v234, %v583
      %v585 = vpop.f32.mrf.mxu0
      %586 = vmatprep.mubr.bf16.mxu0 %v463
      %587 = vmatmul.mubr.bf16.gmra.mxu0 %v348
      %v588 = vpop.f32.mrf.mxu0
      %v589 = vadd.f32 %v234, %v588
      %v590 = vpop.f32.mrf.mxu0
      %v591 = vpop.f32.mrf.mxu0
      %v592 = vadd.f32 %v234, %v591
      %v593 = vpop.f32.mrf.mxu0
      %594 = vmatprep.mubr.bf16.mxu0 %v466
      %595 = vmatmul.mubr.bf16.gmra.mxu0 %v350
      %v596 = vpop.f32.mrf.mxu0
      %v597 = vadd.f32 %v234, %v596
      %v598 = vpop.f32.mrf.mxu0
      %v599 = vpop.f32.mrf.mxu0
      %v600 = vadd.f32 %v234, %v599
      %v601 = vpop.f32.mrf.mxu0
      %602 = vmatprep.mubr.bf16.mxu0 %v469
      %603 = vmatmul.mubr.bf16.gmra.mxu0 %v352
      %v604 = vpop.f32.mrf.mxu0
      %v605 = vadd.f32 %v234, %v604
      %v606 = vpop.f32.mrf.mxu0
      %v607 = vpop.f32.mrf.mxu0
      %v608 = vadd.f32 %v234, %v607
      %v609 = vpop.f32.mrf.mxu0
      %610 = vmatprep.mubr.bf16.mxu0 %v472
      %611 = vmatmul.mubr.bf16.gmra.mxu0 %v354
      %v612 = vpop.f32.mrf.mxu0
      %v613 = vadd.f32 %v234, %v612
      %v614 = vpop.f32.mrf.mxu0
      %v615 = vpop.f32.mrf.mxu0
      %v616 = vadd.f32 %v234, %v615
      %v617 = vpop.f32.mrf.mxu0
      %618 = vmatprep.mubr.bf16.mxu0 %v475
      %619 = vmatmul.mubr.bf16.gmra.mxu0 %v356
      %v620 = vpop.f32.mrf.mxu0
      %v621 = vadd.f32 %v234, %v620
      %v622 = vpop.f32.mrf.mxu0
      %v623 = vpop.f32.mrf.mxu0
      %v624 = vadd.f32 %v234, %v623
      %v625 = vpop.f32.mrf.mxu0
      %626 = vmatprep.mubr.bf16.mxu0 %v478
      %627 = vmatmul.mubr.bf16.gmra.mxu0 %v358
      %v628 = vpop.f32.mrf.mxu0
      %v629 = vadd.f32 %v234, %v628
      %v630 = vpop.f32.mrf.mxu0
      %v631 = vpop.f32.mrf.mxu0
      %v632 = vadd.f32 %v234, %v631
      %v633 = vpop.f32.mrf.mxu0
      %634 = vmatprep.mubr.bf16.mxu0 %v481
      %635 = vmatmul.mubr.bf16.gmra.mxu0 %v360
      %v636 = vpop.f32.mrf.mxu0
      %v637 = vadd.f32 %v234, %v636
      %v638 = vpop.f32.mrf.mxu0
      %v639 = vpop.f32.mrf.mxu0
      %v640 = vadd.f32 %v234, %v639
      %v641 = vpop.f32.mrf.mxu0
      %642 = vmatprep.mubr.bf16.mxu0 %v484
      %643 = vmatmul.mubr.bf16.gmra.mxu0 %v362
      %v644 = vpop.f32.mrf.mxu0
      %v645 = vadd.f32 %v234, %v644
      %v646 = vpop.f32.mrf.mxu0
      %v647 = vpop.f32.mrf.mxu0
      %v648 = vadd.f32 %v234, %v647
      %v649 = vpop.f32.mrf.mxu0
      %650 = vdwg.mxu0
      %v651 = vmax.f32 %v525, 0.0
      %v652 = vmax.f32 %v528, 0.0
      %v653 = vmax.f32 %v533, 0.0
      %v654 = vmax.f32 %v536, 0.0
      %v655 = vmax.f32 %v541, 0.0
      %v656 = vmax.f32 %v544, 0.0
      %v657 = vmax.f32 %v549, 0.0
      %v658 = vmax.f32 %v552, 0.0
      %v659 = vmax.f32 %v557, 0.0
      %v660 = vmax.f32 %v560, 0.0
      %v661 = vmax.f32 %v565, 0.0
      %v662 = vmax.f32 %v568, 0.0
      %v663 = vmax.f32 %v573, 0.0
      %v664 = vmax.f32 %v576, 0.0
      %v665 = vmax.f32 %v581, 0.0
      %v666 = vmax.f32 %v584, 0.0
      %v667 = vmax.f32 %v589, 0.0
      %v668 = vmax.f32 %v592, 0.0
      %v669 = vmax.f32 %v597, 0.0
      %v670 = vmax.f32 %v600, 0.0
      %v671 = vmax.f32 %v605, 0.0
      %v672 = vmax.f32 %v608, 0.0
      %v673 = vmax.f32 %v613, 0.0
      %v674 = vmax.f32 %v616, 0.0
      %v675 = vmax.f32 %v621, 0.0
      %v676 = vmax.f32 %v624, 0.0
      %v677 = vmax.f32 %v629, 0.0
      %v678 = vmax.f32 %v632, 0.0
      %v679 = vmax.f32 %v637, 0.0
      %v680 = vmax.f32 %v640, 0.0
      %v681 = vmax.f32 %v645, 0.0
      %v682 = vmax.f32 %v648, 0.0
      %v683 = vpack.c.bf16 %v652, %v651
      %v684 = vpack.c.bf16 %v654, %v653
      %v685 = vpack.c.bf16 %v656, %v655
      %v686 = vpack.c.bf16 %v658, %v657
      %v687 = vpack.c.bf16 %v660, %v659
      %v688 = vpack.c.bf16 %v662, %v661
      %v689 = vpack.c.bf16 %v664, %v663
      %v690 = vpack.c.bf16 %v666, %v665
      %v691 = vpack.c.bf16 %v668, %v667
      %v692 = vpack.c.bf16 %v670, %v669
      %v693 = vpack.c.bf16 %v672, %v671
      %v694 = vpack.c.bf16 %v674, %v673
      %v695 = vpack.c.bf16 %v676, %v675
      %v696 = vpack.c.bf16 %v678, %v677
      %v697 = vpack.c.bf16 %v680, %v679
      %v698 = vpack.c.bf16 %v682, %v681
      %v715 = vunpack.c.l.b16 %v683
      %v716 = vunpack.c.h.b16 %v683
      %v717 = vunpack.c.l.b16 %v684
      %v718 = vunpack.c.h.b16 %v684
      %v719 = vunpack.c.l.b16 %v685
      %v720 = vunpack.c.h.b16 %v685
      %v721 = vunpack.c.l.b16 %v686
      %v722 = vunpack.c.h.b16 %v686
      %v723 = vunpack.c.l.b16 %v687
      %v724 = vunpack.c.h.b16 %v687
      %v725 = vunpack.c.l.b16 %v688
      %v726 = vunpack.c.h.b16 %v688
      %v727 = vunpack.c.l.b16 %v689
      %v728 = vunpack.c.h.b16 %v689
      %v729 = vunpack.c.l.b16 %v690
      %v730 = vunpack.c.h.b16 %v690
      %v731 = vunpack.c.l.b16 %v691
      %v732 = vunpack.c.h.b16 %v691
      %v733 = vunpack.c.l.b16 %v692
      %v734 = vunpack.c.h.b16 %v692
      %v735 = vunpack.c.l.b16 %v693
      %v736 = vunpack.c.h.b16 %v693
      %v737 = vunpack.c.l.b16 %v694
      %v738 = vunpack.c.h.b16 %v694
      %v739 = vunpack.c.l.b16 %v695
      %v740 = vunpack.c.h.b16 %v695
      %v741 = vunpack.c.l.b16 %v696
      %v742 = vunpack.c.h.b16 %v696
      %v743 = vunpack.c.l.b16 %v697
      %v744 = vunpack.c.h.b16 %v697
      %v745 = vunpack.c.l.b16 %v698
      %v746 = vunpack.c.h.b16 %v698
      %v747 = vpack.c.b16 %v715, %v715
      %v748 = vpack.c.b16 %v716, %v716
      %v749 = vpack.c.b16 %v717, %v717
      %v750 = vpack.c.b16 %v718, %v718
      %v751 = vpack.c.b16 %v719, %v719
      %v752 = vpack.c.b16 %v720, %v720
      %v753 = vpack.c.b16 %v721, %v721
      %v754 = vpack.c.b16 %v722, %v722
      %v755 = vpack.c.b16 %v723, %v723
      %v756 = vpack.c.b16 %v724, %v724
      %v757 = vpack.c.b16 %v725, %v725
      %v758 = vpack.c.b16 %v726, %v726
      %v759 = vpack.c.b16 %v727, %v727
      %v760 = vpack.c.b16 %v728, %v728
      %v761 = vpack.c.b16 %v729, %v729
      %v762 = vpack.c.b16 %v730, %v730
      %v763 = vpack.c.b16 %v731, %v731
      %v764 = vpack.c.b16 %v732, %v732
      %v765 = vpack.c.b16 %v733, %v733
      %v766 = vpack.c.b16 %v734, %v734
      %v767 = vpack.c.b16 %v735, %v735
      %v768 = vpack.c.b16 %v736, %v736
      %v769 = vpack.c.b16 %v737, %v737
      %v770 = vpack.c.b16 %v738, %v738
      %v771 = vpack.c.b16 %v739, %v739
      %v772 = vpack.c.b16 %v740, %v740
      %v773 = vpack.c.b16 %v741, %v741
      %v774 = vpack.c.b16 %v742, %v742
      %v775 = vpack.c.b16 %v743, %v743
      %v776 = vpack.c.b16 %v744, %v744
      %v777 = vpack.c.b16 %v745, %v745
      %v778 = vpack.c.b16 %v746, %v746
      %811 = vst [vmem:[%s175] sm:$0xf] %v747
      %812 = vst [vmem:[%s175 + $0x4] sm:$0xf] %v748
      %813 = vst [vmem:[%s175 + $0x8] sm:$0xf] %v749
      %814 = vst [vmem:[%s175 + $0xc] sm:$0xf] %v750
      %815 = vst [vmem:[%s175 + $0x10] sm:$0xf] %v751
      %816 = vst [vmem:[%s175 + $0x14] sm:$0xf] %v752
      %817 = vst [vmem:[%s175 + $0x18] sm:$0xf] %v753
      %818 = vst [vmem:[%s175 + $0x1c] sm:$0xf] %v754
      %819 = vst [vmem:[%s175 + $0x20] sm:$0xf] %v755
      %820 = vst [vmem:[%s175 + $0x24] sm:$0xf] %v756
      %821 = vst [vmem:[%s175 + $0x28] sm:$0xf] %v757
      %822 = vst [vmem:[%s175 + $0x2c] sm:$0xf] %v758
      %823 = vst [vmem:[%s175 + $0x30] sm:$0xf] %v759
      %824 = vst [vmem:[%s175 + $0x34] sm:$0xf] %v760
      %825 = vst [vmem:[%s175 + $0x38] sm:$0xf] %v761
      %826 = vst [vmem:[%s175 + $0x3c] sm:$0xf] %v762
      %827 = vst [vmem:[%s175 + $0x40] sm:$0xf] %v763
      %828 = vst [vmem:[%s175 + $0x44] sm:$0xf] %v764
      %829 = vst [vmem:[%s175 + $0x48] sm:$0xf] %v765
      %830 = vst [vmem:[%s175 + $0x4c] sm:$0xf] %v766
      %831 = vst [vmem:[%s175 + $0x50] sm:$0xf] %v767
      %832 = vst [vmem:[%s175 + $0x54] sm:$0xf] %v768
      %833 = vst [vmem:[%s175 + $0x58] sm:$0xf] %v769
      %834 = vst [vmem:[%s175 + $0x5c] sm:$0xf] %v770
      %835 = vst [vmem:[%s175 + $0x60] sm:$0xf] %v771
      %836 = vst [vmem:[%s175 + $0x64] sm:$0xf] %v772
      %837 = vst [vmem:[%s175 + $0x68] sm:$0xf] %v773
      %838 = vst [vmem:[%s175 + $0x6c] sm:$0xf] %v774
      %839 = vst [vmem:[%s175 + $0x70] sm:$0xf] %v775
      %840 = vst [vmem:[%s175 + $0x74] sm:$0xf] %v776
      %841 = vst [vmem:[%s175 + $0x78] sm:$0xf] %v777
      %842 = vst [vmem:[%s175 + $0x7c] sm:$0xf] %v778
      %s843 = smul.u32 32, %s14
      %p844 = scmp.lt.s32.totalorder %s843, 63
      %s845 = scalar_select %p844, %s843, 63
      %s846 = smul.addr %s845, 4
      %s847 = scalar_lea.vmem %s3, %s846
      // Predicated region
      $region33: #{resnet_forward.13} parent=31 // pred_check
        %p848 = pneg %p100
      $region34: #{resnet_forward.13} parent=31 // pred_check_branch
        %850 = sbr.rel (%p848) target = $region36
      $region35: #{resnet_forward.13} parent=31 // pred_region
        %s851 = smul.u32 32, %s14
      $region36: #{resnet_forward.13} parent=31 // pred_fallthru
        _
    $region32: #{resnet_forward.13} parent=5 // pred_fallthru
      _
    %p852 = scmp.le.s32.totalorder 2, %s9
    // Predicated region
    $region37: #{resnet_forward.13} parent=5 // pred_check
      %p853 = pneg %p852
    $region38: #{resnet_forward.13} parent=5 // pred_check_branch
      %855 = sbr.rel (%p853) target = $region40
    $region39: #{resnet_forward.13} parent=5 // pred_region
      %s856 = ssub.s32 %s9, 2
      // Predicated region
      $region41: #{resnet_forward.13} parent=39 // pred_check
        %p857 = pneg %p106
      $region42: #{resnet_forward.13} parent=39 // pred_check_branch
        %859 = sbr.rel (%p857) target = $region44
      $region43: #{resnet_forward.13} parent=39 // pred_region
        %s860 = smul.u32 32, %s15
        %p861 = scmp.lt.s32.totalorder %s860, 63
        %s862 = scalar_select %p861, %s860, 63
        %s863 = smul.addr %s862, 4
        %s864 = scalar_lea.vmem %s3, %s863
      $region44: #{resnet_forward.13} parent=39 // pred_fallthru
        _
    $region40: #{resnet_forward.13} parent=5 // pred_fallthru
      _
  $region6: #{resnet_forward.13} parent=0 // loop_footer
    %s13 = sadd.s32 1, %s9
  $region7: #{resnet_forward.13} parent=0 // loop_footer_branch
    %8 = sbr.rel target = $region3
  $region8: #{resnet_forward.13} parent=0 // loop_exit
    _

// kernel: resnet_forward.14
$region0: #{resnet_forward.14}
  #allocation0 [shape = 'u32[]', space=smem, size = 0x4, offset = 0x4, fixed_abs, tag = 'smem constant byte address 0x4 - core index']
  #allocation1 [shape = 'u32[144,128]{1,0:T(1,128)}', space=vmem, size = 0x12000, scoped, tag = 'internal scratch']
  %s0 = inlined_call_operand.vmem [shape: bf16[128,72], index: 0, kind: input, shape index: {}]
  %s1 = inlined_call_operand.vmem [shape: bf16[72,128], index: 1, kind: input, shape index: {}]
  %s2 = inlined_call_operand.vmem [shape: f32[1,128], index: 2, kind: input, shape index: {}]
  %s3 = inlined_call_operand.vmem [shape: bf16[128,128], index: 3, kind: output, shape index: {}]
  %s4 = sld [smem:[#allocation0]]
  $region45: #{resnet_forward.14} parent=0
    _
  %s6 = ssub.s32 1, %s4
  %s7 = scalar_select 0, %s6, %s4
  loop: start=0, step=1, limit=4
  $region2: #{resnet_forward.14} parent=0 // loop_pre_header
    _
  $region3: #{resnet_forward.14} parent=0 // loop_header
    %s9 = sphi 0, %s13
    %p10 = scmp.ge.s32.totalorder %s9, 4
    %s19 = sphi 0, %s21
    %s22 = sphi 0, %s19
    %s23 = sphi 0, %s22
    %s39 = sphi 0, %s23
    %s43 = sphi 0, %s43
    %s45 = sphi 0, %s43
    %s46 = sphi 0, %s45
    %s60 = sphi 0, %s46
    %s64 = sphi 0, %s64
    %s66 = sphi 0, %s64
    %s67 = sphi 0, %s66
    %s81 = sphi 0, %s67
    %s87 = sphi 0, %s89
    %s90 = sphi 0, %s87
    %s91 = sphi 0, %s90
    %s107 = sphi 0, %s91
  $region4: #{resnet_forward.14} parent=0 // loop_header_branch
    %12 = sbr.rel (%p10) target = $region8
  $region5: #{resnet_forward.14} parent=0 // loop_body
    %s14 = ssub.s32 %s9, 1
    %s15 = ssub.s32 %s9, 2
    %s16 = sadd.s32 %s9, 1
    %s17 = ssub.s32 %s9, %s16
    %p18 = scmp.eq.s32.totalorder %s17, 0
    %s20 = sadd.s32 %s19, 1
    %s21 = scalar_select %p18, %s19, %s20
    %p24 = pneg %p18
    %p25 = scmp.eq.s32.totalorder %s9, 1
    %p26 = por %p24, %p25
    %p27 = scmp.ne.s32.totalorder %s19, %s22
    %p28 = scmp.eq.s32.totalorder %s9, 0
    %p29 = por %p27, %p28
    %p30 = scmp.ne.s32.totalorder %s19, %s22
    %p31 = scmp.eq.s32.totalorder %s14, 1
    %p32 = por %p30, %p31
    %p33 = scmp.ne.s32.totalorder %s22, %s23
    %p34 = scmp.eq.s32.totalorder %s14, 0
    %p35 = por %p33, %p34
    %p36 = scmp.ne.s32.totalorder %s22, %s23
    %p37 = scmp.eq.s32.totalorder %s15, 1
    %p38 = por %p36, %p37
    %p40 = scmp.ne.s32.totalorder %s23, %s39
    %p41 = scmp.eq.s32.totalorder %s15, 0
    %p42 = por %p40, %p41
    %s44 = sadd.s32 %s43, 1
    %p47 = scmp.eq.s32.totalorder %s9, 1
    %p48 = scmp.ne.s32.totalorder %s43, %s45
    %p49 = scmp.eq.s32.totalorder %s9, 0
    %p50 = por %p48, %p49
    %p51 = scmp.ne.s32.totalorder %s43, %s45
    %p52 = scmp.eq.s32.totalorder %s14, 1
    %p53 = por %p51, %p52
    %p54 = scmp.ne.s32.totalorder %s45, %s46
    %p55 = scmp.eq.s32.totalorder %s14, 0
    %p56 = por %p54, %p55
    %p57 = scmp.ne.s32.totalorder %s45, %s46
    %p58 = scmp.eq.s32.totalorder %s15, 1
    %p59 = por %p57, %p58
    %p61 = scmp.ne.s32.totalorder %s46, %s60
    %p62 = scmp.eq.s32.totalorder %s15, 0
    %p63 = por %p61, %p62
    %s65 = sadd.s32 %s64, 1
    %p68 = scmp.eq.s32.totalorder %s9, 1
    %p69 = scmp.ne.s32.totalorder %s64, %s66
    %p70 = scmp.eq.s32.totalorder %s9, 0
    %p71 = por %p69, %p70
    %p72 = scmp.ne.s32.totalorder %s64, %s66
    %p73 = scmp.eq.s32.totalorder %s14, 1
    %p74 = por %p72, %p73
    %p75 = scmp.ne.s32.totalorder %s66, %s67
    %p76 = scmp.eq.s32.totalorder %s14, 0
    %p77 = por %p75, %p76
    %p78 = scmp.ne.s32.totalorder %s66, %s67
    %p79 = scmp.eq.s32.totalorder %s15, 1
    %p80 = por %p78, %p79
    %p82 = scmp.ne.s32.totalorder %s67, %s81
    %p83 = scmp.eq.s32.totalorder %s15, 0
    %p84 = por %p82, %p83
    %s85 = ssub.s32 %s9, %s16
    %p86 = scmp.eq.s32.totalorder %s85, 0
    %s88 = sadd.s32 %s87, 1
    %s89 = scalar_select %p86, %s87, %s88
    %p92 = pneg %p86
    %p93 = scmp.eq.s32.totalorder %s9, 1
    %p94 = por %p92, %p93
    %p95 = scmp.ne.s32.totalorder %s87, %s90
    %p96 = scmp.eq.s32.totalorder %s9, 0
    %p97 = por %p95, %p96
    %p98 = scmp.ne.s32.totalorder %s87, %s90
    %p99 = scmp.eq.s32.totalorder %s14, 1
    %p100 = por %p98, %p99
    %p101 = scmp.ne.s32.totalorder %s90, %s91
    %p102 = scmp.eq.s32.totalorder %s14, 0
    %p103 = por %p101, %p102
    %p104 = scmp.ne.s32.totalorder %s90, %s91
    %p105 = scmp.eq.s32.totalorder %s15, 1
    %p106 = por %p104, %p105
    %p108 = scmp.ne.s32.totalorder %s91, %s107
    %p109 = scmp.eq.s32.totalorder %s15, 0
    %p110 = por %p108, %p109
    %p111 = scmp.le.s32.totalorder 1, %s9
    %p112 = scmp.lt.s32.totalorder %s9, 3
    %p113 = pnand %p111, %p112
    %p114 = pneg %p113
    // Predicated region
    $region9: #{resnet_forward.14} parent=5 // pred_check
      _
    $region10: #{resnet_forward.14} parent=5 // pred_check_branch
      %116 = sbr.rel (%p113) target = $region12
    $region11: #{resnet_forward.14} parent=5 // pred_region
      %s117 = ssub.s32 %s9, 1
      // Predicated region
      $region13: #{resnet_forward.14} parent=11 // pred_check
        %p118 = pneg %p56
      $region14: #{resnet_forward.14} parent=11 // pred_check_branch
        %120 = sbr.rel (%p118) target = $region16
      $region15: #{resnet_forward.14} parent=11 // pred_region
        _
      $region16: #{resnet_forward.14} parent=11 // pred_fallthru
        _
      // Predicated region
      $region17: #{resnet_forward.14} parent=11 // pred_check
        %p121 = pneg %p77
      $region18: #{resnet_forward.14} parent=11 // pred_check_branch
        %123 = sbr.rel (%p121) target = $region20
      $region19: #{resnet_forward.14} parent=11 // pred_region
        _
      $region20: #{resnet_forward.14} parent=11 // pred_fallthru
        _
    $region12: #{resnet_forward.14} parent=5 // pred_fallthru
      _
    %p124 = scmp.lt.s32.totalorder %s9, 2
    // Predicated region
    $region21: #{resnet_forward.14} parent=5 // pred_check
      %p125 = pneg %p124
    $region22: #{resnet_forward.14} parent=5 // pred_check_branch
      %127 = sbr.rel (%p125) target = $region24
    $region23: #{resnet_forward.14} parent=5 // pred_region
      // Predicated region
      $region25: #{resnet_forward.14} parent=23 // pred_check
        %p128 = pneg %p29
      $region26: #{resnet_forward.14} parent=23 // pred_check_branch
        %130 = sbr.rel (%p128) target = $region28
      $region27: #{resnet_forward.14} parent=23 // pred_region
        %s131 = smul.u32 8, %s9
        %p132 = scmp.lt.s32.totalorder %s131, 15
        %s133 = scalar_select %p132, %s131, 15
        %s134 = smul.addr %s133, 4
        %s135 = scalar_lea.vmem %s0, %s134
        %s136 = smul.u32 8, %s9
      $region28: #{resnet_forward.14} parent=23 // pred_fallthru
        _
    $region24: #{resnet_forward.14} parent=5 // pred_fallthru
      _
    %p137 = scmp.le.s32.totalorder 1, %s9
    %p138 = scmp.lt.s32.totalorder %s9, 3
    %p139 = pnand %p137, %p138
    %p140 = pneg %p139
    // Predicated region
    $region29: #{resnet_forward.14} parent=5 // pred_check
      _
    $region30: #{resnet_forward.14} parent=5 // pred_check_branch
      %142 = sbr.rel (%p139) target = $region32
    $region31: #{resnet_forward.14} parent=5 // pred_region
      %s143 = ssub.s32 %s9, 1
      %s144 = smul.u32 8, %s14
      %p145 = scmp.lt.s32.totalorder %s144, 15
      %s146 = scalar_select %p145, %s144, 15
      %s147 = smul.addr %s146, 4
      %s148 = scalar_lea.vmem %s0, %s147
      %p149 = pneg %p35
      %p150 = pneg %p32
      %p151 = pneg %p56
      %p152 = pneg %p53
      %p153 = pneg %p77
      %p154 = pneg %p74
      %p155 = pneg %p103
      %p156 = pneg %p100
      %s157 = smul.u32 8, %s14
      %p158 = scmp.lt.s32.totalorder %s157, 15
      %s159 = scalar_select %p158, %s157, 15
      %s160 = smul.addr %s159, 4
      %s161 = scalar_lea.vmem %s3, %s160
      %s162 = smul.u32 8, %s14
      %p163 = scmp.lt.s32.totalorder %s162, 15
      %s164 = scalar_select %p163, %s162, 15
      %s165 = smul.addr %s164, 4
      %s166 = scalar_lea.vmem %s0, %s165
      %s167 = smul.u32 8, %s14
      %s168 = smul.u32 8, %s14
      %p169 = scmp.lt.s32.totalorder %s168, 15
      %s170 = scalar_select %p169, %s168, 15
      %s171 = smul.addr %s170, 4
      %s172 = scalar_lea.vmem %s3, %s171
      %s173 = smul.u32 8, %s14
      %v175 = vld [vmem:[%s166] sm:$0xf]
      %v176 = vld [vmem:[%s166 + $0x4] sm:$0xf]
      %v177 = vld [vmem:[%s166 + $0x8] sm:$0xf]
      %v178 = vld [vmem:[%s166 + $0xc] sm:$0xf]
      %v179 = vld [vmem:[%s166 + $0x10] sm:$0xf]
      %v180 = vld [vmem:[%s166 + $0x14] sm:$0xf]
      %v181 = vld [vmem:[%s166 + $0x18] sm:$0xf]
      %v182 = vld [vmem:[%s166 + $0x1c] sm:$0xf]
      %v183 = vld [vmem:[%s1] sm:$0xf]
      %v184 = vld [vmem:[%s1 + $0x4] sm:$0xf]
      %v185 = vld [vmem:[%s1 + $0x8] sm:$0xf]
      %v186 = vld [vmem:[%s1 + $0xc] sm:$0xf]
      %v187 = vld [vmem:[%s1 + $0x10] sm:$0xf]
      %v188 = vld [vmem:[%s1 + $0x14] sm:$0xf]
      %v189 = vld [vmem:[%s1 + $0x18] sm:$0xf]
      %v190 = vld [vmem:[%s1 + $0x1c] sm:$0xf]
      %v191 = vld [vmem:[%s1 + $0x20] sm:$0xf]
      %v192 = vld [vmem:[%s2] sm:$0x1]
      %v194 = vlaneseq
      %v195 = vshrl.u32 %v194, 7
      %v196 = vsub.s32 0, %v195
      %v197 = vrot.slane %v192, %v196
      %v207 = vunpack.c.l.b16 %v175
      %v208 = vunpack.c.l.b16 %v176
      %v209 = vunpack.c.l.b16 %v177
      %v210 = vunpack.c.l.b16 %v178
      %v211 = vunpack.c.l.b16 %v179
      %v212 = vunpack.c.l.b16 %v180
      %v213 = vunpack.c.l.b16 %v181
      %v214 = vunpack.c.l.b16 %v182
      %v215 = vpack.c.b16 %v208, %v207
      %v216 = vpack.c.b16 %v210, %v209
      %v217 = vpack.c.b16 %v212, %v211
      %v218 = vpack.c.b16 %v214, %v213
      %v228 = vunpack.c.l.b16 %v183
      %v229 = vunpack.c.l.b16 %v184
      %v230 = vunpack.c.l.b16 %v185
      %v231 = vunpack.c.l.b16 %v186
      %v232 = vunpack.c.l.b16 %v187
      %v233 = vunpack.c.l.b16 %v188
      %v234 = vunpack.c.l.b16 %v189
      %v235 = vunpack.c.l.b16 %v190
      %v236 = vunpack.c.l.b16 %v191
      %v237 = vpack.c.b16 %v229, %v228
      %v238 = vpack.c.b16 %v231, %v230
      %v239 = vpack.c.b16 %v233, %v232
      %v240 = vpack.c.b16 %v235, %v234
      %v241 = vpack.c.b16 %v236, %v236
      %vm246 = vcmask 588800
      %v248 = vsel %vm246, %v215, 0
      %v251 = vsel %vm246, %v216, 0
      %v254 = vsel %vm246, %v217, 0
      %v257 = vsel %vm246, %v218, 0
      %vm259 = vcmask 1043456
      %v261 = vsel %vm259, %v241, 0
      %263 = vmatprep.subr.bf16.mxu0 0
      %264 = vmatpush1.bf16.msra.mxu0 0
      %265 = vmatprep.subr.bf16.mxu0 0
      %266 = vmatpush1.bf16.msra.mxu0 0
      %267 = vmatprep.subr.bf16.mxu0 0
      %268 = vmatpush1.bf16.msra.mxu0 0
      %269 = vmatprep.subr.bf16.mxu0 0
      %270 = vmatpush1.bf16.msra.mxu0 %v261
      %271 = vmatprep.subr.bf16.mxu0 0
      %272 = vmatpush1.bf16.msra.mxu0 %v240
      %273 = vmatprep.subr.bf16.mxu0 0
      %274 = vmatpush1.bf16.msra.mxu0 %v239
      %275 = vmatprep.subr.bf16.mxu0 0
      %276 = vmatpush1.bf16.msra.mxu0 %v238
      %277 = vmatprep.subr.bf16.mxu0 0
      %278 = vmatpush1.bf16.msra.mxu0 %v237
      %279 = vmatprep.subr.bf16.mxu0 0
      %280 = vmatpush2.bf16.msra.mxu0 0
      %281 = vmatprep.subr.bf16.mxu0 0
      %282 = vmatpush2.bf16.msra.mxu0 0
      %283 = vmatprep.subr.bf16.mxu0 0
      %284 = vmatpush2.bf16.msra.mxu0 0
      %285 = vmatprep.subr.bf16.mxu0 0
      %286 = vmatpush2.bf16.msra.mxu0 0
      %287 = vmatprep.subr.bf16.mxu0 0
      %288 = vmatpush2.bf16.msra.mxu0 0
      %289 = vmatprep.subr.bf16.mxu0 0
      %290 = vmatpush2.bf16.msra.mxu0 0
      %291 = vmatprep.subr.bf16.mxu0 0
      %292 = vmatpush2.bf16.msra.mxu0 0
      %293 = vmatprep.subr.bf16.mxu0 0
      %294 = vmatpush2.bf16.msra.mxu0 0
      %295 = vmatprep.mubr.bf16.mxu0 0
      %296 = vmatmul.mubr.bf16.gmra.mxu0 %v248
      %v297 = vpop.f32.mrf.mxu0
      %v298 = vadd.f32 %v197, %v297
      %v299 = vpop.f32.mrf.mxu0
      %v300 = vpop.f32.mrf.mxu0
      %v301 = vadd.f32 %v197, %v300
      %v302 = vpop.f32.mrf.mxu0
      %303 = vmatprep.mubr.bf16.mxu0 0
      %304 = vmatmul.mubr.bf16.gmra.mxu0 %v251
      %v305 = vpop.f32.mrf.mxu0
      %v306 = vadd.f32 %v197, %v305
      %v307 = vpop.f32.mrf.mxu0
      %v308 = vpop.f32.mrf.mxu0
      %v309 = vadd.f32 %v197, %v308
      %v310 = vpop.f32.mrf.mxu0
      %311 = vmatprep.mubr.bf16.mxu0 0
      %312 = vmatmul.mubr.bf16.gmra.mxu0 %v254
      %v313 = vpop.f32.mrf.mxu0
      %v314 = vadd.f32 %v197, %v313
      %v315 = vpop.f32.mrf.mxu0
      %v316 = vpop.f32.mrf.mxu0
      %v317 = vadd.f32 %v197, %v316
      %v318 = vpop.f32.mrf.mxu0
      %319 = vmatprep.mubr.bf16.mxu0 0
      %320 = vmatmul.mubr.bf16.gmra.mxu0 %v257
      %v321 = vpop.f32.mrf.mxu0
      %v322 = vadd.f32 %v197, %v321
      %v323 = vpop.f32.mrf.mxu0
      %v324 = vpop.f32.mrf.mxu0
      %v325 = vadd.f32 %v197, %v324
      %v326 = vpop.f32.mrf.mxu0
      %327 = vdwg.mxu0
      %v328 = vmax.f32 %v298, 0.0
      %v329 = vmax.f32 %v301, 0.0
      %v330 = vmax.f32 %v306, 0.0
      %v331 = vmax.f32 %v309, 0.0
      %v332 = vmax.f32 %v314, 0.0
      %v333 = vmax.f32 %v317, 0.0
      %v334 = vmax.f32 %v322, 0.0
      %v335 = vmax.f32 %v325, 0.0
      %v336 = vpack.c.bf16 %v329, %v328
      %v337 = vpack.c.bf16 %v331, %v330
      %v338 = vpack.c.bf16 %v333, %v332
      %v339 = vpack.c.bf16 %v335, %v334
      %v344 = vunpack.c.l.b16 %v336
      %v345 = vunpack.c.h.b16 %v336
      %v346 = vunpack.c.l.b16 %v337
      %v347 = vunpack.c.h.b16 %v337
      %v348 = vunpack.c.l.b16 %v338
      %v349 = vunpack.c.h.b16 %v338
      %v350 = vunpack.c.l.b16 %v339
      %v351 = vunpack.c.h.b16 %v339
      %v352 = vpack.c.b16 %v344, %v344
      %v353 = vpack.c.b16 %v345, %v345
      %v354 = vpack.c.b16 %v346, %v346
      %v355 = vpack.c.b16 %v347, %v347
      %v356 = vpack.c.b16 %v348, %v348
      %v357 = vpack.c.b16 %v349, %v349
      %v358 = vpack.c.b16 %v350, %v350
      %v359 = vpack.c.b16 %v351, %v351
      %368 = vst [vmem:[%s172] sm:$0xf] %v352
      %369 = vst [vmem:[%s172 + $0x4] sm:$0xf] %v353
      %370 = vst [vmem:[%s172 + $0x8] sm:$0xf] %v354
      %371 = vst [vmem:[%s172 + $0xc] sm:$0xf] %v355
      %372 = vst [vmem:[%s172 + $0x10] sm:$0xf] %v356
      %373 = vst [vmem:[%s172 + $0x14] sm:$0xf] %v357
      %374 = vst [vmem:[%s172 + $0x18] sm:$0xf] %v358
      %375 = vst [vmem:[%s172 + $0x1c] sm:$0xf] %v359
      %s376 = smul.u32 8, %s14
      %p377 = scmp.lt.s32.totalorder %s376, 15
      %s378 = scalar_select %p377, %s376, 15
      %s379 = smul.addr %s378, 4
      %s380 = scalar_lea.vmem %s3, %s379
      // Predicated region
      $region33: #{resnet_forward.14} parent=31 // pred_check
        %p381 = pneg %p100
      $region34: #{resnet_forward.14} parent=31 // pred_check_branch
        %383 = sbr.rel (%p381) target = $region36
      $region35: #{resnet_forward.14} parent=31 // pred_region
        %s384 = smul.u32 8, %s14
      $region36: #{resnet_forward.14} parent=31 // pred_fallthru
        _
    $region32: #{resnet_forward.14} parent=5 // pred_fallthru
      _
    %p385 = scmp.le.s32.totalorder 2, %s9
    // Predicated region
    $region37: #{resnet_forward.14} parent=5 // pred_check
      %p386 = pneg %p385
    $region38: #{resnet_forward.14} parent=5 // pred_check_branch
      %388 = sbr.rel (%p386) target = $region40
    $region39: #{resnet_forward.14} parent=5 // pred_region
      %s389 = ssub.s32 %s9, 2
      // Predicated region
      $region41: #{resnet_forward.14} parent=39 // pred_check
        %p390 = pneg %p106
      $region42: #{resnet_forward.14} parent=39 // pred_check_branch
        %392 = sbr.rel (%p390) target = $region44
      $region43: #{resnet_forward.14} parent=39 // pred_region
        %s393 = smul.u32 8, %s15
        %p394 = scmp.lt.s32.totalorder %s393, 15
        %s395 = scalar_select %p394, %s393, 15
        %s396 = smul.addr %s395, 4
        %s397 = scalar_lea.vmem %s3, %s396
      $region44: #{resnet_forward.14} parent=39 // pred_fallthru
        _
    $region40: #{resnet_forward.14} parent=5 // pred_fallthru
      _
  $region6: #{resnet_forward.14} parent=0 // loop_footer
    %s13 = sadd.s32 1, %s9
  $region7: #{resnet_forward.14} parent=0 // loop_footer_branch
    %8 = sbr.rel target = $region3
  $region8: #{resnet_forward.14} parent=0 // loop_exit
    _

// kernel: resnet_forward.15
$region0: #{resnet_forward.15}
  #allocation0 [shape = 'u32[]', space=smem, size = 0x4, offset = 0x4, fixed_abs, tag = 'smem constant byte address 0x4 - core index']
  #allocation1 [shape = 'u32[144,128]{1,0:T(1,128)}', space=vmem, size = 0x12000, scoped, tag = 'internal scratch']
  %s0 = inlined_call_operand.vmem [shape: bf16[128,72], index: 0, kind: input, shape index: {}]
  %s1 = inlined_call_operand.vmem [shape: bf16[72,128], index: 1, kind: input, shape index: {}]
  %s2 = inlined_call_operand.vmem [shape: f32[1,128], index: 2, kind: input, shape index: {}]
  %s3 = inlined_call_operand.vmem [shape: bf16[128,128], index: 3, kind: input, shape index: {}]
  %s4 = inlined_call_operand.vmem [shape: bf16[128,128], index: 4, kind: output, shape index: {}]
  %s5 = sld [smem:[#allocation0]]
  $region49: #{resnet_forward.15} parent=0
    _
  %s7 = ssub.s32 1, %s5
  %s8 = scalar_select 0, %s7, %s5
  loop: start=0, step=1, limit=4
  $region2: #{resnet_forward.15} parent=0 // loop_pre_header
    _
  $region3: #{resnet_forward.15} parent=0 // loop_header
    %s10 = sphi 0, %s14
    %p11 = scmp.ge.s32.totalorder %s10, 4
    %s20 = sphi 0, %s22
    %s23 = sphi 0, %s20
    %s24 = sphi 0, %s23
    %s40 = sphi 0, %s24
    %s44 = sphi 0, %s44
    %s46 = sphi 0, %s44
    %s47 = sphi 0, %s46
    %s61 = sphi 0, %s47
    %s65 = sphi 0, %s65
    %s67 = sphi 0, %s65
    %s68 = sphi 0, %s67
    %s82 = sphi 0, %s68
    %s88 = sphi 0, %s90
    %s91 = sphi 0, %s88
    %s92 = sphi 0, %s91
    %s108 = sphi 0, %s92
    %s114 = sphi 0, %s116
    %s117 = sphi 0, %s114
    %s118 = sphi 0, %s117
    %s134 = sphi 0, %s118
  $region4: #{resnet_forward.15} parent=0 // loop_header_branch
    %13 = sbr.rel (%p11) target = $region8
  $region5: #{resnet_forward.15} parent=0 // loop_body
    %s15 = ssub.s32 %s10, 1
    %s16 = ssub.s32 %s10, 2
    %s17 = sadd.s32 %s10, 1
    %s18 = ssub.s32 %s10, %s17
    %p19 = scmp.eq.s32.totalorder %s18, 0
    %s21 = sadd.s32 %s20, 1
    %s22 = scalar_select %p19, %s20, %s21
    %p25 = pneg %p19
    %p26 = scmp.eq.s32.totalorder %s10, 1
    %p27 = por %p25, %p26
    %p28 = scmp.ne.s32.totalorder %s20, %s23
    %p29 = scmp.eq.s32.totalorder %s10, 0
    %p30 = por %p28, %p29
    %p31 = scmp.ne.s32.totalorder %s20, %s23
    %p32 = scmp.eq.s32.totalorder %s15, 1
    %p33 = por %p31, %p32
    %p34 = scmp.ne.s32.totalorder %s23, %s24
    %p35 = scmp.eq.s32.totalorder %s15, 0
    %p36 = por %p34, %p35
    %p37 = scmp.ne.s32.totalorder %s23, %s24
    %p38 = scmp.eq.s32.totalorder %s16, 1
    %p39 = por %p37, %p38
    %p41 = scmp.ne.s32.totalorder %s24, %s40
    %p42 = scmp.eq.s32.totalorder %s16, 0
    %p43 = por %p41, %p42
    %s45 = sadd.s32 %s44, 1
    %p48 = scmp.eq.s32.totalorder %s10, 1
    %p49 = scmp.ne.s32.totalorder %s44, %s46
    %p50 = scmp.eq.s32.totalorder %s10, 0
    %p51 = por %p49, %p50
    %p52 = scmp.ne.s32.totalorder %s44, %s46
    %p53 = scmp.eq.s32.totalorder %s15, 1
    %p54 = por %p52, %p53
    %p55 = scmp.ne.s32.totalorder %s46, %s47
    %p56 = scmp.eq.s32.totalorder %s15, 0
    %p57 = por %p55, %p56
    %p58 = scmp.ne.s32.totalorder %s46, %s47
    %p59 = scmp.eq.s32.totalorder %s16, 1
    %p60 = por %p58, %p59
    %p62 = scmp.ne.s32.totalorder %s47, %s61
    %p63 = scmp.eq.s32.totalorder %s16, 0
    %p64 = por %p62, %p63
    %s66 = sadd.s32 %s65, 1
    %p69 = scmp.eq.s32.totalorder %s10, 1
    %p70 = scmp.ne.s32.totalorder %s65, %s67
    %p71 = scmp.eq.s32.totalorder %s10, 0
    %p72 = por %p70, %p71
    %p73 = scmp.ne.s32.totalorder %s65, %s67
    %p74 = scmp.eq.s32.totalorder %s15, 1
    %p75 = por %p73, %p74
    %p76 = scmp.ne.s32.totalorder %s67, %s68
    %p77 = scmp.eq.s32.totalorder %s15, 0
    %p78 = por %p76, %p77
    %p79 = scmp.ne.s32.totalorder %s67, %s68
    %p80 = scmp.eq.s32.totalorder %s16, 1
    %p81 = por %p79, %p80
    %p83 = scmp.ne.s32.totalorder %s68, %s82
    %p84 = scmp.eq.s32.totalorder %s16, 0
    %p85 = por %p83, %p84
    %s86 = ssub.s32 %s10, %s17
    %p87 = scmp.eq.s32.totalorder %s86, 0
    %s89 = sadd.s32 %s88, 1
    %s90 = scalar_select %p87, %s88, %s89
    %p93 = pneg %p87
    %p94 = scmp.eq.s32.totalorder %s10, 1
    %p95 = por %p93, %p94
    %p96 = scmp.ne.s32.totalorder %s88, %s91
    %p97 = scmp.eq.s32.totalorder %s10, 0
    %p98 = por %p96, %p97
    %p99 = scmp.ne.s32.totalorder %s88, %s91
    %p100 = scmp.eq.s32.totalorder %s15, 1
    %p101 = por %p99, %p100
    %p102 = scmp.ne.s32.totalorder %s91, %s92
    %p103 = scmp.eq.s32.totalorder %s15, 0
    %p104 = por %p102, %p103
    %p105 = scmp.ne.s32.totalorder %s91, %s92
    %p106 = scmp.eq.s32.totalorder %s16, 1
    %p107 = por %p105, %p106
    %p109 = scmp.ne.s32.totalorder %s92, %s108
    %p110 = scmp.eq.s32.totalorder %s16, 0
    %p111 = por %p109, %p110
    %s112 = ssub.s32 %s10, %s17
    %p113 = scmp.eq.s32.totalorder %s112, 0
    %s115 = sadd.s32 %s114, 1
    %s116 = scalar_select %p113, %s114, %s115
    %p119 = pneg %p113
    %p120 = scmp.eq.s32.totalorder %s10, 1
    %p121 = por %p119, %p120
    %p122 = scmp.ne.s32.totalorder %s114, %s117
    %p123 = scmp.eq.s32.totalorder %s10, 0
    %p124 = por %p122, %p123
    %p125 = scmp.ne.s32.totalorder %s114, %s117
    %p126 = scmp.eq.s32.totalorder %s15, 1
    %p127 = por %p125, %p126
    %p128 = scmp.ne.s32.totalorder %s117, %s118
    %p129 = scmp.eq.s32.totalorder %s15, 0
    %p130 = por %p128, %p129
    %p131 = scmp.ne.s32.totalorder %s117, %s118
    %p132 = scmp.eq.s32.totalorder %s16, 1
    %p133 = por %p131, %p132
    %p135 = scmp.ne.s32.totalorder %s118, %s134
    %p136 = scmp.eq.s32.totalorder %s16, 0
    %p137 = por %p135, %p136
    %p138 = scmp.le.s32.totalorder 1, %s10
    %p139 = scmp.lt.s32.totalorder %s10, 3
    %p140 = pnand %p138, %p139
    %p141 = pneg %p140
    // Predicated region
    $region9: #{resnet_forward.15} parent=5 // pred_check
      _
    $region10: #{resnet_forward.15} parent=5 // pred_check_branch
      %143 = sbr.rel (%p140) target = $region12
    $region11: #{resnet_forward.15} parent=5 // pred_region
      %s144 = ssub.s32 %s10, 1
      // Predicated region
      $region13: #{resnet_forward.15} parent=11 // pred_check
        %p145 = pneg %p57
      $region14: #{resnet_forward.15} parent=11 // pred_check_branch
        %147 = sbr.rel (%p145) target = $region16
      $region15: #{resnet_forward.15} parent=11 // pred_region
        _
      $region16: #{resnet_forward.15} parent=11 // pred_fallthru
        _
      // Predicated region
      $region17: #{resnet_forward.15} parent=11 // pred_check
        %p148 = pneg %p78
      $region18: #{resnet_forward.15} parent=11 // pred_check_branch
        %150 = sbr.rel (%p148) target = $region20
      $region19: #{resnet_forward.15} parent=11 // pred_region
        _
      $region20: #{resnet_forward.15} parent=11 // pred_fallthru
        _
    $region12: #{resnet_forward.15} parent=5 // pred_fallthru
      _
    %p151 = scmp.lt.s32.totalorder %s10, 2
    // Predicated region
    $region21: #{resnet_forward.15} parent=5 // pred_check
      %p152 = pneg %p151
    $region22: #{resnet_forward.15} parent=5 // pred_check_branch
      %154 = sbr.rel (%p152) target = $region24
    $region23: #{resnet_forward.15} parent=5 // pred_region
      // Predicated region
      $region25: #{resnet_forward.15} parent=23 // pred_check
        %p155 = pneg %p30
      $region26: #{resnet_forward.15} parent=23 // pred_check_branch
        %157 = sbr.rel (%p155) target = $region28
      $region27: #{resnet_forward.15} parent=23 // pred_region
        %s158 = smul.u32 8, %s10
        %p159 = scmp.lt.s32.totalorder %s158, 15
        %s160 = scalar_select %p159, %s158, 15
        %s161 = smul.addr %s160, 4
        %s162 = scalar_lea.vmem %s0, %s161
        %s163 = smul.u32 8, %s10
      $region28: #{resnet_forward.15} parent=23 // pred_fallthru
        _
      // Predicated region
      $region29: #{resnet_forward.15} parent=23 // pred_check
        %p164 = pneg %p98
      $region30: #{resnet_forward.15} parent=23 // pred_check_branch
        %166 = sbr.rel (%p164) target = $region32
      $region31: #{resnet_forward.15} parent=23 // pred_region
        %s167 = smul.u32 8, %s10
        %p168 = scmp.lt.s32.totalorder %s167, 15
        %s169 = scalar_select %p168, %s167, 15
        %s170 = smul.addr %s169, 4
        %s171 = scalar_lea.vmem %s3, %s170
        %s172 = smul.u32 8, %s10
      $region32: #{resnet_forward.15} parent=23 // pred_fallthru
        _
    $region24: #{resnet_forward.15} parent=5 // pred_fallthru
      _
    %p173 = scmp.le.s32.totalorder 1, %s10
    %p174 = scmp.lt.s32.totalorder %s10, 3
    %p175 = pnand %p173, %p174
    %p176 = pneg %p175
    // Predicated region
    $region33: #{resnet_forward.15} parent=5 // pred_check
      _
    $region34: #{resnet_forward.15} parent=5 // pred_check_branch
      %178 = sbr.rel (%p175) target = $region36
    $region35: #{resnet_forward.15} parent=5 // pred_region
      %s179 = ssub.s32 %s10, 1
      %s180 = smul.u32 8, %s15
      %p181 = scmp.lt.s32.totalorder %s180, 15
      %s182 = scalar_select %p181, %s180, 15
      %s183 = smul.addr %s182, 4
      %s184 = scalar_lea.vmem %s0, %s183
      %p185 = pneg %p36
      %p186 = pneg %p33
      %p187 = pneg %p57
      %p188 = pneg %p54
      %p189 = pneg %p78
      %p190 = pneg %p75
      %s191 = smul.u32 8, %s15
      %p192 = scmp.lt.s32.totalorder %s191, 15
      %s193 = scalar_select %p192, %s191, 15
      %s194 = smul.addr %s193, 4
      %s195 = scalar_lea.vmem %s3, %s194
      %p196 = pneg %p104
      %p197 = pneg %p101
      %p198 = pneg %p130
      %p199 = pneg %p127
      %s200 = smul.u32 8, %s15
      %p201 = scmp.lt.s32.totalorder %s200, 15
      %s202 = scalar_select %p201, %s200, 15
      %s203 = smul.addr %s202, 4
      %s204 = scalar_lea.vmem %s4, %s203
      %s205 = smul.u32 8, %s15
      %p206 = scmp.lt.s32.totalorder %s205, 15
      %s207 = scalar_select %p206, %s205, 15
      %s208 = smul.addr %s207, 4
      %s209 = scalar_lea.vmem %s0, %s208
      %s210 = smul.u32 8, %s15
      %s211 = smul.u32 8, %s15
      %p212 = scmp.lt.s32.totalorder %s211, 15
      %s213 = scalar_select %p212, %s211, 15
      %s214 = smul.addr %s213, 4
      %s215 = scalar_lea.vmem %s3, %s214
      %s216 = smul.u32 8, %s15
      %s217 = smul.u32 8, %s15
      %p218 = scmp.lt.s32.totalorder %s217, 15
      %s219 = scalar_select %p218, %s217, 15
      %s220 = smul.addr %s219, 4
      %s221 = scalar_lea.vmem %s4, %s220
      %s222 = smul.u32 8, %s15
      %v224 = vld [vmem:[%s209] sm:$0xf]
      %v225 = vld [vmem:[%s209 + $0x4] sm:$0xf]
      %v226 = vld [vmem:[%s209 + $0x8] sm:$0xf]
      %v227 = vld [vmem:[%s209 + $0xc] sm:$0xf]
      %v228 = vld [vmem:[%s209 + $0x10] sm:$0xf]
      %v229 = vld [vmem:[%s209 + $0x14] sm:$0xf]
      %v230 = vld [vmem:[%s209 + $0x18] sm:$0xf]
      %v231 = vld [vmem:[%s209 + $0x1c] sm:$0xf]
      %v232 = vld [vmem:[%s1] sm:$0xf]
      %v233 = vld [vmem:[%s1 + $0x4] sm:$0xf]
      %v234 = vld [vmem:[%s1 + $0x8] sm:$0xf]
      %v235 = vld [vmem:[%s1 + $0xc] sm:$0xf]
      %v236 = vld [vmem:[%s1 + $0x10] sm:$0xf]
      %v237 = vld [vmem:[%s1 + $0x14] sm:$0xf]
      %v238 = vld [vmem:[%s1 + $0x18] sm:$0xf]
      %v239 = vld [vmem:[%s1 + $0x1c] sm:$0xf]
      %v240 = vld [vmem:[%s1 + $0x20] sm:$0xf]
      %v241 = vld [vmem:[%s2] sm:$0x1]
      %v243 = vlaneseq
      %v244 = vshrl.u32 %v243, 7
      %v245 = vsub.s32 0, %v244
      %v246 = vrot.slane %v241, %v245
      %v256 = vunpack.c.l.b16 %v224
      %v257 = vunpack.c.l.b16 %v225
      %v258 = vunpack.c.l.b16 %v226
      %v259 = vunpack.c.l.b16 %v227
      %v260 = vunpack.c.l.b16 %v228
      %v261 = vunpack.c.l.b16 %v229
      %v262 = vunpack.c.l.b16 %v230
      %v263 = vunpack.c.l.b16 %v231
      %v264 = vpack.c.b16 %v257, %v256
      %v265 = vpack.c.b16 %v259, %v258
      %v266 = vpack.c.b16 %v261, %v260
      %v267 = vpack.c.b16 %v263, %v262
      %v277 = vunpack.c.l.b16 %v232
      %v278 = vunpack.c.l.b16 %v233
      %v279 = vunpack.c.l.b16 %v234
      %v280 = vunpack.c.l.b16 %v235
      %v281 = vunpack.c.l.b16 %v236
      %v282 = vunpack.c.l.b16 %v237
      %v283 = vunpack.c.l.b16 %v238
      %v284 = vunpack.c.l.b16 %v239
      %v285 = vunpack.c.l.b16 %v240
      %v286 = vpack.c.b16 %v278, %v277
      %v287 = vpack.c.b16 %v280, %v279
      %v288 = vpack.c.b16 %v282, %v281
      %v289 = vpack.c.b16 %v284, %v283
      %v290 = vpack.c.b16 %v285, %v285
      %vm295 = vcmask 588800
      %v297 = vsel %vm295, %v264, 0
      %v300 = vsel %vm295, %v265, 0
      %v303 = vsel %vm295, %v266, 0
      %v306 = vsel %vm295, %v267, 0
      %vm308 = vcmask 1043456
      %v310 = vsel %vm308, %v290, 0
      %312 = vmatprep.subr.bf16.mxu0 0
      %313 = vmatpush1.bf16.msra.mxu0 0
      %314 = vmatprep.subr.bf16.mxu0 0
      %315 = vmatpush1.bf16.msra.mxu0 0
      %316 = vmatprep.subr.bf16.mxu0 0
      %317 = vmatpush1.bf16.msra.mxu0 0
      %318 = vmatprep.subr.bf16.mxu0 0
      %319 = vmatpush1.bf16.msra.mxu0 %v310
      %320 = vmatprep.subr.bf16.mxu0 0
      %321 = vmatpush1.bf16.msra.mxu0 %v289
      %322 = vmatprep.subr.bf16.mxu0 0
      %323 = vmatpush1.bf16.msra.mxu0 %v288
      %324 = vmatprep.subr.bf16.mxu0 0
      %325 = vmatpush1.bf16.msra.mxu0 %v287
      %326 = vmatprep.subr.bf16.mxu0 0
      %327 = vmatpush1.bf16.msra.mxu0 %v286
      %328 = vmatprep.subr.bf16.mxu0 0
      %329 = vmatpush2.bf16.msra.mxu0 0
      %330 = vmatprep.subr.bf16.mxu0 0
      %331 = vmatpush2.bf16.msra.mxu0 0
      %332 = vmatprep.subr.bf16.mxu0 0
      %333 = vmatpush2.bf16.msra.mxu0 0
      %334 = vmatprep.subr.bf16.mxu0 0
      %335 = vmatpush2.bf16.msra.mxu0 0
      %336 = vmatprep.subr.bf16.mxu0 0
      %337 = vmatpush2.bf16.msra.mxu0 0
      %338 = vmatprep.subr.bf16.mxu0 0
      %339 = vmatpush2.bf16.msra.mxu0 0
      %340 = vmatprep.subr.bf16.mxu0 0
      %341 = vmatpush2.bf16.msra.mxu0 0
      %342 = vmatprep.subr.bf16.mxu0 0
      %343 = vmatpush2.bf16.msra.mxu0 0
      %344 = vmatprep.mubr.bf16.mxu0 0
      %345 = vmatmul.mubr.bf16.gmra.mxu0 %v297
      %v346 = vpop.f32.mrf.mxu0
      %v347 = vadd.f32 %v246, %v346
      %v348 = vpop.f32.mrf.mxu0
      %v349 = vpop.f32.mrf.mxu0
      %v350 = vadd.f32 %v246, %v349
      %v351 = vpop.f32.mrf.mxu0
      %352 = vmatprep.mubr.bf16.mxu0 0
      %353 = vmatmul.mubr.bf16.gmra.mxu0 %v300
      %v354 = vpop.f32.mrf.mxu0
      %v355 = vadd.f32 %v246, %v354
      %v356 = vpop.f32.mrf.mxu0
      %v357 = vpop.f32.mrf.mxu0
      %v358 = vadd.f32 %v246, %v357
      %v359 = vpop.f32.mrf.mxu0
      %360 = vmatprep.mubr.bf16.mxu0 0
      %361 = vmatmul.mubr.bf16.gmra.mxu0 %v303
      %v362 = vpop.f32.mrf.mxu0
      %v363 = vadd.f32 %v246, %v362
      %v364 = vpop.f32.mrf.mxu0
      %v365 = vpop.f32.mrf.mxu0
      %v366 = vadd.f32 %v246, %v365
      %v367 = vpop.f32.mrf.mxu0
      %368 = vmatprep.mubr.bf16.mxu0 0
      %369 = vmatmul.mubr.bf16.gmra.mxu0 %v306
      %v370 = vpop.f32.mrf.mxu0
      %v371 = vadd.f32 %v246, %v370
      %v372 = vpop.f32.mrf.mxu0
      %v373 = vpop.f32.mrf.mxu0
      %v374 = vadd.f32 %v246, %v373
      %v375 = vpop.f32.mrf.mxu0
      %376 = vdwg.mxu0
      %v377 = vld [vmem:[%s215] sm:$0xf]
      %v378 = vld [vmem:[%s215 + $0x4] sm:$0xf]
      %v379 = vld [vmem:[%s215 + $0x8] sm:$0xf]
      %v380 = vld [vmem:[%s215 + $0xc] sm:$0xf]
      %v381 = vld [vmem:[%s215 + $0x10] sm:$0xf]
      %v382 = vld [vmem:[%s215 + $0x14] sm:$0xf]
      %v383 = vld [vmem:[%s215 + $0x18] sm:$0xf]
      %v384 = vld [vmem:[%s215 + $0x1c] sm:$0xf]
      %v385 = vunpack.c.l.bf16 %v377
      %v386 = vunpack.c.l.bf16 %v378
      %v387 = vunpack.c.l.bf16 %v379
      %v388 = vunpack.c.l.bf16 %v380
      %v389 = vunpack.c.l.bf16 %v381
      %v390 = vunpack.c.l.bf16 %v382
      %v391 = vunpack.c.l.bf16 %v383
      %v392 = vunpack.c.l.bf16 %v384
      %v393 = vadd.f32 %v347, %v385
      %v394 = vadd.f32 %v350, %v386
      %v395 = vadd.f32 %v355, %v387
      %v396 = vadd.f32 %v358, %v388
      %v397 = vadd.f32 %v363, %v389
      %v398 = vadd.f32 %v366, %v390
      %v399 = vadd.f32 %v371, %v391
      %v400 = vadd.f32 %v374, %v392
      %v401 = vmax.f32 %v393, 0.0
      %v402 = vmax.f32 %v394, 0.0
      %v403 = vmax.f32 %v395, 0.0
      %v404 = vmax.f32 %v396, 0.0
      %v405 = vmax.f32 %v397, 0.0
      %v406 = vmax.f32 %v398, 0.0
      %v407 = vmax.f32 %v399, 0.0
      %v408 = vmax.f32 %v400, 0.0
      %v409 = vpack.c.bf16 %v402, %v401
      %v410 = vpack.c.bf16 %v404, %v403
      %v411 = vpack.c.bf16 %v406, %v405
      %v412 = vpack.c.bf16 %v408, %v407
      %v417 = vunpack.c.l.b16 %v409
      %v418 = vunpack.c.h.b16 %v409
      %v419 = vunpack.c.l.b16 %v410
      %v420 = vunpack.c.h.b16 %v410
      %v421 = vunpack.c.l.b16 %v411
      %v422 = vunpack.c.h.b16 %v411
      %v423 = vunpack.c.l.b16 %v412
      %v424 = vunpack.c.h.b16 %v412
      %v425 = vpack.c.b16 %v417, %v417
      %v426 = vpack.c.b16 %v418, %v418
      %v427 = vpack.c.b16 %v419, %v419
      %v428 = vpack.c.b16 %v420, %v420
      %v429 = vpack.c.b16 %v421, %v421
      %v430 = vpack.c.b16 %v422, %v422
      %v431 = vpack.c.b16 %v423, %v423
      %v432 = vpack.c.b16 %v424, %v424
      %441 = vst [vmem:[%s221] sm:$0xf] %v425
      %442 = vst [vmem:[%s221 + $0x4] sm:$0xf] %v426
      %443 = vst [vmem:[%s221 + $0x8] sm:$0xf] %v427
      %444 = vst [vmem:[%s221 + $0xc] sm:$0xf] %v428
      %445 = vst [vmem:[%s221 + $0x10] sm:$0xf] %v429
      %446 = vst [vmem:[%s221 + $0x14] sm:$0xf] %v430
      %447 = vst [vmem:[%s221 + $0x18] sm:$0xf] %v431
      %448 = vst [vmem:[%s221 + $0x1c] sm:$0xf] %v432
      %s449 = smul.u32 8, %s15
      %p450 = scmp.lt.s32.totalorder %s449, 15
      %s451 = scalar_select %p450, %s449, 15
      %s452 = smul.addr %s451, 4
      %s453 = scalar_lea.vmem %s4, %s452
      // Predicated region
      $region37: #{resnet_forward.15} parent=35 // pred_check
        %p454 = pneg %p127
      $region38: #{resnet_forward.15} parent=35 // pred_check_branch
        %456 = sbr.rel (%p454) target = $region40
      $region39: #{resnet_forward.15} parent=35 // pred_region
        %s457 = smul.u32 8, %s15
      $region40: #{resnet_forward.15} parent=35 // pred_fallthru
        _
    $region36: #{resnet_forward.15} parent=5 // pred_fallthru
      _
    %p458 = scmp.le.s32.totalorder 2, %s10
    // Predicated region
    $region41: #{resnet_forward.15} parent=5 // pred_check
      %p459 = pneg %p458
    $region42: #{resnet_forward.15} parent=5 // pred_check_branch
      %461 = sbr.rel (%p459) target = $region44
    $region43: #{resnet_forward.15} parent=5 // pred_region
      %s462 = ssub.s32 %s10, 2
      // Predicated region
      $region45: #{resnet_forward.15} parent=43 // pred_check
        %p463 = pneg %p133
      $region46: #{resnet_forward.15} parent=43 // pred_check_branch
        %465 = sbr.rel (%p463) target = $region48
      $region47: #{resnet_forward.15} parent=43 // pred_region
        %s466 = smul.u32 8, %s16
        %p467 = scmp.lt.s32.totalorder %s466, 15
        %s468 = scalar_select %p467, %s466, 15
        %s469 = smul.addr %s468, 4
        %s470 = scalar_lea.vmem %s4, %s469
      $region48: #{resnet_forward.15} parent=43 // pred_fallthru
        _
    $region44: #{resnet_forward.15} parent=5 // pred_fallthru
      _
  $region6: #{resnet_forward.15} parent=0 // loop_footer
    %s14 = sadd.s32 1, %s10
  $region7: #{resnet_forward.15} parent=0 // loop_footer_branch
    %9 = sbr.rel target = $region3
  $region8: #{resnet_forward.15} parent=0 // loop_exit
    _

// kernel: resnet_forward.16
$region0: #{resnet_forward.16}
  #allocation0 [shape = 'u32[]', space=smem, size = 0x4, offset = 0x4, fixed_abs, tag = 'smem constant byte address 0x4 - core index']
  #allocation1 [shape = 'u32[144,128]{1,0:T(1,128)}', space=vmem, size = 0x12000, scoped, tag = 'internal scratch']
  %s0 = inlined_call_operand.vmem [shape: bf16[128,8], index: 0, kind: input, shape index: {}]
  %s1 = inlined_call_operand.vmem [shape: bf16[8,128], index: 1, kind: input, shape index: {}]
  %s2 = inlined_call_operand.vmem [shape: f32[1,128], index: 2, kind: input, shape index: {}]
  %s3 = inlined_call_operand.vmem [shape: bf16[128,128], index: 3, kind: output, shape index: {}]
  %s4 = sld [smem:[#allocation0]]
  $region45: #{resnet_forward.16} parent=0
    _
  %s6 = ssub.s32 1, %s4
  %s7 = scalar_select 0, %s6, %s4
  loop: start=0, step=1, limit=4
  $region2: #{resnet_forward.16} parent=0 // loop_pre_header
    _
  $region3: #{resnet_forward.16} parent=0 // loop_header
    %s9 = sphi 0, %s13
    %p10 = scmp.ge.s32.totalorder %s9, 4
    %s19 = sphi 0, %s21
    %s22 = sphi 0, %s19
    %s23 = sphi 0, %s22
    %s39 = sphi 0, %s23
    %s43 = sphi 0, %s43
    %s45 = sphi 0, %s43
    %s46 = sphi 0, %s45
    %s60 = sphi 0, %s46
    %s64 = sphi 0, %s64
    %s66 = sphi 0, %s64
    %s67 = sphi 0, %s66
    %s81 = sphi 0, %s67
    %s87 = sphi 0, %s89
    %s90 = sphi 0, %s87
    %s91 = sphi 0, %s90
    %s107 = sphi 0, %s91
  $region4: #{resnet_forward.16} parent=0 // loop_header_branch
    %12 = sbr.rel (%p10) target = $region8
  $region5: #{resnet_forward.16} parent=0 // loop_body
    %s14 = ssub.s32 %s9, 1
    %s15 = ssub.s32 %s9, 2
    %s16 = sadd.s32 %s9, 1
    %s17 = ssub.s32 %s9, %s16
    %p18 = scmp.eq.s32.totalorder %s17, 0
    %s20 = sadd.s32 %s19, 1
    %s21 = scalar_select %p18, %s19, %s20
    %p24 = pneg %p18
    %p25 = scmp.eq.s32.totalorder %s9, 1
    %p26 = por %p24, %p25
    %p27 = scmp.ne.s32.totalorder %s19, %s22
    %p28 = scmp.eq.s32.totalorder %s9, 0
    %p29 = por %p27, %p28
    %p30 = scmp.ne.s32.totalorder %s19, %s22
    %p31 = scmp.eq.s32.totalorder %s14, 1
    %p32 = por %p30, %p31
    %p33 = scmp.ne.s32.totalorder %s22, %s23
    %p34 = scmp.eq.s32.totalorder %s14, 0
    %p35 = por %p33, %p34
    %p36 = scmp.ne.s32.totalorder %s22, %s23
    %p37 = scmp.eq.s32.totalorder %s15, 1
    %p38 = por %p36, %p37
    %p40 = scmp.ne.s32.totalorder %s23, %s39
    %p41 = scmp.eq.s32.totalorder %s15, 0
    %p42 = por %p40, %p41
    %s44 = sadd.s32 %s43, 1
    %p47 = scmp.eq.s32.totalorder %s9, 1
    %p48 = scmp.ne.s32.totalorder %s43, %s45
    %p49 = scmp.eq.s32.totalorder %s9, 0
    %p50 = por %p48, %p49
    %p51 = scmp.ne.s32.totalorder %s43, %s45
    %p52 = scmp.eq.s32.totalorder %s14, 1
    %p53 = por %p51, %p52
    %p54 = scmp.ne.s32.totalorder %s45, %s46
    %p55 = scmp.eq.s32.totalorder %s14, 0
    %p56 = por %p54, %p55
    %p57 = scmp.ne.s32.totalorder %s45, %s46
    %p58 = scmp.eq.s32.totalorder %s15, 1
    %p59 = por %p57, %p58
    %p61 = scmp.ne.s32.totalorder %s46, %s60
    %p62 = scmp.eq.s32.totalorder %s15, 0
    %p63 = por %p61, %p62
    %s65 = sadd.s32 %s64, 1
    %p68 = scmp.eq.s32.totalorder %s9, 1
    %p69 = scmp.ne.s32.totalorder %s64, %s66
    %p70 = scmp.eq.s32.totalorder %s9, 0
    %p71 = por %p69, %p70
    %p72 = scmp.ne.s32.totalorder %s64, %s66
    %p73 = scmp.eq.s32.totalorder %s14, 1
    %p74 = por %p72, %p73
    %p75 = scmp.ne.s32.totalorder %s66, %s67
    %p76 = scmp.eq.s32.totalorder %s14, 0
    %p77 = por %p75, %p76
    %p78 = scmp.ne.s32.totalorder %s66, %s67
    %p79 = scmp.eq.s32.totalorder %s15, 1
    %p80 = por %p78, %p79
    %p82 = scmp.ne.s32.totalorder %s67, %s81
    %p83 = scmp.eq.s32.totalorder %s15, 0
    %p84 = por %p82, %p83
    %s85 = ssub.s32 %s9, %s16
    %p86 = scmp.eq.s32.totalorder %s85, 0
    %s88 = sadd.s32 %s87, 1
    %s89 = scalar_select %p86, %s87, %s88
    %p92 = pneg %p86
    %p93 = scmp.eq.s32.totalorder %s9, 1
    %p94 = por %p92, %p93
    %p95 = scmp.ne.s32.totalorder %s87, %s90
    %p96 = scmp.eq.s32.totalorder %s9, 0
    %p97 = por %p95, %p96
    %p98 = scmp.ne.s32.totalorder %s87, %s90
    %p99 = scmp.eq.s32.totalorder %s14, 1
    %p100 = por %p98, %p99
    %p101 = scmp.ne.s32.totalorder %s90, %s91
    %p102 = scmp.eq.s32.totalorder %s14, 0
    %p103 = por %p101, %p102
    %p104 = scmp.ne.s32.totalorder %s90, %s91
    %p105 = scmp.eq.s32.totalorder %s15, 1
    %p106 = por %p104, %p105
    %p108 = scmp.ne.s32.totalorder %s91, %s107
    %p109 = scmp.eq.s32.totalorder %s15, 0
    %p110 = por %p108, %p109
    %p111 = scmp.le.s32.totalorder 1, %s9
    %p112 = scmp.lt.s32.totalorder %s9, 3
    %p113 = pnand %p111, %p112
    %p114 = pneg %p113
    // Predicated region
    $region9: #{resnet_forward.16} parent=5 // pred_check
      _
    $region10: #{resnet_forward.16} parent=5 // pred_check_branch
      %116 = sbr.rel (%p113) target = $region12
    $region11: #{resnet_forward.16} parent=5 // pred_region
      %s117 = ssub.s32 %s9, 1
      // Predicated region
      $region13: #{resnet_forward.16} parent=11 // pred_check
        %p118 = pneg %p56
      $region14: #{resnet_forward.16} parent=11 // pred_check_branch
        %120 = sbr.rel (%p118) target = $region16
      $region15: #{resnet_forward.16} parent=11 // pred_region
        _
      $region16: #{resnet_forward.16} parent=11 // pred_fallthru
        _
      // Predicated region
      $region17: #{resnet_forward.16} parent=11 // pred_check
        %p121 = pneg %p77
      $region18: #{resnet_forward.16} parent=11 // pred_check_branch
        %123 = sbr.rel (%p121) target = $region20
      $region19: #{resnet_forward.16} parent=11 // pred_region
        _
      $region20: #{resnet_forward.16} parent=11 // pred_fallthru
        _
    $region12: #{resnet_forward.16} parent=5 // pred_fallthru
      _
    %p124 = scmp.lt.s32.totalorder %s9, 2
    // Predicated region
    $region21: #{resnet_forward.16} parent=5 // pred_check
      %p125 = pneg %p124
    $region22: #{resnet_forward.16} parent=5 // pred_check_branch
      %127 = sbr.rel (%p125) target = $region24
    $region23: #{resnet_forward.16} parent=5 // pred_region
      // Predicated region
      $region25: #{resnet_forward.16} parent=23 // pred_check
        %p128 = pneg %p29
      $region26: #{resnet_forward.16} parent=23 // pred_check_branch
        %130 = sbr.rel (%p128) target = $region28
      $region27: #{resnet_forward.16} parent=23 // pred_region
        %s131 = smul.u32 8, %s9
        %p132 = scmp.lt.s32.totalorder %s131, 15
        %s133 = scalar_select %p132, %s131, 15
        %s134 = smul.addr %s133, 4
        %s135 = scalar_lea.vmem %s0, %s134
        %s136 = smul.u32 8, %s9
      $region28: #{resnet_forward.16} parent=23 // pred_fallthru
        _
    $region24: #{resnet_forward.16} parent=5 // pred_fallthru
      _
    %p137 = scmp.le.s32.totalorder 1, %s9
    %p138 = scmp.lt.s32.totalorder %s9, 3
    %p139 = pnand %p137, %p138
    %p140 = pneg %p139
    // Predicated region
    $region29: #{resnet_forward.16} parent=5 // pred_check
      _
    $region30: #{resnet_forward.16} parent=5 // pred_check_branch
      %142 = sbr.rel (%p139) target = $region32
    $region31: #{resnet_forward.16} parent=5 // pred_region
      %s143 = ssub.s32 %s9, 1
      %s144 = smul.u32 8, %s14
      %p145 = scmp.lt.s32.totalorder %s144, 15
      %s146 = scalar_select %p145, %s144, 15
      %s147 = smul.addr %s146, 4
      %s148 = scalar_lea.vmem %s0, %s147
      %p149 = pneg %p35
      %p150 = pneg %p32
      %p151 = pneg %p56
      %p152 = pneg %p53
      %p153 = pneg %p77
      %p154 = pneg %p74
      %p155 = pneg %p103
      %p156 = pneg %p100
      %s157 = smul.u32 8, %s14
      %p158 = scmp.lt.s32.totalorder %s157, 15
      %s159 = scalar_select %p158, %s157, 15
      %s160 = smul.addr %s159, 4
      %s161 = scalar_lea.vmem %s3, %s160
      %s162 = smul.u32 8, %s14
      %p163 = scmp.lt.s32.totalorder %s162, 15
      %s164 = scalar_select %p163, %s162, 15
      %s165 = smul.addr %s164, 4
      %s166 = scalar_lea.vmem %s0, %s165
      %s167 = smul.u32 8, %s14
      %s168 = smul.u32 8, %s14
      %p169 = scmp.lt.s32.totalorder %s168, 15
      %s170 = scalar_select %p169, %s168, 15
      %s171 = smul.addr %s170, 4
      %s172 = scalar_lea.vmem %s3, %s171
      %s173 = smul.u32 8, %s14
      %v175 = vld [vmem:[%s166] sm:$0xf]
      %v176 = vld [vmem:[%s166 + $0x4] sm:$0xf]
      %v177 = vld [vmem:[%s166 + $0x8] sm:$0xf]
      %v178 = vld [vmem:[%s166 + $0xc] sm:$0xf]
      %v179 = vld [vmem:[%s166 + $0x10] sm:$0xf]
      %v180 = vld [vmem:[%s166 + $0x14] sm:$0xf]
      %v181 = vld [vmem:[%s166 + $0x18] sm:$0xf]
      %v182 = vld [vmem:[%s166 + $0x1c] sm:$0xf]
      %v183 = vld [vmem:[%s1] sm:$0xf]
      %v184 = vld [vmem:[%s2] sm:$0x1]
      %v186 = vlaneseq
      %v187 = vshrl.u32 %v186, 7
      %v188 = vsub.s32 0, %v187
      %v189 = vrot.slane %v184, %v188
      %v199 = vunpack.c.l.b16 %v175
      %v200 = vunpack.c.l.b16 %v176
      %v201 = vunpack.c.l.b16 %v177
      %v202 = vunpack.c.l.b16 %v178
      %v203 = vunpack.c.l.b16 %v179
      %v204 = vunpack.c.l.b16 %v180
      %v205 = vunpack.c.l.b16 %v181
      %v206 = vunpack.c.l.b16 %v182
      %v207 = vpack.c.b16 %v200, %v199
      %v208 = vpack.c.b16 %v202, %v201
      %v209 = vpack.c.b16 %v204, %v203
      %v210 = vpack.c.b16 %v206, %v205
      %vm211 = vcmask 64512
      %v213 = vsel %vm211, %v207, 0
      %v216 = vsel %vm211, %v208, 0
      %v219 = vsel %vm211, %v209, 0
      %v222 = vsel %vm211, %v210, 0
      %vm224 = vcmask 1043456
      %v226 = vsel %vm224, %v183, 0
      %228 = vmatprep.subr.bf16.mxu0 0
      %229 = vmatpush1.bf16.msra.mxu0 0
      %230 = vmatprep.subr.bf16.mxu0 0
      %231 = vmatpush1.bf16.msra.mxu0 0
      %232 = vmatprep.subr.bf16.mxu0 0
      %233 = vmatpush1.bf16.msra.mxu0 0
      %234 = vmatprep.subr.bf16.mxu0 0
      %235 = vmatpush1.bf16.msra.mxu0 0
      %236 = vmatprep.subr.bf16.mxu0 0
      %237 = vmatpush1.bf16.msra.mxu0 0
      %238 = vmatprep.subr.bf16.mxu0 0
      %239 = vmatpush1.bf16.msra.mxu0 0
      %240 = vmatprep.subr.bf16.mxu0 0
      %241 = vmatpush1.bf16.msra.mxu0 0
      %242 = vmatprep.subr.bf16.mxu0 0
      %243 = vmatpush1.bf16.msra.mxu0 %v226
      %244 = vmatprep.subr.bf16.mxu0 0
      %245 = vmatpush2.bf16.msra.mxu0 0
      %246 = vmatprep.subr.bf16.mxu0 0
      %247 = vmatpush2.bf16.msra.mxu0 0
      %248 = vmatprep.subr.bf16.mxu0 0
      %249 = vmatpush2.bf16.msra.mxu0 0
      %250 = vmatprep.subr.bf16.mxu0 0
      %251 = vmatpush2.bf16.msra.mxu0 0
      %252 = vmatprep.subr.bf16.mxu0 0
      %253 = vmatpush2.bf16.msra.mxu0 0
      %254 = vmatprep.subr.bf16.mxu0 0
      %255 = vmatpush2.bf16.msra.mxu0 0
      %256 = vmatprep.subr.bf16.mxu0 0
      %257 = vmatpush2.bf16.msra.mxu0 0
      %258 = vmatprep.subr.bf16.mxu0 0
      %259 = vmatpush2.bf16.msra.mxu0 0
      %260 = vmatprep.mubr.bf16.mxu0 0
      %261 = vmatmul.mubr.bf16.gmra.mxu0 %v213
      %v262 = vpop.f32.mrf.mxu0
      %v263 = vadd.f32 %v189, %v262
      %v264 = vpop.f32.mrf.mxu0
      %v265 = vpop.f32.mrf.mxu0
      %v266 = vadd.f32 %v189, %v265
      %v267 = vpop.f32.mrf.mxu0
      %268 = vmatprep.mubr.bf16.mxu0 0
      %269 = vmatmul.mubr.bf16.gmra.mxu0 %v216
      %v270 = vpop.f32.mrf.mxu0
      %v271 = vadd.f32 %v189, %v270
      %v272 = vpop.f32.mrf.mxu0
      %v273 = vpop.f32.mrf.mxu0
      %v274 = vadd.f32 %v189, %v273
      %v275 = vpop.f32.mrf.mxu0
      %276 = vmatprep.mubr.bf16.mxu0 0
      %277 = vmatmul.mubr.bf16.gmra.mxu0 %v219
      %v278 = vpop.f32.mrf.mxu0
      %v279 = vadd.f32 %v189, %v278
      %v280 = vpop.f32.mrf.mxu0
      %v281 = vpop.f32.mrf.mxu0
      %v282 = vadd.f32 %v189, %v281
      %v283 = vpop.f32.mrf.mxu0
      %284 = vmatprep.mubr.bf16.mxu0 0
      %285 = vmatmul.mubr.bf16.gmra.mxu0 %v222
      %v286 = vpop.f32.mrf.mxu0
      %v287 = vadd.f32 %v189, %v286
      %v288 = vpop.f32.mrf.mxu0
      %v289 = vpop.f32.mrf.mxu0
      %v290 = vadd.f32 %v189, %v289
      %v291 = vpop.f32.mrf.mxu0
      %292 = vdwg.mxu0
      %v293 = vpack.c.bf16 %v266, %v263
      %v294 = vpack.c.bf16 %v274, %v271
      %v295 = vpack.c.bf16 %v282, %v279
      %v296 = vpack.c.bf16 %v290, %v287
      %v301 = vunpack.c.l.b16 %v293
      %v302 = vunpack.c.h.b16 %v293
      %v303 = vunpack.c.l.b16 %v294
      %v304 = vunpack.c.h.b16 %v294
      %v305 = vunpack.c.l.b16 %v295
      %v306 = vunpack.c.h.b16 %v295
      %v307 = vunpack.c.l.b16 %v296
      %v308 = vunpack.c.h.b16 %v296
      %v309 = vpack.c.b16 %v301, %v301
      %v310 = vpack.c.b16 %v302, %v302
      %v311 = vpack.c.b16 %v303, %v303
      %v312 = vpack.c.b16 %v304, %v304
      %v313 = vpack.c.b16 %v305, %v305
      %v314 = vpack.c.b16 %v306, %v306
      %v315 = vpack.c.b16 %v307, %v307
      %v316 = vpack.c.b16 %v308, %v308
      %325 = vst [vmem:[%s172] sm:$0xf] %v309
      %326 = vst [vmem:[%s172 + $0x4] sm:$0xf] %v310
      %327 = vst [vmem:[%s172 + $0x8] sm:$0xf] %v311
      %328 = vst [vmem:[%s172 + $0xc] sm:$0xf] %v312
      %329 = vst [vmem:[%s172 + $0x10] sm:$0xf] %v313
      %330 = vst [vmem:[%s172 + $0x14] sm:$0xf] %v314
      %331 = vst [vmem:[%s172 + $0x18] sm:$0xf] %v315
      %332 = vst [vmem:[%s172 + $0x1c] sm:$0xf] %v316
      %s333 = smul.u32 8, %s14
      %p334 = scmp.lt.s32.totalorder %s333, 15
      %s335 = scalar_select %p334, %s333, 15
      %s336 = smul.addr %s335, 4
      %s337 = scalar_lea.vmem %s3, %s336
      // Predicated region
      $region33: #{resnet_forward.16} parent=31 // pred_check
        %p338 = pneg %p100
      $region34: #{resnet_forward.16} parent=31 // pred_check_branch
        %340 = sbr.rel (%p338) target = $region36
      $region35: #{resnet_forward.16} parent=31 // pred_region
        %s341 = smul.u32 8, %s14
      $region36: #{resnet_forward.16} parent=31 // pred_fallthru
        _
    $region32: #{resnet_forward.16} parent=5 // pred_fallthru
      _
    %p342 = scmp.le.s32.totalorder 2, %s9
    // Predicated region
    $region37: #{resnet_forward.16} parent=5 // pred_check
      %p343 = pneg %p342
    $region38: #{resnet_forward.16} parent=5 // pred_check_branch
      %345 = sbr.rel (%p343) target = $region40
    $region39: #{resnet_forward.16} parent=5 // pred_region
      %s346 = ssub.s32 %s9, 2
      // Predicated region
      $region41: #{resnet_forward.16} parent=39 // pred_check
        %p347 = pneg %p106
      $region42: #{resnet_forward.16} parent=39 // pred_check_branch
        %349 = sbr.rel (%p347) target = $region44
      $region43: #{resnet_forward.16} parent=39 // pred_region
        %s350 = smul.u32 8, %s15
        %p351 = scmp.lt.s32.totalorder %s350, 15
        %s352 = scalar_select %p351, %s350, 15
        %s353 = smul.addr %s352, 4
        %s354 = scalar_lea.vmem %s3, %s353
      $region44: #{resnet_forward.16} parent=39 // pred_fallthru
        _
    $region40: #{resnet_forward.16} parent=5 // pred_fallthru
      _
  $region6: #{resnet_forward.16} parent=0 // loop_footer
    %s13 = sadd.s32 1, %s9
  $region7: #{resnet_forward.16} parent=0 // loop_footer_branch
    %8 = sbr.rel target = $region3
  $region8: #{resnet_forward.16} parent=0 // loop_exit
    _

// kernel: resnet_forward.18
$region0: #{resnet_forward.18}
  #allocation0 [shape = 'u32[]', space=smem, size = 0x4, offset = 0x4, fixed_abs, tag = 'smem constant byte address 0x4 - core index']
  #allocation1 [shape = 'u32[144,128]{1,0:T(1,128)}', space=vmem, size = 0x12000, scoped, tag = 'internal scratch']
  %s0 = inlined_call_operand.vmem [shape: bf16[128,144], index: 0, kind: input, shape index: {}]
  %s1 = inlined_call_operand.vmem [shape: bf16[144,128], index: 1, kind: input, shape index: {}]
  %s2 = inlined_call_operand.vmem [shape: f32[1,128], index: 2, kind: input, shape index: {}]
  %s3 = inlined_call_operand.vmem [shape: bf16[128,128], index: 3, kind: input, shape index: {}]
  %s4 = inlined_call_operand.vmem [shape: bf16[128,128], index: 4, kind: output, shape index: {}]
  %s5 = sld [smem:[#allocation0]]
  $region49: #{resnet_forward.18} parent=0
    _
  %s7 = ssub.s32 1, %s5
  %s8 = scalar_select 0, %s7, %s5
  loop: start=0, step=1, limit=4
  $region2: #{resnet_forward.18} parent=0 // loop_pre_header
    _
  $region3: #{resnet_forward.18} parent=0 // loop_header
    %s10 = sphi 0, %s14
    %p11 = scmp.ge.s32.totalorder %s10, 4
    %s20 = sphi 0, %s22
    %s23 = sphi 0, %s20
    %s24 = sphi 0, %s23
    %s40 = sphi 0, %s24
    %s44 = sphi 0, %s44
    %s46 = sphi 0, %s44
    %s47 = sphi 0, %s46
    %s61 = sphi 0, %s47
    %s65 = sphi 0, %s65
    %s67 = sphi 0, %s65
    %s68 = sphi 0, %s67
    %s82 = sphi 0, %s68
    %s88 = sphi 0, %s90
    %s91 = sphi 0, %s88
    %s92 = sphi 0, %s91
    %s108 = sphi 0, %s92
    %s114 = sphi 0, %s116
    %s117 = sphi 0, %s114
    %s118 = sphi 0, %s117
    %s134 = sphi 0, %s118
  $region4: #{resnet_forward.18} parent=0 // loop_header_branch
    %13 = sbr.rel (%p11) target = $region8
  $region5: #{resnet_forward.18} parent=0 // loop_body
    %s15 = ssub.s32 %s10, 1
    %s16 = ssub.s32 %s10, 2
    %s17 = sadd.s32 %s10, 1
    %s18 = ssub.s32 %s10, %s17
    %p19 = scmp.eq.s32.totalorder %s18, 0
    %s21 = sadd.s32 %s20, 1
    %s22 = scalar_select %p19, %s20, %s21
    %p25 = pneg %p19
    %p26 = scmp.eq.s32.totalorder %s10, 1
    %p27 = por %p25, %p26
    %p28 = scmp.ne.s32.totalorder %s20, %s23
    %p29 = scmp.eq.s32.totalorder %s10, 0
    %p30 = por %p28, %p29
    %p31 = scmp.ne.s32.totalorder %s20, %s23
    %p32 = scmp.eq.s32.totalorder %s15, 1
    %p33 = por %p31, %p32
    %p34 = scmp.ne.s32.totalorder %s23, %s24
    %p35 = scmp.eq.s32.totalorder %s15, 0
    %p36 = por %p34, %p35
    %p37 = scmp.ne.s32.totalorder %s23, %s24
    %p38 = scmp.eq.s32.totalorder %s16, 1
    %p39 = por %p37, %p38
    %p41 = scmp.ne.s32.totalorder %s24, %s40
    %p42 = scmp.eq.s32.totalorder %s16, 0
    %p43 = por %p41, %p42
    %s45 = sadd.s32 %s44, 1
    %p48 = scmp.eq.s32.totalorder %s10, 1
    %p49 = scmp.ne.s32.totalorder %s44, %s46
    %p50 = scmp.eq.s32.totalorder %s10, 0
    %p51 = por %p49, %p50
    %p52 = scmp.ne.s32.totalorder %s44, %s46
    %p53 = scmp.eq.s32.totalorder %s15, 1
    %p54 = por %p52, %p53
    %p55 = scmp.ne.s32.totalorder %s46, %s47
    %p56 = scmp.eq.s32.totalorder %s15, 0
    %p57 = por %p55, %p56
    %p58 = scmp.ne.s32.totalorder %s46, %s47
    %p59 = scmp.eq.s32.totalorder %s16, 1
    %p60 = por %p58, %p59
    %p62 = scmp.ne.s32.totalorder %s47, %s61
    %p63 = scmp.eq.s32.totalorder %s16, 0
    %p64 = por %p62, %p63
    %s66 = sadd.s32 %s65, 1
    %p69 = scmp.eq.s32.totalorder %s10, 1
    %p70 = scmp.ne.s32.totalorder %s65, %s67
    %p71 = scmp.eq.s32.totalorder %s10, 0
    %p72 = por %p70, %p71
    %p73 = scmp.ne.s32.totalorder %s65, %s67
    %p74 = scmp.eq.s32.totalorder %s15, 1
    %p75 = por %p73, %p74
    %p76 = scmp.ne.s32.totalorder %s67, %s68
    %p77 = scmp.eq.s32.totalorder %s15, 0
    %p78 = por %p76, %p77
    %p79 = scmp.ne.s32.totalorder %s67, %s68
    %p80 = scmp.eq.s32.totalorder %s16, 1
    %p81 = por %p79, %p80
    %p83 = scmp.ne.s32.totalorder %s68, %s82
    %p84 = scmp.eq.s32.totalorder %s16, 0
    %p85 = por %p83, %p84
    %s86 = ssub.s32 %s10, %s17
    %p87 = scmp.eq.s32.totalorder %s86, 0
    %s89 = sadd.s32 %s88, 1
    %s90 = scalar_select %p87, %s88, %s89
    %p93 = pneg %p87
    %p94 = scmp.eq.s32.totalorder %s10, 1
    %p95 = por %p93, %p94
    %p96 = scmp.ne.s32.totalorder %s88, %s91
    %p97 = scmp.eq.s32.totalorder %s10, 0
    %p98 = por %p96, %p97
    %p99 = scmp.ne.s32.totalorder %s88, %s91
    %p100 = scmp.eq.s32.totalorder %s15, 1
    %p101 = por %p99, %p100
    %p102 = scmp.ne.s32.totalorder %s91, %s92
    %p103 = scmp.eq.s32.totalorder %s15, 0
    %p104 = por %p102, %p103
    %p105 = scmp.ne.s32.totalorder %s91, %s92
    %p106 = scmp.eq.s32.totalorder %s16, 1
    %p107 = por %p105, %p106
    %p109 = scmp.ne.s32.totalorder %s92, %s108
    %p110 = scmp.eq.s32.totalorder %s16, 0
    %p111 = por %p109, %p110
    %s112 = ssub.s32 %s10, %s17
    %p113 = scmp.eq.s32.totalorder %s112, 0
    %s115 = sadd.s32 %s114, 1
    %s116 = scalar_select %p113, %s114, %s115
    %p119 = pneg %p113
    %p120 = scmp.eq.s32.totalorder %s10, 1
    %p121 = por %p119, %p120
    %p122 = scmp.ne.s32.totalorder %s114, %s117
    %p123 = scmp.eq.s32.totalorder %s10, 0
    %p124 = por %p122, %p123
    %p125 = scmp.ne.s32.totalorder %s114, %s117
    %p126 = scmp.eq.s32.totalorder %s15, 1
    %p127 = por %p125, %p126
    %p128 = scmp.ne.s32.totalorder %s117, %s118
    %p129 = scmp.eq.s32.totalorder %s15, 0
    %p130 = por %p128, %p129
    %p131 = scmp.ne.s32.totalorder %s117, %s118
    %p132 = scmp.eq.s32.totalorder %s16, 1
    %p133 = por %p131, %p132
    %p135 = scmp.ne.s32.totalorder %s118, %s134
    %p136 = scmp.eq.s32.totalorder %s16, 0
    %p137 = por %p135, %p136
    %p138 = scmp.le.s32.totalorder 1, %s10
    %p139 = scmp.lt.s32.totalorder %s10, 3
    %p140 = pnand %p138, %p139
    %p141 = pneg %p140
    // Predicated region
    $region9: #{resnet_forward.18} parent=5 // pred_check
      _
    $region10: #{resnet_forward.18} parent=5 // pred_check_branch
      %143 = sbr.rel (%p140) target = $region12
    $region11: #{resnet_forward.18} parent=5 // pred_region
      %s144 = ssub.s32 %s10, 1
      // Predicated region
      $region13: #{resnet_forward.18} parent=11 // pred_check
        %p145 = pneg %p57
      $region14: #{resnet_forward.18} parent=11 // pred_check_branch
        %147 = sbr.rel (%p145) target = $region16
      $region15: #{resnet_forward.18} parent=11 // pred_region
        _
      $region16: #{resnet_forward.18} parent=11 // pred_fallthru
        _
      // Predicated region
      $region17: #{resnet_forward.18} parent=11 // pred_check
        %p148 = pneg %p78
      $region18: #{resnet_forward.18} parent=11 // pred_check_branch
        %150 = sbr.rel (%p148) target = $region20
      $region19: #{resnet_forward.18} parent=11 // pred_region
        _
      $region20: #{resnet_forward.18} parent=11 // pred_fallthru
        _
    $region12: #{resnet_forward.18} parent=5 // pred_fallthru
      _
    %p151 = scmp.lt.s32.totalorder %s10, 2
    // Predicated region
    $region21: #{resnet_forward.18} parent=5 // pred_check
      %p152 = pneg %p151
    $region22: #{resnet_forward.18} parent=5 // pred_check_branch
      %154 = sbr.rel (%p152) target = $region24
    $region23: #{resnet_forward.18} parent=5 // pred_region
      // Predicated region
      $region25: #{resnet_forward.18} parent=23 // pred_check
        %p155 = pneg %p30
      $region26: #{resnet_forward.18} parent=23 // pred_check_branch
        %157 = sbr.rel (%p155) target = $region28
      $region27: #{resnet_forward.18} parent=23 // pred_region
        %s158 = smul.u32 8, %s10
        %p159 = scmp.lt.s32.totalorder %s158, 15
        %s160 = scalar_select %p159, %s158, 15
        %s161 = smul.addr %s160, 2
        %s162 = smul.addr %s161, 4
        %s163 = scalar_lea.vmem %s0, %s162
        %s164 = smul.u32 8, %s10
      $region28: #{resnet_forward.18} parent=23 // pred_fallthru
        _
      // Predicated region
      $region29: #{resnet_forward.18} parent=23 // pred_check
        %p165 = pneg %p98
      $region30: #{resnet_forward.18} parent=23 // pred_check_branch
        %167 = sbr.rel (%p165) target = $region32
      $region31: #{resnet_forward.18} parent=23 // pred_region
        %s168 = smul.u32 8, %s10
        %p169 = scmp.lt.s32.totalorder %s168, 15
        %s170 = scalar_select %p169, %s168, 15
        %s171 = smul.addr %s170, 4
        %s172 = scalar_lea.vmem %s3, %s171
        %s173 = smul.u32 8, %s10
      $region32: #{resnet_forward.18} parent=23 // pred_fallthru
        _
    $region24: #{resnet_forward.18} parent=5 // pred_fallthru
      _
    %p174 = scmp.le.s32.totalorder 1, %s10
    %p175 = scmp.lt.s32.totalorder %s10, 3
    %p176 = pnand %p174, %p175
    %p177 = pneg %p176
    // Predicated region
    $region33: #{resnet_forward.18} parent=5 // pred_check
      _
    $region34: #{resnet_forward.18} parent=5 // pred_check_branch
      %179 = sbr.rel (%p176) target = $region36
    $region35: #{resnet_forward.18} parent=5 // pred_region
      %s180 = ssub.s32 %s10, 1
      %s181 = smul.u32 8, %s15
      %p182 = scmp.lt.s32.totalorder %s181, 15
      %s183 = scalar_select %p182, %s181, 15
      %s184 = smul.addr %s183, 2
      %s185 = smul.addr %s184, 4
      %s186 = scalar_lea.vmem %s0, %s185
      %p187 = pneg %p36
      %p188 = pneg %p33
      %p189 = pneg %p57
      %p190 = pneg %p54
      %p191 = pneg %p78
      %p192 = pneg %p75
      %s193 = smul.u32 8, %s15
      %p194 = scmp.lt.s32.totalorder %s193, 15
      %s195 = scalar_select %p194, %s193, 15
      %s196 = smul.addr %s195, 4
      %s197 = scalar_lea.vmem %s3, %s196
      %p198 = pneg %p104
      %p199 = pneg %p101
      %p200 = pneg %p130
      %p201 = pneg %p127
      %s202 = smul.u32 8, %s15
      %p203 = scmp.lt.s32.totalorder %s202, 15
      %s204 = scalar_select %p203, %s202, 15
      %s205 = smul.addr %s204, 4
      %s206 = scalar_lea.vmem %s4, %s205
      %s207 = smul.u32 8, %s15
      %p208 = scmp.lt.s32.totalorder %s207, 15
      %s209 = scalar_select %p208, %s207, 15
      %s210 = smul.addr %s209, 2
      %s211 = smul.addr %s210, 4
      %s212 = scalar_lea.vmem %s0, %s211
      %s213 = smul.u32 8, %s15
      %s214 = smul.u32 8, %s15
      %p215 = scmp.lt.s32.totalorder %s214, 15
      %s216 = scalar_select %p215, %s214, 15
      %s217 = smul.addr %s216, 4
      %s218 = scalar_lea.vmem %s3, %s217
      %s219 = smul.u32 8, %s15
      %s220 = smul.u32 8, %s15
      %p221 = scmp.lt.s32.totalorder %s220, 15
      %s222 = scalar_select %p221, %s220, 15
      %s223 = smul.addr %s222, 4
      %s224 = scalar_lea.vmem %s4, %s223
      %s225 = smul.u32 8, %s15
      %v227 = vld [vmem:[%s212] sm:$0xff]
      %v228 = vld [vmem:[%s212 + $0x8] sm:$0xff]
      %v229 = vld [vmem:[%s212 + $0x10] sm:$0xff]
      %v230 = vld [vmem:[%s212 + $0x18] sm:$0xff]
      %v231 = vld [vmem:[%s212 + $0x20] sm:$0xff]
      %v232 = vld [vmem:[%s212 + $0x28] sm:$0xff]
      %v233 = vld [vmem:[%s212 + $0x30] sm:$0xff]
      %v234 = vld [vmem:[%s212 + $0x38] sm:$0xff]
      %v235 = vld [vmem:[%s1] sm:$0xf]
      %v236 = vld [vmem:[%s1 + $0x4] sm:$0xf]
      %v237 = vld [vmem:[%s1 + $0x8] sm:$0xf]
      %v238 = vld [vmem:[%s1 + $0xc] sm:$0xf]
      %v239 = vld [vmem:[%s1 + $0x10] sm:$0xf]
      %v240 = vld [vmem:[%s1 + $0x14] sm:$0xf]
      %v241 = vld [vmem:[%s1 + $0x18] sm:$0xf]
      %v242 = vld [vmem:[%s1 + $0x1c] sm:$0xf]
      %v243 = vld [vmem:[%s1 + $0x20] sm:$0xf]
      %v244 = vld [vmem:[%s1 + $0x24] sm:$0xf]
      %v245 = vld [vmem:[%s1 + $0x28] sm:$0xf]
      %v246 = vld [vmem:[%s1 + $0x2c] sm:$0xf]
      %v247 = vld [vmem:[%s1 + $0x30] sm:$0xf]
      %v248 = vld [vmem:[%s1 + $0x34] sm:$0xf]
      %v249 = vld [vmem:[%s1 + $0x38] sm:$0xf]
      %v250 = vld [vmem:[%s1 + $0x3c] sm:$0xf]
      %v251 = vld [vmem:[%s1 + $0x40] sm:$0xf]
      %v252 = vld [vmem:[%s1 + $0x44] sm:$0xf]
      %v253 = vld [vmem:[%s2] sm:$0x1]
      %v255 = vlaneseq
      %v256 = vshrl.u32 %v255, 7
      %v257 = vsub.s32 0, %v256
      %v258 = vrot.slane %v253, %v257
      %v268 = vunpack.c.l.b16 %v227
      %v269 = vunpack.c.h.b16 %v227
      %v270 = vunpack.c.l.b16 %v228
      %v271 = vunpack.c.h.b16 %v228
      %v272 = vunpack.c.l.b16 %v229
      %v273 = vunpack.c.h.b16 %v229
      %v274 = vunpack.c.l.b16 %v230
      %v275 = vunpack.c.h.b16 %v230
      %v276 = vunpack.c.l.b16 %v231
      %v277 = vunpack.c.h.b16 %v231
      %v278 = vunpack.c.l.b16 %v232
      %v279 = vunpack.c.h.b16 %v232
      %v280 = vunpack.c.l.b16 %v233
      %v281 = vunpack.c.h.b16 %v233
      %v282 = vunpack.c.l.b16 %v234
      %v283 = vunpack.c.h.b16 %v234
      %v284 = vpack.c.b16 %v270, %v268
      %v285 = vpack.c.b16 %v271, %v269
      %v286 = vpack.c.b16 %v274, %v272
      %v287 = vpack.c.b16 %v275, %v273
      %v288 = vpack.c.b16 %v278, %v276
      %v289 = vpack.c.b16 %v279, %v277
      %v290 = vpack.c.b16 %v282, %v280
      %v291 = vpack.c.b16 %v283, %v281
      %v314 = vunpack.c.l.b16 %v235
      %v315 = vunpack.c.l.b16 %v236
      %v316 = vunpack.c.l.b16 %v237
      %v317 = vunpack.c.l.b16 %v238
      %v318 = vunpack.c.l.b16 %v239
      %v319 = vunpack.c.l.b16 %v240
      %v320 = vunpack.c.l.b16 %v241
      %v321 = vunpack.c.l.b16 %v242
      %v322 = vunpack.c.l.b16 %v243
      %v323 = vunpack.c.l.b16 %v244
      %v324 = vunpack.c.l.b16 %v245
      %v325 = vunpack.c.l.b16 %v246
      %v326 = vunpack.c.l.b16 %v247
      %v327 = vunpack.c.l.b16 %v248
      %v328 = vunpack.c.l.b16 %v249
      %v329 = vunpack.c.l.b16 %v250
      %v330 = vunpack.c.l.b16 %v251
      %v331 = vunpack.c.l.b16 %v252
      %v332 = vpack.c.b16 %v315, %v314
      %v333 = vpack.c.b16 %v317, %v316
      %v334 = vpack.c.b16 %v319, %v318
      %v335 = vpack.c.b16 %v321, %v320
      %v336 = vpack.c.b16 %v323, %v322
      %v337 = vpack.c.b16 %v325, %v324
      %v338 = vpack.c.b16 %v327, %v326
      %v339 = vpack.c.b16 %v329, %v328
      %v340 = vpack.c.b16 %v331, %v330
      %vm350 = vcmask 130048
      %v352 = vsel %vm350, %v285, 0
      %v355 = vsel %vm350, %v287, 0
      %v358 = vsel %vm350, %v289, 0
      %v361 = vsel %vm350, %v291, 0
      %363 = vmatprep.subr.bf16.mxu0 0
      %364 = vmatpush1.bf16.msra.mxu0 %v339
      %365 = vmatprep.subr.bf16.mxu0 0
      %366 = vmatpush1.bf16.msra.mxu0 %v338
      %367 = vmatprep.subr.bf16.mxu0 0
      %368 = vmatpush1.bf16.msra.mxu0 %v337
      %369 = vmatprep.subr.bf16.mxu0 0
      %370 = vmatpush1.bf16.msra.mxu0 %v336
      %371 = vmatprep.subr.bf16.mxu0 0
      %372 = vmatpush1.bf16.msra.mxu0 %v335
      %373 = vmatprep.subr.bf16.mxu0 0
      %374 = vmatpush1.bf16.msra.mxu0 %v334
      %375 = vmatprep.subr.bf16.mxu0 0
      %376 = vmatpush1.bf16.msra.mxu0 %v333
      %377 = vmatprep.subr.bf16.mxu0 0
      %378 = vmatpush1.bf16.msra.mxu0 %v332
      %379 = vmatprep.subr.bf16.mxu0 0
      %380 = vmatpush2.bf16.msra.mxu0 0
      %381 = vmatprep.subr.bf16.mxu0 0
      %382 = vmatpush2.bf16.msra.mxu0 0
      %383 = vmatprep.subr.bf16.mxu0 0
      %384 = vmatpush2.bf16.msra.mxu0 0
      %385 = vmatprep.subr.bf16.mxu0 0
      %386 = vmatpush2.bf16.msra.mxu0 0
      %387 = vmatprep.subr.bf16.mxu0 0
      %388 = vmatpush2.bf16.msra.mxu0 0
      %389 = vmatprep.subr.bf16.mxu0 0
      %390 = vmatpush2.bf16.msra.mxu0 0
      %391 = vmatprep.subr.bf16.mxu0 0
      %392 = vmatpush2.bf16.msra.mxu0 0
      %393 = vmatprep.subr.bf16.mxu0 0
      %394 = vmatpush2.bf16.msra.mxu0 %v340
      %395 = vmatprep.mubr.bf16.mxu0 %v352
      %396 = vmatmul.mubr.bf16.gmra.mxu0 %v284
      %v397 = vpop.f32.mrf.mxu0
      %v398 = vadd.f32 %v258, %v397
      %v399 = vpop.f32.mrf.mxu0
      %v400 = vpop.f32.mrf.mxu0
      %v401 = vadd.f32 %v258, %v400
      %v402 = vpop.f32.mrf.mxu0
      %403 = vmatprep.mubr.bf16.mxu0 %v355
      %404 = vmatmul.mubr.bf16.gmra.mxu0 %v286
      %v405 = vpop.f32.mrf.mxu0
      %v406 = vadd.f32 %v258, %v405
      %v407 = vpop.f32.mrf.mxu0
      %v408 = vpop.f32.mrf.mxu0
      %v409 = vadd.f32 %v258, %v408
      %v410 = vpop.f32.mrf.mxu0
      %411 = vmatprep.mubr.bf16.mxu0 %v358
      %412 = vmatmul.mubr.bf16.gmra.mxu0 %v288
      %v413 = vpop.f32.mrf.mxu0
      %v414 = vadd.f32 %v258, %v413
      %v415 = vpop.f32.mrf.mxu0
      %v416 = vpop.f32.mrf.mxu0
      %v417 = vadd.f32 %v258, %v416
      %v418 = vpop.f32.mrf.mxu0
      %419 = vmatprep.mubr.bf16.mxu0 %v361
      %420 = vmatmul.mubr.bf16.gmra.mxu0 %v290
      %v421 = vpop.f32.mrf.mxu0
      %v422 = vadd.f32 %v258, %v421
      %v423 = vpop.f32.mrf.mxu0
      %v424 = vpop.f32.mrf.mxu0
      %v425 = vadd.f32 %v258, %v424
      %v426 = vpop.f32.mrf.mxu0
      %427 = vdwg.mxu0
      %v428 = vld [vmem:[%s218] sm:$0xf]
      %v429 = vld [vmem:[%s218 + $0x4] sm:$0xf]
      %v430 = vld [vmem:[%s218 + $0x8] sm:$0xf]
      %v431 = vld [vmem:[%s218 + $0xc] sm:$0xf]
      %v432 = vld [vmem:[%s218 + $0x10] sm:$0xf]
      %v433 = vld [vmem:[%s218 + $0x14] sm:$0xf]
      %v434 = vld [vmem:[%s218 + $0x18] sm:$0xf]
      %v435 = vld [vmem:[%s218 + $0x1c] sm:$0xf]
      %v436 = vunpack.c.l.bf16 %v428
      %v437 = vunpack.c.l.bf16 %v429
      %v438 = vunpack.c.l.bf16 %v430
      %v439 = vunpack.c.l.bf16 %v431
      %v440 = vunpack.c.l.bf16 %v432
      %v441 = vunpack.c.l.bf16 %v433
      %v442 = vunpack.c.l.bf16 %v434
      %v443 = vunpack.c.l.bf16 %v435
      %v444 = vadd.f32 %v398, %v436
      %v445 = vadd.f32 %v401, %v437
      %v446 = vadd.f32 %v406, %v438
      %v447 = vadd.f32 %v409, %v439
      %v448 = vadd.f32 %v414, %v440
      %v449 = vadd.f32 %v417, %v441
      %v450 = vadd.f32 %v422, %v442
      %v451 = vadd.f32 %v425, %v443
      %v452 = vmax.f32 %v444, 0.0
      %v453 = vmax.f32 %v445, 0.0
      %v454 = vmax.f32 %v446, 0.0
      %v455 = vmax.f32 %v447, 0.0
      %v456 = vmax.f32 %v448, 0.0
      %v457 = vmax.f32 %v449, 0.0
      %v458 = vmax.f32 %v450, 0.0
      %v459 = vmax.f32 %v451, 0.0
      %v460 = vpack.c.bf16 %v453, %v452
      %v461 = vpack.c.bf16 %v455, %v454
      %v462 = vpack.c.bf16 %v457, %v456
      %v463 = vpack.c.bf16 %v459, %v458
      %v468 = vunpack.c.l.b16 %v460
      %v469 = vunpack.c.h.b16 %v460
      %v470 = vunpack.c.l.b16 %v461
      %v471 = vunpack.c.h.b16 %v461
      %v472 = vunpack.c.l.b16 %v462
      %v473 = vunpack.c.h.b16 %v462
      %v474 = vunpack.c.l.b16 %v463
      %v475 = vunpack.c.h.b16 %v463
      %v476 = vpack.c.b16 %v468, %v468
      %v477 = vpack.c.b16 %v469, %v469
      %v478 = vpack.c.b16 %v470, %v470
      %v479 = vpack.c.b16 %v471, %v471
      %v480 = vpack.c.b16 %v472, %v472
      %v481 = vpack.c.b16 %v473, %v473
      %v482 = vpack.c.b16 %v474, %v474
      %v483 = vpack.c.b16 %v475, %v475
      %492 = vst [vmem:[%s224] sm:$0xf] %v476
      %493 = vst [vmem:[%s224 + $0x4] sm:$0xf] %v477
      %494 = vst [vmem:[%s224 + $0x8] sm:$0xf] %v478
      %495 = vst [vmem:[%s224 + $0xc] sm:$0xf] %v479
      %496 = vst [vmem:[%s224 + $0x10] sm:$0xf] %v480
      %497 = vst [vmem:[%s224 + $0x14] sm:$0xf] %v481
      %498 = vst [vmem:[%s224 + $0x18] sm:$0xf] %v482
      %499 = vst [vmem:[%s224 + $0x1c] sm:$0xf] %v483
      %s500 = smul.u32 8, %s15
      %p501 = scmp.lt.s32.totalorder %s500, 15
      %s502 = scalar_select %p501, %s500, 15
      %s503 = smul.addr %s502, 4
      %s504 = scalar_lea.vmem %s4, %s503
      // Predicated region
      $region37: #{resnet_forward.18} parent=35 // pred_check
        %p505 = pneg %p127
      $region38: #{resnet_forward.18} parent=35 // pred_check_branch
        %507 = sbr.rel (%p505) target = $region40
      $region39: #{resnet_forward.18} parent=35 // pred_region
        %s508 = smul.u32 8, %s15
      $region40: #{resnet_forward.18} parent=35 // pred_fallthru
        _
    $region36: #{resnet_forward.18} parent=5 // pred_fallthru
      _
    %p509 = scmp.le.s32.totalorder 2, %s10
    // Predicated region
    $region41: #{resnet_forward.18} parent=5 // pred_check
      %p510 = pneg %p509
    $region42: #{resnet_forward.18} parent=5 // pred_check_branch
      %512 = sbr.rel (%p510) target = $region44
    $region43: #{resnet_forward.18} parent=5 // pred_region
      %s513 = ssub.s32 %s10, 2
      // Predicated region
      $region45: #{resnet_forward.18} parent=43 // pred_check
        %p514 = pneg %p133
      $region46: #{resnet_forward.18} parent=43 // pred_check_branch
        %516 = sbr.rel (%p514) target = $region48
      $region47: #{resnet_forward.18} parent=43 // pred_region
        %s517 = smul.u32 8, %s16
        %p518 = scmp.lt.s32.totalorder %s517, 15
        %s519 = scalar_select %p518, %s517, 15
        %s520 = smul.addr %s519, 4
        %s521 = scalar_lea.vmem %s4, %s520
      $region48: #{resnet_forward.18} parent=43 // pred_fallthru
        _
    $region44: #{resnet_forward.18} parent=5 // pred_fallthru
      _
  $region6: #{resnet_forward.18} parent=0 // loop_footer
    %s14 = sadd.s32 1, %s10
  $region7: #{resnet_forward.18} parent=0 // loop_footer_branch
    %9 = sbr.rel target = $region3
  $region8: #{resnet_forward.18} parent=0 // loop_exit
    _

// kernel: resnet_forward.20
$region0: #{resnet_forward.20}
  #allocation0 [shape = 'u32[]', space=smem, size = 0x4, offset = 0x4, fixed_abs, tag = 'smem constant byte address 0x4 - core index']
  #allocation1 [shape = 'u32[144,128]{1,0:T(1,128)}', space=vmem, size = 0x12000, scoped, tag = 'internal scratch']
  %s0 = inlined_call_operand.vmem [shape: bf16[128,144], index: 0, kind: input, shape index: {}]
  %s1 = inlined_call_operand.vmem [shape: bf16[144,128], index: 1, kind: input, shape index: {}]
  %s2 = inlined_call_operand.vmem [shape: f32[1,128], index: 2, kind: input, shape index: {}]
  %s3 = inlined_call_operand.vmem [shape: bf16[128,128], index: 3, kind: output, shape index: {}]
  %s4 = sld [smem:[#allocation0]]
  $region45: #{resnet_forward.20} parent=0
    _
  %s6 = ssub.s32 1, %s4
  %s7 = scalar_select 0, %s6, %s4
  loop: start=0, step=1, limit=4
  $region2: #{resnet_forward.20} parent=0 // loop_pre_header
    _
  $region3: #{resnet_forward.20} parent=0 // loop_header
    %s9 = sphi 0, %s13
    %p10 = scmp.ge.s32.totalorder %s9, 4
    %s19 = sphi 0, %s21
    %s22 = sphi 0, %s19
    %s23 = sphi 0, %s22
    %s39 = sphi 0, %s23
    %s43 = sphi 0, %s43
    %s45 = sphi 0, %s43
    %s46 = sphi 0, %s45
    %s60 = sphi 0, %s46
    %s64 = sphi 0, %s64
    %s66 = sphi 0, %s64
    %s67 = sphi 0, %s66
    %s81 = sphi 0, %s67
    %s87 = sphi 0, %s89
    %s90 = sphi 0, %s87
    %s91 = sphi 0, %s90
    %s107 = sphi 0, %s91
  $region4: #{resnet_forward.20} parent=0 // loop_header_branch
    %12 = sbr.rel (%p10) target = $region8
  $region5: #{resnet_forward.20} parent=0 // loop_body
    %s14 = ssub.s32 %s9, 1
    %s15 = ssub.s32 %s9, 2
    %s16 = sadd.s32 %s9, 1
    %s17 = ssub.s32 %s9, %s16
    %p18 = scmp.eq.s32.totalorder %s17, 0
    %s20 = sadd.s32 %s19, 1
    %s21 = scalar_select %p18, %s19, %s20
    %p24 = pneg %p18
    %p25 = scmp.eq.s32.totalorder %s9, 1
    %p26 = por %p24, %p25
    %p27 = scmp.ne.s32.totalorder %s19, %s22
    %p28 = scmp.eq.s32.totalorder %s9, 0
    %p29 = por %p27, %p28
    %p30 = scmp.ne.s32.totalorder %s19, %s22
    %p31 = scmp.eq.s32.totalorder %s14, 1
    %p32 = por %p30, %p31
    %p33 = scmp.ne.s32.totalorder %s22, %s23
    %p34 = scmp.eq.s32.totalorder %s14, 0
    %p35 = por %p33, %p34
    %p36 = scmp.ne.s32.totalorder %s22, %s23
    %p37 = scmp.eq.s32.totalorder %s15, 1
    %p38 = por %p36, %p37
    %p40 = scmp.ne.s32.totalorder %s23, %s39
    %p41 = scmp.eq.s32.totalorder %s15, 0
    %p42 = por %p40, %p41
    %s44 = sadd.s32 %s43, 1
    %p47 = scmp.eq.s32.totalorder %s9, 1
    %p48 = scmp.ne.s32.totalorder %s43, %s45
    %p49 = scmp.eq.s32.totalorder %s9, 0
    %p50 = por %p48, %p49
    %p51 = scmp.ne.s32.totalorder %s43, %s45
    %p52 = scmp.eq.s32.totalorder %s14, 1
    %p53 = por %p51, %p52
    %p54 = scmp.ne.s32.totalorder %s45, %s46
    %p55 = scmp.eq.s32.totalorder %s14, 0
    %p56 = por %p54, %p55
    %p57 = scmp.ne.s32.totalorder %s45, %s46
    %p58 = scmp.eq.s32.totalorder %s15, 1
    %p59 = por %p57, %p58
    %p61 = scmp.ne.s32.totalorder %s46, %s60
    %p62 = scmp.eq.s32.totalorder %s15, 0
    %p63 = por %p61, %p62
    %s65 = sadd.s32 %s64, 1
    %p68 = scmp.eq.s32.totalorder %s9, 1
    %p69 = scmp.ne.s32.totalorder %s64, %s66
    %p70 = scmp.eq.s32.totalorder %s9, 0
    %p71 = por %p69, %p70
    %p72 = scmp.ne.s32.totalorder %s64, %s66
    %p73 = scmp.eq.s32.totalorder %s14, 1
    %p74 = por %p72, %p73
    %p75 = scmp.ne.s32.totalorder %s66, %s67
    %p76 = scmp.eq.s32.totalorder %s14, 0
    %p77 = por %p75, %p76
    %p78 = scmp.ne.s32.totalorder %s66, %s67
    %p79 = scmp.eq.s32.totalorder %s15, 1
    %p80 = por %p78, %p79
    %p82 = scmp.ne.s32.totalorder %s67, %s81
    %p83 = scmp.eq.s32.totalorder %s15, 0
    %p84 = por %p82, %p83
    %s85 = ssub.s32 %s9, %s16
    %p86 = scmp.eq.s32.totalorder %s85, 0
    %s88 = sadd.s32 %s87, 1
    %s89 = scalar_select %p86, %s87, %s88
    %p92 = pneg %p86
    %p93 = scmp.eq.s32.totalorder %s9, 1
    %p94 = por %p92, %p93
    %p95 = scmp.ne.s32.totalorder %s87, %s90
    %p96 = scmp.eq.s32.totalorder %s9, 0
    %p97 = por %p95, %p96
    %p98 = scmp.ne.s32.totalorder %s87, %s90
    %p99 = scmp.eq.s32.totalorder %s14, 1
    %p100 = por %p98, %p99
    %p101 = scmp.ne.s32.totalorder %s90, %s91
    %p102 = scmp.eq.s32.totalorder %s14, 0
    %p103 = por %p101, %p102
    %p104 = scmp.ne.s32.totalorder %s90, %s91
    %p105 = scmp.eq.s32.totalorder %s15, 1
    %p106 = por %p104, %p105
    %p108 = scmp.ne.s32.totalorder %s91, %s107
    %p109 = scmp.eq.s32.totalorder %s15, 0
    %p110 = por %p108, %p109
    %p111 = scmp.le.s32.totalorder 1, %s9
    %p112 = scmp.lt.s32.totalorder %s9, 3
    %p113 = pnand %p111, %p112
    %p114 = pneg %p113
    // Predicated region
    $region9: #{resnet_forward.20} parent=5 // pred_check
      _
    $region10: #{resnet_forward.20} parent=5 // pred_check_branch
      %116 = sbr.rel (%p113) target = $region12
    $region11: #{resnet_forward.20} parent=5 // pred_region
      %s117 = ssub.s32 %s9, 1
      // Predicated region
      $region13: #{resnet_forward.20} parent=11 // pred_check
        %p118 = pneg %p56
      $region14: #{resnet_forward.20} parent=11 // pred_check_branch
        %120 = sbr.rel (%p118) target = $region16
      $region15: #{resnet_forward.20} parent=11 // pred_region
        _
      $region16: #{resnet_forward.20} parent=11 // pred_fallthru
        _
      // Predicated region
      $region17: #{resnet_forward.20} parent=11 // pred_check
        %p121 = pneg %p77
      $region18: #{resnet_forward.20} parent=11 // pred_check_branch
        %123 = sbr.rel (%p121) target = $region20
      $region19: #{resnet_forward.20} parent=11 // pred_region
        _
      $region20: #{resnet_forward.20} parent=11 // pred_fallthru
        _
    $region12: #{resnet_forward.20} parent=5 // pred_fallthru
      _
    %p124 = scmp.lt.s32.totalorder %s9, 2
    // Predicated region
    $region21: #{resnet_forward.20} parent=5 // pred_check
      %p125 = pneg %p124
    $region22: #{resnet_forward.20} parent=5 // pred_check_branch
      %127 = sbr.rel (%p125) target = $region24
    $region23: #{resnet_forward.20} parent=5 // pred_region
      // Predicated region
      $region25: #{resnet_forward.20} parent=23 // pred_check
        %p128 = pneg %p29
      $region26: #{resnet_forward.20} parent=23 // pred_check_branch
        %130 = sbr.rel (%p128) target = $region28
      $region27: #{resnet_forward.20} parent=23 // pred_region
        %s131 = smul.u32 8, %s9
        %p132 = scmp.lt.s32.totalorder %s131, 15
        %s133 = scalar_select %p132, %s131, 15
        %s134 = smul.addr %s133, 2
        %s135 = smul.addr %s134, 4
        %s136 = scalar_lea.vmem %s0, %s135
        %s137 = smul.u32 8, %s9
      $region28: #{resnet_forward.20} parent=23 // pred_fallthru
        _
    $region24: #{resnet_forward.20} parent=5 // pred_fallthru
      _
    %p138 = scmp.le.s32.totalorder 1, %s9
    %p139 = scmp.lt.s32.totalorder %s9, 3
    %p140 = pnand %p138, %p139
    %p141 = pneg %p140
    // Predicated region
    $region29: #{resnet_forward.20} parent=5 // pred_check
      _
    $region30: #{resnet_forward.20} parent=5 // pred_check_branch
      %143 = sbr.rel (%p140) target = $region32
    $region31: #{resnet_forward.20} parent=5 // pred_region
      %s144 = ssub.s32 %s9, 1
      %s145 = smul.u32 8, %s14
      %p146 = scmp.lt.s32.totalorder %s145, 15
      %s147 = scalar_select %p146, %s145, 15
      %s148 = smul.addr %s147, 2
      %s149 = smul.addr %s148, 4
      %s150 = scalar_lea.vmem %s0, %s149
      %p151 = pneg %p35
      %p152 = pneg %p32
      %p153 = pneg %p56
      %p154 = pneg %p53
      %p155 = pneg %p77
      %p156 = pneg %p74
      %p157 = pneg %p103
      %p158 = pneg %p100
      %s159 = smul.u32 8, %s14
      %p160 = scmp.lt.s32.totalorder %s159, 15
      %s161 = scalar_select %p160, %s159, 15
      %s162 = smul.addr %s161, 4
      %s163 = scalar_lea.vmem %s3, %s162
      %s164 = smul.u32 8, %s14
      %p165 = scmp.lt.s32.totalorder %s164, 15
      %s166 = scalar_select %p165, %s164, 15
      %s167 = smul.addr %s166, 2
      %s168 = smul.addr %s167, 4
      %s169 = scalar_lea.vmem %s0, %s168
      %s170 = smul.u32 8, %s14
      %s171 = smul.u32 8, %s14
      %p172 = scmp.lt.s32.totalorder %s171, 15
      %s173 = scalar_select %p172, %s171, 15
      %s174 = smul.addr %s173, 4
      %s175 = scalar_lea.vmem %s3, %s174
      %s176 = smul.u32 8, %s14
      %v178 = vld [vmem:[%s169] sm:$0xff]
      %v179 = vld [vmem:[%s169 + $0x8] sm:$0xff]
      %v180 = vld [vmem:[%s169 + $0x10] sm:$0xff]
      %v181 = vld [vmem:[%s169 + $0x18] sm:$0xff]
      %v182 = vld [vmem:[%s169 + $0x20] sm:$0xff]
      %v183 = vld [vmem:[%s169 + $0x28] sm:$0xff]
      %v184 = vld [vmem:[%s169 + $0x30] sm:$0xff]
      %v185 = vld [vmem:[%s169 + $0x38] sm:$0xff]
      %v186 = vld [vmem:[%s1] sm:$0xf]
      %v187 = vld [vmem:[%s1 + $0x4] sm:$0xf]
      %v188 = vld [vmem:[%s1 + $0x8] sm:$0xf]
      %v189 = vld [vmem:[%s1 + $0xc] sm:$0xf]
      %v190 = vld [vmem:[%s1 + $0x10] sm:$0xf]
      %v191 = vld [vmem:[%s1 + $0x14] sm:$0xf]
      %v192 = vld [vmem:[%s1 + $0x18] sm:$0xf]
      %v193 = vld [vmem:[%s1 + $0x1c] sm:$0xf]
      %v194 = vld [vmem:[%s1 + $0x20] sm:$0xf]
      %v195 = vld [vmem:[%s1 + $0x24] sm:$0xf]
      %v196 = vld [vmem:[%s1 + $0x28] sm:$0xf]
      %v197 = vld [vmem:[%s1 + $0x2c] sm:$0xf]
      %v198 = vld [vmem:[%s1 + $0x30] sm:$0xf]
      %v199 = vld [vmem:[%s1 + $0x34] sm:$0xf]
      %v200 = vld [vmem:[%s1 + $0x38] sm:$0xf]
      %v201 = vld [vmem:[%s1 + $0x3c] sm:$0xf]
      %v202 = vld [vmem:[%s1 + $0x40] sm:$0xf]
      %v203 = vld [vmem:[%s1 + $0x44] sm:$0xf]
      %v204 = vld [vmem:[%s2] sm:$0x1]
      %v206 = vlaneseq
      %v207 = vshrl.u32 %v206, 7
      %v208 = vsub.s32 0, %v207
      %v209 = vrot.slane %v204, %v208
      %v219 = vunpack.c.l.b16 %v178
      %v220 = vunpack.c.h.b16 %v178
      %v221 = vunpack.c.l.b16 %v179
      %v222 = vunpack.c.h.b16 %v179
      %v223 = vunpack.c.l.b16 %v180
      %v224 = vunpack.c.h.b16 %v180
      %v225 = vunpack.c.l.b16 %v181
      %v226 = vunpack.c.h.b16 %v181
      %v227 = vunpack.c.l.b16 %v182
      %v228 = vunpack.c.h.b16 %v182
      %v229 = vunpack.c.l.b16 %v183
      %v230 = vunpack.c.h.b16 %v183
      %v231 = vunpack.c.l.b16 %v184
      %v232 = vunpack.c.h.b16 %v184
      %v233 = vunpack.c.l.b16 %v185
      %v234 = vunpack.c.h.b16 %v185
      %v235 = vpack.c.b16 %v221, %v219
      %v236 = vpack.c.b16 %v222, %v220
      %v237 = vpack.c.b16 %v225, %v223
      %v238 = vpack.c.b16 %v226, %v224
      %v239 = vpack.c.b16 %v229, %v227
      %v240 = vpack.c.b16 %v230, %v228
      %v241 = vpack.c.b16 %v233, %v231
      %v242 = vpack.c.b16 %v234, %v232
      %v265 = vunpack.c.l.b16 %v186
      %v266 = vunpack.c.l.b16 %v187
      %v267 = vunpack.c.l.b16 %v188
      %v268 = vunpack.c.l.b16 %v189
      %v269 = vunpack.c.l.b16 %v190
      %v270 = vunpack.c.l.b16 %v191
      %v271 = vunpack.c.l.b16 %v192
      %v272 = vunpack.c.l.b16 %v193
      %v273 = vunpack.c.l.b16 %v194
      %v274 = vunpack.c.l.b16 %v195
      %v275 = vunpack.c.l.b16 %v196
      %v276 = vunpack.c.l.b16 %v197
      %v277 = vunpack.c.l.b16 %v198
      %v278 = vunpack.c.l.b16 %v199
      %v279 = vunpack.c.l.b16 %v200
      %v280 = vunpack.c.l.b16 %v201
      %v281 = vunpack.c.l.b16 %v202
      %v282 = vunpack.c.l.b16 %v203
      %v283 = vpack.c.b16 %v266, %v265
      %v284 = vpack.c.b16 %v268, %v267
      %v285 = vpack.c.b16 %v270, %v269
      %v286 = vpack.c.b16 %v272, %v271
      %v287 = vpack.c.b16 %v274, %v273
      %v288 = vpack.c.b16 %v276, %v275
      %v289 = vpack.c.b16 %v278, %v277
      %v290 = vpack.c.b16 %v280, %v279
      %v291 = vpack.c.b16 %v282, %v281
      %vm301 = vcmask 130048
      %v303 = vsel %vm301, %v236, 0
      %v306 = vsel %vm301, %v238, 0
      %v309 = vsel %vm301, %v240, 0
      %v312 = vsel %vm301, %v242, 0
      %314 = vmatprep.subr.bf16.mxu0 0
      %315 = vmatpush1.bf16.msra.mxu0 %v290
      %316 = vmatprep.subr.bf16.mxu0 0
      %317 = vmatpush1.bf16.msra.mxu0 %v289
      %318 = vmatprep.subr.bf16.mxu0 0
      %319 = vmatpush1.bf16.msra.mxu0 %v288
      %320 = vmatprep.subr.bf16.mxu0 0
      %321 = vmatpush1.bf16.msra.mxu0 %v287
      %322 = vmatprep.subr.bf16.mxu0 0
      %323 = vmatpush1.bf16.msra.mxu0 %v286
      %324 = vmatprep.subr.bf16.mxu0 0
      %325 = vmatpush1.bf16.msra.mxu0 %v285
      %326 = vmatprep.subr.bf16.mxu0 0
      %327 = vmatpush1.bf16.msra.mxu0 %v284
      %328 = vmatprep.subr.bf16.mxu0 0
      %329 = vmatpush1.bf16.msra.mxu0 %v283
      %330 = vmatprep.subr.bf16.mxu0 0
      %331 = vmatpush2.bf16.msra.mxu0 0
      %332 = vmatprep.subr.bf16.mxu0 0
      %333 = vmatpush2.bf16.msra.mxu0 0
      %334 = vmatprep.subr.bf16.mxu0 0
      %335 = vmatpush2.bf16.msra.mxu0 0
      %336 = vmatprep.subr.bf16.mxu0 0
      %337 = vmatpush2.bf16.msra.mxu0 0
      %338 = vmatprep.subr.bf16.mxu0 0
      %339 = vmatpush2.bf16.msra.mxu0 0
      %340 = vmatprep.subr.bf16.mxu0 0
      %341 = vmatpush2.bf16.msra.mxu0 0
      %342 = vmatprep.subr.bf16.mxu0 0
      %343 = vmatpush2.bf16.msra.mxu0 0
      %344 = vmatprep.subr.bf16.mxu0 0
      %345 = vmatpush2.bf16.msra.mxu0 %v291
      %346 = vmatprep.mubr.bf16.mxu0 %v303
      %347 = vmatmul.mubr.bf16.gmra.mxu0 %v235
      %v348 = vpop.f32.mrf.mxu0
      %v349 = vadd.f32 %v209, %v348
      %v350 = vpop.f32.mrf.mxu0
      %v351 = vpop.f32.mrf.mxu0
      %v352 = vadd.f32 %v209, %v351
      %v353 = vpop.f32.mrf.mxu0
      %354 = vmatprep.mubr.bf16.mxu0 %v306
      %355 = vmatmul.mubr.bf16.gmra.mxu0 %v237
      %v356 = vpop.f32.mrf.mxu0
      %v357 = vadd.f32 %v209, %v356
      %v358 = vpop.f32.mrf.mxu0
      %v359 = vpop.f32.mrf.mxu0
      %v360 = vadd.f32 %v209, %v359
      %v361 = vpop.f32.mrf.mxu0
      %362 = vmatprep.mubr.bf16.mxu0 %v309
      %363 = vmatmul.mubr.bf16.gmra.mxu0 %v239
      %v364 = vpop.f32.mrf.mxu0
      %v365 = vadd.f32 %v209, %v364
      %v366 = vpop.f32.mrf.mxu0
      %v367 = vpop.f32.mrf.mxu0
      %v368 = vadd.f32 %v209, %v367
      %v369 = vpop.f32.mrf.mxu0
      %370 = vmatprep.mubr.bf16.mxu0 %v312
      %371 = vmatmul.mubr.bf16.gmra.mxu0 %v241
      %v372 = vpop.f32.mrf.mxu0
      %v373 = vadd.f32 %v209, %v372
      %v374 = vpop.f32.mrf.mxu0
      %v375 = vpop.f32.mrf.mxu0
      %v376 = vadd.f32 %v209, %v375
      %v377 = vpop.f32.mrf.mxu0
      %378 = vdwg.mxu0
      %v379 = vmax.f32 %v349, 0.0
      %v380 = vmax.f32 %v352, 0.0
      %v381 = vmax.f32 %v357, 0.0
      %v382 = vmax.f32 %v360, 0.0
      %v383 = vmax.f32 %v365, 0.0
      %v384 = vmax.f32 %v368, 0.0
      %v385 = vmax.f32 %v373, 0.0
      %v386 = vmax.f32 %v376, 0.0
      %v387 = vpack.c.bf16 %v380, %v379
      %v388 = vpack.c.bf16 %v382, %v381
      %v389 = vpack.c.bf16 %v384, %v383
      %v390 = vpack.c.bf16 %v386, %v385
      %v395 = vunpack.c.l.b16 %v387
      %v396 = vunpack.c.h.b16 %v387
      %v397 = vunpack.c.l.b16 %v388
      %v398 = vunpack.c.h.b16 %v388
      %v399 = vunpack.c.l.b16 %v389
      %v400 = vunpack.c.h.b16 %v389
      %v401 = vunpack.c.l.b16 %v390
      %v402 = vunpack.c.h.b16 %v390
      %v403 = vpack.c.b16 %v395, %v395
      %v404 = vpack.c.b16 %v396, %v396
      %v405 = vpack.c.b16 %v397, %v397
      %v406 = vpack.c.b16 %v398, %v398
      %v407 = vpack.c.b16 %v399, %v399
      %v408 = vpack.c.b16 %v400, %v400
      %v409 = vpack.c.b16 %v401, %v401
      %v410 = vpack.c.b16 %v402, %v402
      %419 = vst [vmem:[%s175] sm:$0xf] %v403
      %420 = vst [vmem:[%s175 + $0x4] sm:$0xf] %v404
      %421 = vst [vmem:[%s175 + $0x8] sm:$0xf] %v405
      %422 = vst [vmem:[%s175 + $0xc] sm:$0xf] %v406
      %423 = vst [vmem:[%s175 + $0x10] sm:$0xf] %v407
      %424 = vst [vmem:[%s175 + $0x14] sm:$0xf] %v408
      %425 = vst [vmem:[%s175 + $0x18] sm:$0xf] %v409
      %426 = vst [vmem:[%s175 + $0x1c] sm:$0xf] %v410
      %s427 = smul.u32 8, %s14
      %p428 = scmp.lt.s32.totalorder %s427, 15
      %s429 = scalar_select %p428, %s427, 15
      %s430 = smul.addr %s429, 4
      %s431 = scalar_lea.vmem %s3, %s430
      // Predicated region
      $region33: #{resnet_forward.20} parent=31 // pred_check
        %p432 = pneg %p100
      $region34: #{resnet_forward.20} parent=31 // pred_check_branch
        %434 = sbr.rel (%p432) target = $region36
      $region35: #{resnet_forward.20} parent=31 // pred_region
        %s435 = smul.u32 8, %s14
      $region36: #{resnet_forward.20} parent=31 // pred_fallthru
        _
    $region32: #{resnet_forward.20} parent=5 // pred_fallthru
      _
    %p436 = scmp.le.s32.totalorder 2, %s9
    // Predicated region
    $region37: #{resnet_forward.20} parent=5 // pred_check
      %p437 = pneg %p436
    $region38: #{resnet_forward.20} parent=5 // pred_check_branch
      %439 = sbr.rel (%p437) target = $region40
    $region39: #{resnet_forward.20} parent=5 // pred_region
      %s440 = ssub.s32 %s9, 2
      // Predicated region
      $region41: #{resnet_forward.20} parent=39 // pred_check
        %p441 = pneg %p106
      $region42: #{resnet_forward.20} parent=39 // pred_check_branch
        %443 = sbr.rel (%p441) target = $region44
      $region43: #{resnet_forward.20} parent=39 // pred_region
        %s444 = smul.u32 8, %s15
        %p445 = scmp.lt.s32.totalorder %s444, 15
        %s446 = scalar_select %p445, %s444, 15
        %s447 = smul.addr %s446, 4
        %s448 = scalar_lea.vmem %s3, %s447
      $region44: #{resnet_forward.20} parent=39 // pred_fallthru
        _
    $region40: #{resnet_forward.20} parent=5 // pred_fallthru
      _
  $region6: #{resnet_forward.20} parent=0 // loop_footer
    %s13 = sadd.s32 1, %s9
  $region7: #{resnet_forward.20} parent=0 // loop_footer_branch
    %8 = sbr.rel target = $region3
  $region8: #{resnet_forward.20} parent=0 // loop_exit
    _

// kernel: resnet_forward.19
$region0: #{resnet_forward.19}
  #allocation0 [shape = 'u32[]', space=smem, size = 0x4, offset = 0x4, fixed_abs, tag = 'smem constant byte address 0x4 - core index']
  #allocation1 [shape = 'u32[144,128]{1,0:T(1,128)}', space=vmem, size = 0x12000, scoped, tag = 'internal scratch']
  %s0 = inlined_call_operand.vmem [shape: bf16[128,16], index: 0, kind: input, shape index: {}]
  %s1 = inlined_call_operand.vmem [shape: bf16[16,128], index: 1, kind: input, shape index: {}]
  %s2 = inlined_call_operand.vmem [shape: f32[1,128], index: 2, kind: input, shape index: {}]
  %s3 = inlined_call_operand.vmem [shape: bf16[128,128], index: 3, kind: output, shape index: {}]
  %s4 = sld [smem:[#allocation0]]
  $region45: #{resnet_forward.19} parent=0
    _
  %s6 = ssub.s32 1, %s4
  %s7 = scalar_select 0, %s6, %s4
  loop: start=0, step=1, limit=4
  $region2: #{resnet_forward.19} parent=0 // loop_pre_header
    _
  $region3: #{resnet_forward.19} parent=0 // loop_header
    %s9 = sphi 0, %s13
    %p10 = scmp.ge.s32.totalorder %s9, 4
    %s19 = sphi 0, %s21
    %s22 = sphi 0, %s19
    %s23 = sphi 0, %s22
    %s39 = sphi 0, %s23
    %s43 = sphi 0, %s43
    %s45 = sphi 0, %s43
    %s46 = sphi 0, %s45
    %s60 = sphi 0, %s46
    %s64 = sphi 0, %s64
    %s66 = sphi 0, %s64
    %s67 = sphi 0, %s66
    %s81 = sphi 0, %s67
    %s87 = sphi 0, %s89
    %s90 = sphi 0, %s87
    %s91 = sphi 0, %s90
    %s107 = sphi 0, %s91
  $region4: #{resnet_forward.19} parent=0 // loop_header_branch
    %12 = sbr.rel (%p10) target = $region8
  $region5: #{resnet_forward.19} parent=0 // loop_body
    %s14 = ssub.s32 %s9, 1
    %s15 = ssub.s32 %s9, 2
    %s16 = sadd.s32 %s9, 1
    %s17 = ssub.s32 %s9, %s16
    %p18 = scmp.eq.s32.totalorder %s17, 0
    %s20 = sadd.s32 %s19, 1
    %s21 = scalar_select %p18, %s19, %s20
    %p24 = pneg %p18
    %p25 = scmp.eq.s32.totalorder %s9, 1
    %p26 = por %p24, %p25
    %p27 = scmp.ne.s32.totalorder %s19, %s22
    %p28 = scmp.eq.s32.totalorder %s9, 0
    %p29 = por %p27, %p28
    %p30 = scmp.ne.s32.totalorder %s19, %s22
    %p31 = scmp.eq.s32.totalorder %s14, 1
    %p32 = por %p30, %p31
    %p33 = scmp.ne.s32.totalorder %s22, %s23
    %p34 = scmp.eq.s32.totalorder %s14, 0
    %p35 = por %p33, %p34
    %p36 = scmp.ne.s32.totalorder %s22, %s23
    %p37 = scmp.eq.s32.totalorder %s15, 1
    %p38 = por %p36, %p37
    %p40 = scmp.ne.s32.totalorder %s23, %s39
    %p41 = scmp.eq.s32.totalorder %s15, 0
    %p42 = por %p40, %p41
    %s44 = sadd.s32 %s43, 1
    %p47 = scmp.eq.s32.totalorder %s9, 1
    %p48 = scmp.ne.s32.totalorder %s43, %s45
    %p49 = scmp.eq.s32.totalorder %s9, 0
    %p50 = por %p48, %p49
    %p51 = scmp.ne.s32.totalorder %s43, %s45
    %p52 = scmp.eq.s32.totalorder %s14, 1
    %p53 = por %p51, %p52
    %p54 = scmp.ne.s32.totalorder %s45, %s46
    %p55 = scmp.eq.s32.totalorder %s14, 0
    %p56 = por %p54, %p55
    %p57 = scmp.ne.s32.totalorder %s45, %s46
    %p58 = scmp.eq.s32.totalorder %s15, 1
    %p59 = por %p57, %p58
    %p61 = scmp.ne.s32.totalorder %s46, %s60
    %p62 = scmp.eq.s32.totalorder %s15, 0
    %p63 = por %p61, %p62
    %s65 = sadd.s32 %s64, 1
    %p68 = scmp.eq.s32.totalorder %s9, 1
    %p69 = scmp.ne.s32.totalorder %s64, %s66
    %p70 = scmp.eq.s32.totalorder %s9, 0
    %p71 = por %p69, %p70
    %p72 = scmp.ne.s32.totalorder %s64, %s66
    %p73 = scmp.eq.s32.totalorder %s14, 1
    %p74 = por %p72, %p73
    %p75 = scmp.ne.s32.totalorder %s66, %s67
    %p76 = scmp.eq.s32.totalorder %s14, 0
    %p77 = por %p75, %p76
    %p78 = scmp.ne.s32.totalorder %s66, %s67
    %p79 = scmp.eq.s32.totalorder %s15, 1
    %p80 = por %p78, %p79
    %p82 = scmp.ne.s32.totalorder %s67, %s81
    %p83 = scmp.eq.s32.totalorder %s15, 0
    %p84 = por %p82, %p83
    %s85 = ssub.s32 %s9, %s16
    %p86 = scmp.eq.s32.totalorder %s85, 0
    %s88 = sadd.s32 %s87, 1
    %s89 = scalar_select %p86, %s87, %s88
    %p92 = pneg %p86
    %p93 = scmp.eq.s32.totalorder %s9, 1
    %p94 = por %p92, %p93
    %p95 = scmp.ne.s32.totalorder %s87, %s90
    %p96 = scmp.eq.s32.totalorder %s9, 0
    %p97 = por %p95, %p96
    %p98 = scmp.ne.s32.totalorder %s87, %s90
    %p99 = scmp.eq.s32.totalorder %s14, 1
    %p100 = por %p98, %p99
    %p101 = scmp.ne.s32.totalorder %s90, %s91
    %p102 = scmp.eq.s32.totalorder %s14, 0
    %p103 = por %p101, %p102
    %p104 = scmp.ne.s32.totalorder %s90, %s91
    %p105 = scmp.eq.s32.totalorder %s15, 1
    %p106 = por %p104, %p105
    %p108 = scmp.ne.s32.totalorder %s91, %s107
    %p109 = scmp.eq.s32.totalorder %s15, 0
    %p110 = por %p108, %p109
    %p111 = scmp.le.s32.totalorder 1, %s9
    %p112 = scmp.lt.s32.totalorder %s9, 3
    %p113 = pnand %p111, %p112
    %p114 = pneg %p113
    // Predicated region
    $region9: #{resnet_forward.19} parent=5 // pred_check
      _
    $region10: #{resnet_forward.19} parent=5 // pred_check_branch
      %116 = sbr.rel (%p113) target = $region12
    $region11: #{resnet_forward.19} parent=5 // pred_region
      %s117 = ssub.s32 %s9, 1
      // Predicated region
      $region13: #{resnet_forward.19} parent=11 // pred_check
        %p118 = pneg %p56
      $region14: #{resnet_forward.19} parent=11 // pred_check_branch
        %120 = sbr.rel (%p118) target = $region16
      $region15: #{resnet_forward.19} parent=11 // pred_region
        _
      $region16: #{resnet_forward.19} parent=11 // pred_fallthru
        _
      // Predicated region
      $region17: #{resnet_forward.19} parent=11 // pred_check
        %p121 = pneg %p77
      $region18: #{resnet_forward.19} parent=11 // pred_check_branch
        %123 = sbr.rel (%p121) target = $region20
      $region19: #{resnet_forward.19} parent=11 // pred_region
        _
      $region20: #{resnet_forward.19} parent=11 // pred_fallthru
        _
    $region12: #{resnet_forward.19} parent=5 // pred_fallthru
      _
    %p124 = scmp.lt.s32.totalorder %s9, 2
    // Predicated region
    $region21: #{resnet_forward.19} parent=5 // pred_check
      %p125 = pneg %p124
    $region22: #{resnet_forward.19} parent=5 // pred_check_branch
      %127 = sbr.rel (%p125) target = $region24
    $region23: #{resnet_forward.19} parent=5 // pred_region
      // Predicated region
      $region25: #{resnet_forward.19} parent=23 // pred_check
        %p128 = pneg %p29
      $region26: #{resnet_forward.19} parent=23 // pred_check_branch
        %130 = sbr.rel (%p128) target = $region28
      $region27: #{resnet_forward.19} parent=23 // pred_region
        %s131 = smul.u32 8, %s9
        %p132 = scmp.lt.s32.totalorder %s131, 15
        %s133 = scalar_select %p132, %s131, 15
        %s134 = smul.addr %s133, 4
        %s135 = scalar_lea.vmem %s0, %s134
        %s136 = smul.u32 8, %s9
      $region28: #{resnet_forward.19} parent=23 // pred_fallthru
        _
    $region24: #{resnet_forward.19} parent=5 // pred_fallthru
      _
    %p137 = scmp.le.s32.totalorder 1, %s9
    %p138 = scmp.lt.s32.totalorder %s9, 3
    %p139 = pnand %p137, %p138
    %p140 = pneg %p139
    // Predicated region
    $region29: #{resnet_forward.19} parent=5 // pred_check
      _
    $region30: #{resnet_forward.19} parent=5 // pred_check_branch
      %142 = sbr.rel (%p139) target = $region32
    $region31: #{resnet_forward.19} parent=5 // pred_region
      %s143 = ssub.s32 %s9, 1
      %s144 = smul.u32 8, %s14
      %p145 = scmp.lt.s32.totalorder %s144, 15
      %s146 = scalar_select %p145, %s144, 15
      %s147 = smul.addr %s146, 4
      %s148 = scalar_lea.vmem %s0, %s147
      %p149 = pneg %p35
      %p150 = pneg %p32
      %p151 = pneg %p56
      %p152 = pneg %p53
      %p153 = pneg %p77
      %p154 = pneg %p74
      %p155 = pneg %p103
      %p156 = pneg %p100
      %s157 = smul.u32 8, %s14
      %p158 = scmp.lt.s32.totalorder %s157, 15
      %s159 = scalar_select %p158, %s157, 15
      %s160 = smul.addr %s159, 4
      %s161 = scalar_lea.vmem %s3, %s160
      %s162 = smul.u32 8, %s14
      %p163 = scmp.lt.s32.totalorder %s162, 15
      %s164 = scalar_select %p163, %s162, 15
      %s165 = smul.addr %s164, 4
      %s166 = scalar_lea.vmem %s0, %s165
      %s167 = smul.u32 8, %s14
      %s168 = smul.u32 8, %s14
      %p169 = scmp.lt.s32.totalorder %s168, 15
      %s170 = scalar_select %p169, %s168, 15
      %s171 = smul.addr %s170, 4
      %s172 = scalar_lea.vmem %s3, %s171
      %s173 = smul.u32 8, %s14
      %v175 = vld [vmem:[%s166] sm:$0xf]
      %v176 = vld [vmem:[%s166 + $0x4] sm:$0xf]
      %v177 = vld [vmem:[%s166 + $0x8] sm:$0xf]
      %v178 = vld [vmem:[%s166 + $0xc] sm:$0xf]
      %v179 = vld [vmem:[%s166 + $0x10] sm:$0xf]
      %v180 = vld [vmem:[%s166 + $0x14] sm:$0xf]
      %v181 = vld [vmem:[%s166 + $0x18] sm:$0xf]
      %v182 = vld [vmem:[%s166 + $0x1c] sm:$0xf]
      %v183 = vld [vmem:[%s1] sm:$0xf]
      %v184 = vld [vmem:[%s1 + $0x4] sm:$0xf]
      %v185 = vld [vmem:[%s2] sm:$0x1]
      %v187 = vlaneseq
      %v188 = vshrl.u32 %v187, 7
      %v189 = vsub.s32 0, %v188
      %v190 = vrot.slane %v185, %v189
      %v200 = vunpack.c.l.b16 %v175
      %v201 = vunpack.c.l.b16 %v176
      %v202 = vunpack.c.l.b16 %v177
      %v203 = vunpack.c.l.b16 %v178
      %v204 = vunpack.c.l.b16 %v179
      %v205 = vunpack.c.l.b16 %v180
      %v206 = vunpack.c.l.b16 %v181
      %v207 = vunpack.c.l.b16 %v182
      %v208 = vpack.c.b16 %v201, %v200
      %v209 = vpack.c.b16 %v203, %v202
      %v210 = vpack.c.b16 %v205, %v204
      %v211 = vpack.c.b16 %v207, %v206
      %v214 = vunpack.c.l.b16 %v183
      %v215 = vunpack.c.l.b16 %v184
      %v216 = vpack.c.b16 %v215, %v214
      %vm218 = vcmask 130048
      %v220 = vsel %vm218, %v208, 0
      %v223 = vsel %vm218, %v209, 0
      %v226 = vsel %vm218, %v210, 0
      %v229 = vsel %vm218, %v211, 0
      %231 = vmatprep.subr.bf16.mxu0 0
      %232 = vmatpush1.bf16.msra.mxu0 0
      %233 = vmatprep.subr.bf16.mxu0 0
      %234 = vmatpush1.bf16.msra.mxu0 0
      %235 = vmatprep.subr.bf16.mxu0 0
      %236 = vmatpush1.bf16.msra.mxu0 0
      %237 = vmatprep.subr.bf16.mxu0 0
      %238 = vmatpush1.bf16.msra.mxu0 0
      %239 = vmatprep.subr.bf16.mxu0 0
      %240 = vmatpush1.bf16.msra.mxu0 0
      %241 = vmatprep.subr.bf16.mxu0 0
      %242 = vmatpush1.bf16.msra.mxu0 0
      %243 = vmatprep.subr.bf16.mxu0 0
      %244 = vmatpush1.bf16.msra.mxu0 0
      %245 = vmatprep.subr.bf16.mxu0 0
      %246 = vmatpush1.bf16.msra.mxu0 %v216
      %247 = vmatprep.subr.bf16.mxu0 0
      %248 = vmatpush2.bf16.msra.mxu0 0
      %249 = vmatprep.subr.bf16.mxu0 0
      %250 = vmatpush2.bf16.msra.mxu0 0
      %251 = vmatprep.subr.bf16.mxu0 0
      %252 = vmatpush2.bf16.msra.mxu0 0
      %253 = vmatprep.subr.bf16.mxu0 0
      %254 = vmatpush2.bf16.msra.mxu0 0
      %255 = vmatprep.subr.bf16.mxu0 0
      %256 = vmatpush2.bf16.msra.mxu0 0
      %257 = vmatprep.subr.bf16.mxu0 0
      %258 = vmatpush2.bf16.msra.mxu0 0
      %259 = vmatprep.subr.bf16.mxu0 0
      %260 = vmatpush2.bf16.msra.mxu0 0
      %261 = vmatprep.subr.bf16.mxu0 0
      %262 = vmatpush2.bf16.msra.mxu0 0
      %263 = vmatprep.mubr.bf16.mxu0 0
      %264 = vmatmul.mubr.bf16.gmra.mxu0 %v220
      %v265 = vpop.f32.mrf.mxu0
      %v266 = vadd.f32 %v190, %v265
      %v267 = vpop.f32.mrf.mxu0
      %v268 = vpop.f32.mrf.mxu0
      %v269 = vadd.f32 %v190, %v268
      %v270 = vpop.f32.mrf.mxu0
      %271 = vmatprep.mubr.bf16.mxu0 0
      %272 = vmatmul.mubr.bf16.gmra.mxu0 %v223
      %v273 = vpop.f32.mrf.mxu0
      %v274 = vadd.f32 %v190, %v273
      %v275 = vpop.f32.mrf.mxu0
      %v276 = vpop.f32.mrf.mxu0
      %v277 = vadd.f32 %v190, %v276
      %v278 = vpop.f32.mrf.mxu0
      %279 = vmatprep.mubr.bf16.mxu0 0
      %280 = vmatmul.mubr.bf16.gmra.mxu0 %v226
      %v281 = vpop.f32.mrf.mxu0
      %v282 = vadd.f32 %v190, %v281
      %v283 = vpop.f32.mrf.mxu0
      %v284 = vpop.f32.mrf.mxu0
      %v285 = vadd.f32 %v190, %v284
      %v286 = vpop.f32.mrf.mxu0
      %287 = vmatprep.mubr.bf16.mxu0 0
      %288 = vmatmul.mubr.bf16.gmra.mxu0 %v229
      %v289 = vpop.f32.mrf.mxu0
      %v290 = vadd.f32 %v190, %v289
      %v291 = vpop.f32.mrf.mxu0
      %v292 = vpop.f32.mrf.mxu0
      %v293 = vadd.f32 %v190, %v292
      %v294 = vpop.f32.mrf.mxu0
      %295 = vdwg.mxu0
      %v296 = vpack.c.bf16 %v269, %v266
      %v297 = vpack.c.bf16 %v277, %v274
      %v298 = vpack.c.bf16 %v285, %v282
      %v299 = vpack.c.bf16 %v293, %v290
      %v304 = vunpack.c.l.b16 %v296
      %v305 = vunpack.c.h.b16 %v296
      %v306 = vunpack.c.l.b16 %v297
      %v307 = vunpack.c.h.b16 %v297
      %v308 = vunpack.c.l.b16 %v298
      %v309 = vunpack.c.h.b16 %v298
      %v310 = vunpack.c.l.b16 %v299
      %v311 = vunpack.c.h.b16 %v299
      %v312 = vpack.c.b16 %v304, %v304
      %v313 = vpack.c.b16 %v305, %v305
      %v314 = vpack.c.b16 %v306, %v306
      %v315 = vpack.c.b16 %v307, %v307
      %v316 = vpack.c.b16 %v308, %v308
      %v317 = vpack.c.b16 %v309, %v309
      %v318 = vpack.c.b16 %v310, %v310
      %v319 = vpack.c.b16 %v311, %v311
      %328 = vst [vmem:[%s172] sm:$0xf] %v312
      %329 = vst [vmem:[%s172 + $0x4] sm:$0xf] %v313
      %330 = vst [vmem:[%s172 + $0x8] sm:$0xf] %v314
      %331 = vst [vmem:[%s172 + $0xc] sm:$0xf] %v315
      %332 = vst [vmem:[%s172 + $0x10] sm:$0xf] %v316
      %333 = vst [vmem:[%s172 + $0x14] sm:$0xf] %v317
      %334 = vst [vmem:[%s172 + $0x18] sm:$0xf] %v318
      %335 = vst [vmem:[%s172 + $0x1c] sm:$0xf] %v319
      %s336 = smul.u32 8, %s14
      %p337 = scmp.lt.s32.totalorder %s336, 15
      %s338 = scalar_select %p337, %s336, 15
      %s339 = smul.addr %s338, 4
      %s340 = scalar_lea.vmem %s3, %s339
      // Predicated region
      $region33: #{resnet_forward.19} parent=31 // pred_check
        %p341 = pneg %p100
      $region34: #{resnet_forward.19} parent=31 // pred_check_branch
        %343 = sbr.rel (%p341) target = $region36
      $region35: #{resnet_forward.19} parent=31 // pred_region
        %s344 = smul.u32 8, %s14
      $region36: #{resnet_forward.19} parent=31 // pred_fallthru
        _
    $region32: #{resnet_forward.19} parent=5 // pred_fallthru
      _
    %p345 = scmp.le.s32.totalorder 2, %s9
    // Predicated region
    $region37: #{resnet_forward.19} parent=5 // pred_check
      %p346 = pneg %p345
    $region38: #{resnet_forward.19} parent=5 // pred_check_branch
      %348 = sbr.rel (%p346) target = $region40
    $region39: #{resnet_forward.19} parent=5 // pred_region
      %s349 = ssub.s32 %s9, 2
      // Predicated region
      $region41: #{resnet_forward.19} parent=39 // pred_check
        %p350 = pneg %p106
      $region42: #{resnet_forward.19} parent=39 // pred_check_branch
        %352 = sbr.rel (%p350) target = $region44
      $region43: #{resnet_forward.19} parent=39 // pred_region
        %s353 = smul.u32 8, %s15
        %p354 = scmp.lt.s32.totalorder %s353, 15
        %s355 = scalar_select %p354, %s353, 15
        %s356 = smul.addr %s355, 4
        %s357 = scalar_lea.vmem %s3, %s356
      $region44: #{resnet_forward.19} parent=39 // pred_fallthru
        _
    $region40: #{resnet_forward.19} parent=5 // pred_fallthru
      _
  $region6: #{resnet_forward.19} parent=0 // loop_footer
    %s13 = sadd.s32 1, %s9
  $region7: #{resnet_forward.19} parent=0 // loop_footer_branch
    %8 = sbr.rel target = $region3
  $region8: #{resnet_forward.19} parent=0 // loop_exit
    _

// kernel: resnet_forward.21
$region0: #{resnet_forward.21}
  #allocation0 [shape = 'u32[]', space=smem, size = 0x4, offset = 0x4, fixed_abs, tag = 'smem constant byte address 0x4 - core index']
  #allocation1 [shape = 'u32[144,128]{1,0:T(1,128)}', space=vmem, size = 0x12000, scoped, tag = 'internal scratch']
  %s0 = inlined_call_operand.vmem [shape: bf16[128,288], index: 0, kind: input, shape index: {}]
  %s1 = inlined_call_operand.vmem [shape: bf16[288,128], index: 1, kind: input, shape index: {}]
  %s2 = inlined_call_operand.vmem [shape: f32[1,128], index: 2, kind: input, shape index: {}]
  %s3 = inlined_call_operand.vmem [shape: bf16[128,128], index: 3, kind: input, shape index: {}]
  %s4 = inlined_call_operand.vmem [shape: bf16[128,128], index: 4, kind: output, shape index: {}]
  %s5 = sld [smem:[#allocation0]]
  $region49: #{resnet_forward.21} parent=0
    _
  %s7 = ssub.s32 1, %s5
  %s8 = scalar_select 0, %s7, %s5
  loop: start=0, step=1, limit=4
  $region2: #{resnet_forward.21} parent=0 // loop_pre_header
    _
  $region3: #{resnet_forward.21} parent=0 // loop_header
    %s10 = sphi 0, %s14
    %p11 = scmp.ge.s32.totalorder %s10, 4
    %s20 = sphi 0, %s22
    %s23 = sphi 0, %s20
    %s24 = sphi 0, %s23
    %s40 = sphi 0, %s24
    %s44 = sphi 0, %s44
    %s46 = sphi 0, %s44
    %s47 = sphi 0, %s46
    %s61 = sphi 0, %s47
    %s65 = sphi 0, %s65
    %s67 = sphi 0, %s65
    %s68 = sphi 0, %s67
    %s82 = sphi 0, %s68
    %s88 = sphi 0, %s90
    %s91 = sphi 0, %s88
    %s92 = sphi 0, %s91
    %s108 = sphi 0, %s92
    %s114 = sphi 0, %s116
    %s117 = sphi 0, %s114
    %s118 = sphi 0, %s117
    %s134 = sphi 0, %s118
  $region4: #{resnet_forward.21} parent=0 // loop_header_branch
    %13 = sbr.rel (%p11) target = $region8
  $region5: #{resnet_forward.21} parent=0 // loop_body
    %s15 = ssub.s32 %s10, 1
    %s16 = ssub.s32 %s10, 2
    %s17 = sadd.s32 %s10, 1
    %s18 = ssub.s32 %s10, %s17
    %p19 = scmp.eq.s32.totalorder %s18, 0
    %s21 = sadd.s32 %s20, 1
    %s22 = scalar_select %p19, %s20, %s21
    %p25 = pneg %p19
    %p26 = scmp.eq.s32.totalorder %s10, 1
    %p27 = por %p25, %p26
    %p28 = scmp.ne.s32.totalorder %s20, %s23
    %p29 = scmp.eq.s32.totalorder %s10, 0
    %p30 = por %p28, %p29
    %p31 = scmp.ne.s32.totalorder %s20, %s23
    %p32 = scmp.eq.s32.totalorder %s15, 1
    %p33 = por %p31, %p32
    %p34 = scmp.ne.s32.totalorder %s23, %s24
    %p35 = scmp.eq.s32.totalorder %s15, 0
    %p36 = por %p34, %p35
    %p37 = scmp.ne.s32.totalorder %s23, %s24
    %p38 = scmp.eq.s32.totalorder %s16, 1
    %p39 = por %p37, %p38
    %p41 = scmp.ne.s32.totalorder %s24, %s40
    %p42 = scmp.eq.s32.totalorder %s16, 0
    %p43 = por %p41, %p42
    %s45 = sadd.s32 %s44, 1
    %p48 = scmp.eq.s32.totalorder %s10, 1
    %p49 = scmp.ne.s32.totalorder %s44, %s46
    %p50 = scmp.eq.s32.totalorder %s10, 0
    %p51 = por %p49, %p50
    %p52 = scmp.ne.s32.totalorder %s44, %s46
    %p53 = scmp.eq.s32.totalorder %s15, 1
    %p54 = por %p52, %p53
    %p55 = scmp.ne.s32.totalorder %s46, %s47
    %p56 = scmp.eq.s32.totalorder %s15, 0
    %p57 = por %p55, %p56
    %p58 = scmp.ne.s32.totalorder %s46, %s47
    %p59 = scmp.eq.s32.totalorder %s16, 1
    %p60 = por %p58, %p59
    %p62 = scmp.ne.s32.totalorder %s47, %s61
    %p63 = scmp.eq.s32.totalorder %s16, 0
    %p64 = por %p62, %p63
    %s66 = sadd.s32 %s65, 1
    %p69 = scmp.eq.s32.totalorder %s10, 1
    %p70 = scmp.ne.s32.totalorder %s65, %s67
    %p71 = scmp.eq.s32.totalorder %s10, 0
    %p72 = por %p70, %p71
    %p73 = scmp.ne.s32.totalorder %s65, %s67
    %p74 = scmp.eq.s32.totalorder %s15, 1
    %p75 = por %p73, %p74
    %p76 = scmp.ne.s32.totalorder %s67, %s68
    %p77 = scmp.eq.s32.totalorder %s15, 0
    %p78 = por %p76, %p77
    %p79 = scmp.ne.s32.totalorder %s67, %s68
    %p80 = scmp.eq.s32.totalorder %s16, 1
    %p81 = por %p79, %p80
    %p83 = scmp.ne.s32.totalorder %s68, %s82
    %p84 = scmp.eq.s32.totalorder %s16, 0
    %p85 = por %p83, %p84
    %s86 = ssub.s32 %s10, %s17
    %p87 = scmp.eq.s32.totalorder %s86, 0
    %s89 = sadd.s32 %s88, 1
    %s90 = scalar_select %p87, %s88, %s89
    %p93 = pneg %p87
    %p94 = scmp.eq.s32.totalorder %s10, 1
    %p95 = por %p93, %p94
    %p96 = scmp.ne.s32.totalorder %s88, %s91
    %p97 = scmp.eq.s32.totalorder %s10, 0
    %p98 = por %p96, %p97
    %p99 = scmp.ne.s32.totalorder %s88, %s91
    %p100 = scmp.eq.s32.totalorder %s15, 1
    %p101 = por %p99, %p100
    %p102 = scmp.ne.s32.totalorder %s91, %s92
    %p103 = scmp.eq.s32.totalorder %s15, 0
    %p104 = por %p102, %p103
    %p105 = scmp.ne.s32.totalorder %s91, %s92
    %p106 = scmp.eq.s32.totalorder %s16, 1
    %p107 = por %p105, %p106
    %p109 = scmp.ne.s32.totalorder %s92, %s108
    %p110 = scmp.eq.s32.totalorder %s16, 0
    %p111 = por %p109, %p110
    %s112 = ssub.s32 %s10, %s17
    %p113 = scmp.eq.s32.totalorder %s112, 0
    %s115 = sadd.s32 %s114, 1
    %s116 = scalar_select %p113, %s114, %s115
    %p119 = pneg %p113
    %p120 = scmp.eq.s32.totalorder %s10, 1
    %p121 = por %p119, %p120
    %p122 = scmp.ne.s32.totalorder %s114, %s117
    %p123 = scmp.eq.s32.totalorder %s10, 0
    %p124 = por %p122, %p123
    %p125 = scmp.ne.s32.totalorder %s114, %s117
    %p126 = scmp.eq.s32.totalorder %s15, 1
    %p127 = por %p125, %p126
    %p128 = scmp.ne.s32.totalorder %s117, %s118
    %p129 = scmp.eq.s32.totalorder %s15, 0
    %p130 = por %p128, %p129
    %p131 = scmp.ne.s32.totalorder %s117, %s118
    %p132 = scmp.eq.s32.totalorder %s16, 1
    %p133 = por %p131, %p132
    %p135 = scmp.ne.s32.totalorder %s118, %s134
    %p136 = scmp.eq.s32.totalorder %s16, 0
    %p137 = por %p135, %p136
    %p138 = scmp.le.s32.totalorder 1, %s10
    %p139 = scmp.lt.s32.totalorder %s10, 3
    %p140 = pnand %p138, %p139
    %p141 = pneg %p140
    // Predicated region
    $region9: #{resnet_forward.21} parent=5 // pred_check
      _
    $region10: #{resnet_forward.21} parent=5 // pred_check_branch
      %143 = sbr.rel (%p140) target = $region12
    $region11: #{resnet_forward.21} parent=5 // pred_region
      %s144 = ssub.s32 %s10, 1
      // Predicated region
      $region13: #{resnet_forward.21} parent=11 // pred_check
        %p145 = pneg %p57
      $region14: #{resnet_forward.21} parent=11 // pred_check_branch
        %147 = sbr.rel (%p145) target = $region16
      $region15: #{resnet_forward.21} parent=11 // pred_region
        _
      $region16: #{resnet_forward.21} parent=11 // pred_fallthru
        _
      // Predicated region
      $region17: #{resnet_forward.21} parent=11 // pred_check
        %p148 = pneg %p78
      $region18: #{resnet_forward.21} parent=11 // pred_check_branch
        %150 = sbr.rel (%p148) target = $region20
      $region19: #{resnet_forward.21} parent=11 // pred_region
        _
      $region20: #{resnet_forward.21} parent=11 // pred_fallthru
        _
    $region12: #{resnet_forward.21} parent=5 // pred_fallthru
      _
    %p151 = scmp.lt.s32.totalorder %s10, 2
    // Predicated region
    $region21: #{resnet_forward.21} parent=5 // pred_check
      %p152 = pneg %p151
    $region22: #{resnet_forward.21} parent=5 // pred_check_branch
      %154 = sbr.rel (%p152) target = $region24
    $region23: #{resnet_forward.21} parent=5 // pred_region
      // Predicated region
      $region25: #{resnet_forward.21} parent=23 // pred_check
        %p155 = pneg %p30
      $region26: #{resnet_forward.21} parent=23 // pred_check_branch
        %157 = sbr.rel (%p155) target = $region28
      $region27: #{resnet_forward.21} parent=23 // pred_region
        %s158 = smul.u32 8, %s10
        %p159 = scmp.lt.s32.totalorder %s158, 15
        %s160 = scalar_select %p159, %s158, 15
        %s161 = smul.addr %s160, 3
        %s162 = smul.addr %s161, 4
        %s163 = scalar_lea.vmem %s0, %s162
        %s164 = smul.u32 8, %s10
      $region28: #{resnet_forward.21} parent=23 // pred_fallthru
        _
      // Predicated region
      $region29: #{resnet_forward.21} parent=23 // pred_check
        %p165 = pneg %p98
      $region30: #{resnet_forward.21} parent=23 // pred_check_branch
        %167 = sbr.rel (%p165) target = $region32
      $region31: #{resnet_forward.21} parent=23 // pred_region
        %s168 = smul.u32 8, %s10
        %p169 = scmp.lt.s32.totalorder %s168, 15
        %s170 = scalar_select %p169, %s168, 15
        %s171 = smul.addr %s170, 4
        %s172 = scalar_lea.vmem %s3, %s171
        %s173 = smul.u32 8, %s10
      $region32: #{resnet_forward.21} parent=23 // pred_fallthru
        _
    $region24: #{resnet_forward.21} parent=5 // pred_fallthru
      _
    %p174 = scmp.le.s32.totalorder 1, %s10
    %p175 = scmp.lt.s32.totalorder %s10, 3
    %p176 = pnand %p174, %p175
    %p177 = pneg %p176
    // Predicated region
    $region33: #{resnet_forward.21} parent=5 // pred_check
      _
    $region34: #{resnet_forward.21} parent=5 // pred_check_branch
      %179 = sbr.rel (%p176) target = $region36
    $region35: #{resnet_forward.21} parent=5 // pred_region
      %s180 = ssub.s32 %s10, 1
      %s181 = smul.u32 8, %s15
      %p182 = scmp.lt.s32.totalorder %s181, 15
      %s183 = scalar_select %p182, %s181, 15
      %s184 = smul.addr %s183, 3
      %s185 = smul.addr %s184, 4
      %s186 = scalar_lea.vmem %s0, %s185
      %p187 = pneg %p36
      %p188 = pneg %p33
      %p189 = pneg %p57
      %p190 = pneg %p54
      %p191 = pneg %p78
      %p192 = pneg %p75
      %s193 = smul.u32 8, %s15
      %p194 = scmp.lt.s32.totalorder %s193, 15
      %s195 = scalar_select %p194, %s193, 15
      %s196 = smul.addr %s195, 4
      %s197 = scalar_lea.vmem %s3, %s196
      %p198 = pneg %p104
      %p199 = pneg %p101
      %p200 = pneg %p130
      %p201 = pneg %p127
      %s202 = smul.u32 8, %s15
      %p203 = scmp.lt.s32.totalorder %s202, 15
      %s204 = scalar_select %p203, %s202, 15
      %s205 = smul.addr %s204, 4
      %s206 = scalar_lea.vmem %s4, %s205
      %s207 = smul.u32 8, %s15
      %p208 = scmp.lt.s32.totalorder %s207, 15
      %s209 = scalar_select %p208, %s207, 15
      %s210 = smul.addr %s209, 3
      %s211 = smul.addr %s210, 4
      %s212 = scalar_lea.vmem %s0, %s211
      %s213 = smul.u32 8, %s15
      %s214 = smul.u32 8, %s15
      %p215 = scmp.lt.s32.totalorder %s214, 15
      %s216 = scalar_select %p215, %s214, 15
      %s217 = smul.addr %s216, 4
      %s218 = scalar_lea.vmem %s3, %s217
      %s219 = smul.u32 8, %s15
      %s220 = smul.u32 8, %s15
      %p221 = scmp.lt.s32.totalorder %s220, 15
      %s222 = scalar_select %p221, %s220, 15
      %s223 = smul.addr %s222, 4
      %s224 = scalar_lea.vmem %s4, %s223
      %s225 = smul.u32 8, %s15
      %v227 = vld [vmem:[%s212] sm:$0xff]
      %v228 = vld [vmem:[%s212 + $0x8] sm:$0xf]
      %v229 = vld [vmem:[%s212 + $0xc] sm:$0xff]
      %v230 = vld [vmem:[%s212 + $0x14] sm:$0xf]
      %v231 = vld [vmem:[%s212 + $0x18] sm:$0xff]
      %v232 = vld [vmem:[%s212 + $0x20] sm:$0xf]
      %v233 = vld [vmem:[%s212 + $0x24] sm:$0xff]
      %v234 = vld [vmem:[%s212 + $0x2c] sm:$0xf]
      %v235 = vld [vmem:[%s212 + $0x30] sm:$0xff]
      %v236 = vld [vmem:[%s212 + $0x38] sm:$0xf]
      %v237 = vld [vmem:[%s212 + $0x3c] sm:$0xff]
      %v238 = vld [vmem:[%s212 + $0x44] sm:$0xf]
      %v239 = vld [vmem:[%s212 + $0x48] sm:$0xff]
      %v240 = vld [vmem:[%s212 + $0x50] sm:$0xf]
      %v241 = vld [vmem:[%s212 + $0x54] sm:$0xff]
      %v242 = vld [vmem:[%s212 + $0x5c] sm:$0xf]
      %v243 = vld [vmem:[%s1] sm:$0xf]
      %v244 = vld [vmem:[%s1 + $0x4] sm:$0xf]
      %v245 = vld [vmem:[%s1 + $0x8] sm:$0xf]
      %v246 = vld [vmem:[%s1 + $0xc] sm:$0xf]
      %v247 = vld [vmem:[%s1 + $0x10] sm:$0xf]
      %v248 = vld [vmem:[%s1 + $0x14] sm:$0xf]
      %v249 = vld [vmem:[%s1 + $0x18] sm:$0xf]
      %v250 = vld [vmem:[%s1 + $0x1c] sm:$0xf]
      %v251 = vld [vmem:[%s1 + $0x20] sm:$0xf]
      %v252 = vld [vmem:[%s1 + $0x24] sm:$0xf]
      %v253 = vld [vmem:[%s1 + $0x28] sm:$0xf]
      %v254 = vld [vmem:[%s1 + $0x2c] sm:$0xf]
      %v255 = vld [vmem:[%s1 + $0x30] sm:$0xf]
      %v256 = vld [vmem:[%s1 + $0x34] sm:$0xf]
      %v257 = vld [vmem:[%s1 + $0x38] sm:$0xf]
      %v258 = vld [vmem:[%s1 + $0x3c] sm:$0xf]
      %v259 = vld [vmem:[%s1 + $0x40] sm:$0xf]
      %v260 = vld [vmem:[%s1 + $0x44] sm:$0xf]
      %v261 = vld [vmem:[%s1 + $0x48] sm:$0xf]
      %v262 = vld [vmem:[%s1 + $0x4c] sm:$0xf]
      %v263 = vld [vmem:[%s1 + $0x50] sm:$0xf]
      %v264 = vld [vmem:[%s1 + $0x54] sm:$0xf]
      %v265 = vld [vmem:[%s1 + $0x58] sm:$0xf]
      %v266 = vld [vmem:[%s1 + $0x5c] sm:$0xf]
      %v267 = vld [vmem:[%s1 + $0x60] sm:$0xf]
      %v268 = vld [vmem:[%s1 + $0x64] sm:$0xf]
      %v269 = vld [vmem:[%s1 + $0x68] sm:$0xf]
      %v270 = vld [vmem:[%s1 + $0x6c] sm:$0xf]
      %v271 = vld [vmem:[%s1 + $0x70] sm:$0xf]
      %v272 = vld [vmem:[%s1 + $0x74] sm:$0xf]
      %v273 = vld [vmem:[%s1 + $0x78] sm:$0xf]
      %v274 = vld [vmem:[%s1 + $0x7c] sm:$0xf]
      %v275 = vld [vmem:[%s1 + $0x80] sm:$0xf]
      %v276 = vld [vmem:[%s1 + $0x84] sm:$0xf]
      %v277 = vld [vmem:[%s1 + $0x88] sm:$0xf]
      %v278 = vld [vmem:[%s1 + $0x8c] sm:$0xf]
      %v279 = vld [vmem:[%s2] sm:$0x1]
      %v281 = vlaneseq
      %v282 = vshrl.u32 %v281, 7
      %v283 = vsub.s32 0, %v282
      %v284 = vrot.slane %v279, %v283
      %v302 = vunpack.c.l.b16 %v227
      %v303 = vunpack.c.h.b16 %v227
      %v304 = vunpack.c.l.b16 %v228
      %v305 = vunpack.c.l.b16 %v229
      %v306 = vunpack.c.h.b16 %v229
      %v307 = vunpack.c.l.b16 %v230
      %v308 = vunpack.c.l.b16 %v231
      %v309 = vunpack.c.h.b16 %v231
      %v310 = vunpack.c.l.b16 %v232
      %v311 = vunpack.c.l.b16 %v233
      %v312 = vunpack.c.h.b16 %v233
      %v313 = vunpack.c.l.b16 %v234
      %v314 = vunpack.c.l.b16 %v235
      %v315 = vunpack.c.h.b16 %v235
      %v316 = vunpack.c.l.b16 %v236
      %v317 = vunpack.c.l.b16 %v237
      %v318 = vunpack.c.h.b16 %v237
      %v319 = vunpack.c.l.b16 %v238
      %v320 = vunpack.c.l.b16 %v239
      %v321 = vunpack.c.h.b16 %v239
      %v322 = vunpack.c.l.b16 %v240
      %v323 = vunpack.c.l.b16 %v241
      %v324 = vunpack.c.h.b16 %v241
      %v325 = vunpack.c.l.b16 %v242
      %v326 = vpack.c.b16 %v305, %v302
      %v327 = vpack.c.b16 %v306, %v303
      %v328 = vpack.c.b16 %v307, %v304
      %v329 = vpack.c.b16 %v311, %v308
      %v330 = vpack.c.b16 %v312, %v309
      %v331 = vpack.c.b16 %v313, %v310
      %v332 = vpack.c.b16 %v317, %v314
      %v333 = vpack.c.b16 %v318, %v315
      %v334 = vpack.c.b16 %v319, %v316
      %v335 = vpack.c.b16 %v323, %v320
      %v336 = vpack.c.b16 %v324, %v321
      %v337 = vpack.c.b16 %v325, %v322
      %v382 = vunpack.c.l.b16 %v243
      %v383 = vunpack.c.l.b16 %v244
      %v384 = vunpack.c.l.b16 %v245
      %v385 = vunpack.c.l.b16 %v246
      %v386 = vunpack.c.l.b16 %v247
      %v387 = vunpack.c.l.b16 %v248
      %v388 = vunpack.c.l.b16 %v249
      %v389 = vunpack.c.l.b16 %v250
      %v390 = vunpack.c.l.b16 %v251
      %v391 = vunpack.c.l.b16 %v252
      %v392 = vunpack.c.l.b16 %v253
      %v393 = vunpack.c.l.b16 %v254
      %v394 = vunpack.c.l.b16 %v255
      %v395 = vunpack.c.l.b16 %v256
      %v396 = vunpack.c.l.b16 %v257
      %v397 = vunpack.c.l.b16 %v258
      %v398 = vunpack.c.l.b16 %v259
      %v399 = vunpack.c.l.b16 %v260
      %v400 = vunpack.c.l.b16 %v261
      %v401 = vunpack.c.l.b16 %v262
      %v402 = vunpack.c.l.b16 %v263
      %v403 = vunpack.c.l.b16 %v264
      %v404 = vunpack.c.l.b16 %v265
      %v405 = vunpack.c.l.b16 %v266
      %v406 = vunpack.c.l.b16 %v267
      %v407 = vunpack.c.l.b16 %v268
      %v408 = vunpack.c.l.b16 %v269
      %v409 = vunpack.c.l.b16 %v270
      %v410 = vunpack.c.l.b16 %v271
      %v411 = vunpack.c.l.b16 %v272
      %v412 = vunpack.c.l.b16 %v273
      %v413 = vunpack.c.l.b16 %v274
      %v414 = vunpack.c.l.b16 %v275
      %v415 = vunpack.c.l.b16 %v276
      %v416 = vunpack.c.l.b16 %v277
      %v417 = vunpack.c.l.b16 %v278
      %v418 = vpack.c.b16 %v383, %v382
      %v419 = vpack.c.b16 %v385, %v384
      %v420 = vpack.c.b16 %v387, %v386
      %v421 = vpack.c.b16 %v389, %v388
      %v422 = vpack.c.b16 %v391, %v390
      %v423 = vpack.c.b16 %v393, %v392
      %v424 = vpack.c.b16 %v395, %v394
      %v425 = vpack.c.b16 %v397, %v396
      %v426 = vpack.c.b16 %v399, %v398
      %v427 = vpack.c.b16 %v401, %v400
      %v428 = vpack.c.b16 %v403, %v402
      %v429 = vpack.c.b16 %v405, %v404
      %v430 = vpack.c.b16 %v407, %v406
      %v431 = vpack.c.b16 %v409, %v408
      %v432 = vpack.c.b16 %v411, %v410
      %v433 = vpack.c.b16 %v413, %v412
      %v434 = vpack.c.b16 %v415, %v414
      %v435 = vpack.c.b16 %v417, %v416
      %vm454 = vcmask 261120
      %v456 = vsel %vm454, %v328, 0
      %v459 = vsel %vm454, %v331, 0
      %v462 = vsel %vm454, %v334, 0
      %v465 = vsel %vm454, %v337, 0
      %467 = vmatprep.subr.bf16.mxu0 0
      %468 = vmatpush1.bf16.msra.mxu0 %v425
      %469 = vmatprep.subr.bf16.mxu0 0
      %470 = vmatpush1.bf16.msra.mxu0 %v424
      %471 = vmatprep.subr.bf16.mxu0 0
      %472 = vmatpush1.bf16.msra.mxu0 %v423
      %473 = vmatprep.subr.bf16.mxu0 0
      %474 = vmatpush1.bf16.msra.mxu0 %v422
      %475 = vmatprep.subr.bf16.mxu0 0
      %476 = vmatpush1.bf16.msra.mxu0 %v421
      %477 = vmatprep.subr.bf16.mxu0 0
      %478 = vmatpush1.bf16.msra.mxu0 %v420
      %479 = vmatprep.subr.bf16.mxu0 0
      %480 = vmatpush1.bf16.msra.mxu0 %v419
      %481 = vmatprep.subr.bf16.mxu0 0
      %482 = vmatpush1.bf16.msra.mxu0 %v418
      %483 = vmatprep.subr.bf16.mxu0 0
      %484 = vmatpush2.bf16.msra.mxu0 %v433
      %485 = vmatprep.subr.bf16.mxu0 0
      %486 = vmatpush2.bf16.msra.mxu0 %v432
      %487 = vmatprep.subr.bf16.mxu0 0
      %488 = vmatpush2.bf16.msra.mxu0 %v431
      %489 = vmatprep.subr.bf16.mxu0 0
      %490 = vmatpush2.bf16.msra.mxu0 %v430
      %491 = vmatprep.subr.bf16.mxu0 0
      %492 = vmatpush2.bf16.msra.mxu0 %v429
      %493 = vmatprep.subr.bf16.mxu0 0
      %494 = vmatpush2.bf16.msra.mxu0 %v428
      %495 = vmatprep.subr.bf16.mxu0 0
      %496 = vmatpush2.bf16.msra.mxu0 %v427
      %497 = vmatprep.subr.bf16.mxu0 0
      %498 = vmatpush2.bf16.msra.mxu0 %v426
      %499 = vmatprep.mubr.bf16.mxu0 %v327
      %500 = vmatmul.mubr.bf16.gmra.mxu0 %v326
      %v501 = vpop.f32.mrf.mxu0
      %v502 = vadd.f32 %v284, %v501
      %v503 = vpop.f32.mrf.mxu0
      %v504 = vpop.f32.mrf.mxu0
      %v505 = vadd.f32 %v284, %v504
      %v506 = vpop.f32.mrf.mxu0
      %507 = vmatprep.mubr.bf16.mxu0 %v330
      %508 = vmatmul.mubr.bf16.gmra.mxu0 %v329
      %v509 = vpop.f32.mrf.mxu0
      %v510 = vadd.f32 %v284, %v509
      %v511 = vpop.f32.mrf.mxu0
      %v512 = vpop.f32.mrf.mxu0
      %v513 = vadd.f32 %v284, %v512
      %v514 = vpop.f32.mrf.mxu0
      %515 = vmatprep.mubr.bf16.mxu0 %v333
      %516 = vmatmul.mubr.bf16.gmra.mxu0 %v332
      %v517 = vpop.f32.mrf.mxu0
      %v518 = vadd.f32 %v284, %v517
      %v519 = vpop.f32.mrf.mxu0
      %v520 = vpop.f32.mrf.mxu0
      %v521 = vadd.f32 %v284, %v520
      %v522 = vpop.f32.mrf.mxu0
      %523 = vmatprep.mubr.bf16.mxu0 %v336
      %524 = vmatmul.mubr.bf16.gmra.mxu0 %v335
      %v525 = vpop.f32.mrf.mxu0
      %v526 = vadd.f32 %v284, %v525
      %v527 = vpop.f32.mrf.mxu0
      %v528 = vpop.f32.mrf.mxu0
      %v529 = vadd.f32 %v284, %v528
      %v530 = vpop.f32.mrf.mxu0
      %531 = vdwg.mxu0
      %532 = vmatprep.subr.bf16.mxu0 0
      %533 = vmatpush1.bf16.msra.mxu0 0
      %534 = vmatprep.subr.bf16.mxu0 0
      %535 = vmatpush1.bf16.msra.mxu0 0
      %536 = vmatprep.subr.bf16.mxu0 0
      %537 = vmatpush1.bf16.msra.mxu0 0
      %538 = vmatprep.subr.bf16.mxu0 0
      %539 = vmatpush1.bf16.msra.mxu0 0
      %540 = vmatprep.subr.bf16.mxu0 0
      %541 = vmatpush1.bf16.msra.mxu0 0
      %542 = vmatprep.subr.bf16.mxu0 0
      %543 = vmatpush1.bf16.msra.mxu0 0
      %544 = vmatprep.subr.bf16.mxu0 0
      %545 = vmatpush1.bf16.msra.mxu0 %v435
      %546 = vmatprep.subr.bf16.mxu0 0
      %547 = vmatpush1.bf16.msra.mxu0 %v434
      %548 = vmatprep.subr.bf16.mxu0 0
      %549 = vmatpush2.bf16.msra.mxu0 0
      %550 = vmatprep.subr.bf16.mxu0 0
      %551 = vmatpush2.bf16.msra.mxu0 0
      %552 = vmatprep.subr.bf16.mxu0 0
      %553 = vmatpush2.bf16.msra.mxu0 0
      %554 = vmatprep.subr.bf16.mxu0 0
      %555 = vmatpush2.bf16.msra.mxu0 0
      %556 = vmatprep.subr.bf16.mxu0 0
      %557 = vmatpush2.bf16.msra.mxu0 0
      %558 = vmatprep.subr.bf16.mxu0 0
      %559 = vmatpush2.bf16.msra.mxu0 0
      %560 = vmatprep.subr.bf16.mxu0 0
      %561 = vmatpush2.bf16.msra.mxu0 0
      %562 = vmatprep.subr.bf16.mxu0 0
      %563 = vmatpush2.bf16.msra.mxu0 0
      %564 = vmatprep.mubr.bf16.mxu0 0
      %565 = vmatmul.mubr.bf16.gmra.mxu0 %v456
      %v566 = vpop.f32.mrf.mxu0
      %v567 = vadd.f32 %v502, %v566
      %v568 = vpop.f32.mrf.mxu0
      %v569 = vpop.f32.mrf.mxu0
      %v570 = vadd.f32 %v505, %v569
      %v571 = vpop.f32.mrf.mxu0
      %572 = vmatprep.mubr.bf16.mxu0 0
      %573 = vmatmul.mubr.bf16.gmra.mxu0 %v459
      %v574 = vpop.f32.mrf.mxu0
      %v575 = vadd.f32 %v510, %v574
      %v576 = vpop.f32.mrf.mxu0
      %v577 = vpop.f32.mrf.mxu0
      %v578 = vadd.f32 %v513, %v577
      %v579 = vpop.f32.mrf.mxu0
      %580 = vmatprep.mubr.bf16.mxu0 0
      %581 = vmatmul.mubr.bf16.gmra.mxu0 %v462
      %v582 = vpop.f32.mrf.mxu0
      %v583 = vadd.f32 %v518, %v582
      %v584 = vpop.f32.mrf.mxu0
      %v585 = vpop.f32.mrf.mxu0
      %v586 = vadd.f32 %v521, %v585
      %v587 = vpop.f32.mrf.mxu0
      %588 = vmatprep.mubr.bf16.mxu0 0
      %589 = vmatmul.mubr.bf16.gmra.mxu0 %v465
      %v590 = vpop.f32.mrf.mxu0
      %v591 = vadd.f32 %v526, %v590
      %v592 = vpop.f32.mrf.mxu0
      %v593 = vpop.f32.mrf.mxu0
      %v594 = vadd.f32 %v529, %v593
      %v595 = vpop.f32.mrf.mxu0
      %596 = vdwg.mxu0
      %v597 = vld [vmem:[%s218] sm:$0xf]
      %v598 = vld [vmem:[%s218 + $0x4] sm:$0xf]
      %v599 = vld [vmem:[%s218 + $0x8] sm:$0xf]
      %v600 = vld [vmem:[%s218 + $0xc] sm:$0xf]
      %v601 = vld [vmem:[%s218 + $0x10] sm:$0xf]
      %v602 = vld [vmem:[%s218 + $0x14] sm:$0xf]
      %v603 = vld [vmem:[%s218 + $0x18] sm:$0xf]
      %v604 = vld [vmem:[%s218 + $0x1c] sm:$0xf]
      %v605 = vunpack.c.l.bf16 %v597
      %v606 = vunpack.c.l.bf16 %v598
      %v607 = vunpack.c.l.bf16 %v599
      %v608 = vunpack.c.l.bf16 %v600
      %v609 = vunpack.c.l.bf16 %v601
      %v610 = vunpack.c.l.bf16 %v602
      %v611 = vunpack.c.l.bf16 %v603
      %v612 = vunpack.c.l.bf16 %v604
      %v613 = vadd.f32 %v567, %v605
      %v614 = vadd.f32 %v570, %v606
      %v615 = vadd.f32 %v575, %v607
      %v616 = vadd.f32 %v578, %v608
      %v617 = vadd.f32 %v583, %v609
      %v618 = vadd.f32 %v586, %v610
      %v619 = vadd.f32 %v591, %v611
      %v620 = vadd.f32 %v594, %v612
      %v621 = vmax.f32 %v613, 0.0
      %v622 = vmax.f32 %v614, 0.0
      %v623 = vmax.f32 %v615, 0.0
      %v624 = vmax.f32 %v616, 0.0
      %v625 = vmax.f32 %v617, 0.0
      %v626 = vmax.f32 %v618, 0.0
      %v627 = vmax.f32 %v619, 0.0
      %v628 = vmax.f32 %v620, 0.0
      %v629 = vpack.c.bf16 %v622, %v621
      %v630 = vpack.c.bf16 %v624, %v623
      %v631 = vpack.c.bf16 %v626, %v625
      %v632 = vpack.c.bf16 %v628, %v627
      %v637 = vunpack.c.l.b16 %v629
      %v638 = vunpack.c.h.b16 %v629
      %v639 = vunpack.c.l.b16 %v630
      %v640 = vunpack.c.h.b16 %v630
      %v641 = vunpack.c.l.b16 %v631
      %v642 = vunpack.c.h.b16 %v631
      %v643 = vunpack.c.l.b16 %v632
      %v644 = vunpack.c.h.b16 %v632
      %v645 = vpack.c.b16 %v637, %v637
      %v646 = vpack.c.b16 %v638, %v638
      %v647 = vpack.c.b16 %v639, %v639
      %v648 = vpack.c.b16 %v640, %v640
      %v649 = vpack.c.b16 %v641, %v641
      %v650 = vpack.c.b16 %v642, %v642
      %v651 = vpack.c.b16 %v643, %v643
      %v652 = vpack.c.b16 %v644, %v644
      %661 = vst [vmem:[%s224] sm:$0xf] %v645
      %662 = vst [vmem:[%s224 + $0x4] sm:$0xf] %v646
      %663 = vst [vmem:[%s224 + $0x8] sm:$0xf] %v647
      %664 = vst [vmem:[%s224 + $0xc] sm:$0xf] %v648
      %665 = vst [vmem:[%s224 + $0x10] sm:$0xf] %v649
      %666 = vst [vmem:[%s224 + $0x14] sm:$0xf] %v650
      %667 = vst [vmem:[%s224 + $0x18] sm:$0xf] %v651
      %668 = vst [vmem:[%s224 + $0x1c] sm:$0xf] %v652
      %s669 = smul.u32 8, %s15
      %p670 = scmp.lt.s32.totalorder %s669, 15
      %s671 = scalar_select %p670, %s669, 15
      %s672 = smul.addr %s671, 4
      %s673 = scalar_lea.vmem %s4, %s672
      // Predicated region
      $region37: #{resnet_forward.21} parent=35 // pred_check
        %p674 = pneg %p127
      $region38: #{resnet_forward.21} parent=35 // pred_check_branch
        %676 = sbr.rel (%p674) target = $region40
      $region39: #{resnet_forward.21} parent=35 // pred_region
        %s677 = smul.u32 8, %s15
      $region40: #{resnet_forward.21} parent=35 // pred_fallthru
        _
    $region36: #{resnet_forward.21} parent=5 // pred_fallthru
      _
    %p678 = scmp.le.s32.totalorder 2, %s10
    // Predicated region
    $region41: #{resnet_forward.21} parent=5 // pred_check
      %p679 = pneg %p678
    $region42: #{resnet_forward.21} parent=5 // pred_check_branch
      %681 = sbr.rel (%p679) target = $region44
    $region43: #{resnet_forward.21} parent=5 // pred_region
      %s682 = ssub.s32 %s10, 2
      // Predicated region
      $region45: #{resnet_forward.21} parent=43 // pred_check
        %p683 = pneg %p133
      $region46: #{resnet_forward.21} parent=43 // pred_check_branch
        %685 = sbr.rel (%p683) target = $region48
      $region47: #{resnet_forward.21} parent=43 // pred_region
        %s686 = smul.u32 8, %s16
        %p687 = scmp.lt.s32.totalorder %s686, 15
        %s688 = scalar_select %p687, %s686, 15
        %s689 = smul.addr %s688, 4
        %s690 = scalar_lea.vmem %s4, %s689
      $region48: #{resnet_forward.21} parent=43 // pred_fallthru
        _
    $region44: #{resnet_forward.21} parent=5 // pred_fallthru
      _
  $region6: #{resnet_forward.21} parent=0 // loop_footer
    %s14 = sadd.s32 1, %s10
  $region7: #{resnet_forward.21} parent=0 // loop_footer_branch
    %9 = sbr.rel target = $region3
  $region8: #{resnet_forward.21} parent=0 // loop_exit
    _

// kernel: resnet_forward.23
$region0: #{resnet_forward.23}
  #allocation0 [shape = 'u32[]', space=smem, size = 0x4, offset = 0x4, fixed_abs, tag = 'smem constant byte address 0x4 - core index']
  #allocation1 [shape = 'u32[144,128]{1,0:T(1,128)}', space=vmem, size = 0x12000, scoped, tag = 'internal scratch']
  %s0 = inlined_call_operand.vmem [shape: bf16[128,288], index: 0, kind: input, shape index: {}]
  %s1 = inlined_call_operand.vmem [shape: bf16[288,128], index: 1, kind: input, shape index: {}]
  %s2 = inlined_call_operand.vmem [shape: f32[1,128], index: 2, kind: input, shape index: {}]
  %s3 = inlined_call_operand.vmem [shape: bf16[128,128], index: 3, kind: output, shape index: {}]
  %s4 = sld [smem:[#allocation0]]
  $region45: #{resnet_forward.23} parent=0
    _
  %s6 = ssub.s32 1, %s4
  %s7 = scalar_select 0, %s6, %s4
  loop: start=0, step=1, limit=4
  $region2: #{resnet_forward.23} parent=0 // loop_pre_header
    _
  $region3: #{resnet_forward.23} parent=0 // loop_header
    %s9 = sphi 0, %s13
    %p10 = scmp.ge.s32.totalorder %s9, 4
    %s19 = sphi 0, %s21
    %s22 = sphi 0, %s19
    %s23 = sphi 0, %s22
    %s39 = sphi 0, %s23
    %s43 = sphi 0, %s43
    %s45 = sphi 0, %s43
    %s46 = sphi 0, %s45
    %s60 = sphi 0, %s46
    %s64 = sphi 0, %s64
    %s66 = sphi 0, %s64
    %s67 = sphi 0, %s66
    %s81 = sphi 0, %s67
    %s87 = sphi 0, %s89
    %s90 = sphi 0, %s87
    %s91 = sphi 0, %s90
    %s107 = sphi 0, %s91
  $region4: #{resnet_forward.23} parent=0 // loop_header_branch
    %12 = sbr.rel (%p10) target = $region8
  $region5: #{resnet_forward.23} parent=0 // loop_body
    %s14 = ssub.s32 %s9, 1
    %s15 = ssub.s32 %s9, 2
    %s16 = sadd.s32 %s9, 1
    %s17 = ssub.s32 %s9, %s16
    %p18 = scmp.eq.s32.totalorder %s17, 0
    %s20 = sadd.s32 %s19, 1
    %s21 = scalar_select %p18, %s19, %s20
    %p24 = pneg %p18
    %p25 = scmp.eq.s32.totalorder %s9, 1
    %p26 = por %p24, %p25
    %p27 = scmp.ne.s32.totalorder %s19, %s22
    %p28 = scmp.eq.s32.totalorder %s9, 0
    %p29 = por %p27, %p28
    %p30 = scmp.ne.s32.totalorder %s19, %s22
    %p31 = scmp.eq.s32.totalorder %s14, 1
    %p32 = por %p30, %p31
    %p33 = scmp.ne.s32.totalorder %s22, %s23
    %p34 = scmp.eq.s32.totalorder %s14, 0
    %p35 = por %p33, %p34
    %p36 = scmp.ne.s32.totalorder %s22, %s23
    %p37 = scmp.eq.s32.totalorder %s15, 1
    %p38 = por %p36, %p37
    %p40 = scmp.ne.s32.totalorder %s23, %s39
    %p41 = scmp.eq.s32.totalorder %s15, 0
    %p42 = por %p40, %p41
    %s44 = sadd.s32 %s43, 1
    %p47 = scmp.eq.s32.totalorder %s9, 1
    %p48 = scmp.ne.s32.totalorder %s43, %s45
    %p49 = scmp.eq.s32.totalorder %s9, 0
    %p50 = por %p48, %p49
    %p51 = scmp.ne.s32.totalorder %s43, %s45
    %p52 = scmp.eq.s32.totalorder %s14, 1
    %p53 = por %p51, %p52
    %p54 = scmp.ne.s32.totalorder %s45, %s46
    %p55 = scmp.eq.s32.totalorder %s14, 0
    %p56 = por %p54, %p55
    %p57 = scmp.ne.s32.totalorder %s45, %s46
    %p58 = scmp.eq.s32.totalorder %s15, 1
    %p59 = por %p57, %p58
    %p61 = scmp.ne.s32.totalorder %s46, %s60
    %p62 = scmp.eq.s32.totalorder %s15, 0
    %p63 = por %p61, %p62
    %s65 = sadd.s32 %s64, 1
    %p68 = scmp.eq.s32.totalorder %s9, 1
    %p69 = scmp.ne.s32.totalorder %s64, %s66
    %p70 = scmp.eq.s32.totalorder %s9, 0
    %p71 = por %p69, %p70
    %p72 = scmp.ne.s32.totalorder %s64, %s66
    %p73 = scmp.eq.s32.totalorder %s14, 1
    %p74 = por %p72, %p73
    %p75 = scmp.ne.s32.totalorder %s66, %s67
    %p76 = scmp.eq.s32.totalorder %s14, 0
    %p77 = por %p75, %p76
    %p78 = scmp.ne.s32.totalorder %s66, %s67
    %p79 = scmp.eq.s32.totalorder %s15, 1
    %p80 = por %p78, %p79
    %p82 = scmp.ne.s32.totalorder %s67, %s81
    %p83 = scmp.eq.s32.totalorder %s15, 0
    %p84 = por %p82, %p83
    %s85 = ssub.s32 %s9, %s16
    %p86 = scmp.eq.s32.totalorder %s85, 0
    %s88 = sadd.s32 %s87, 1
    %s89 = scalar_select %p86, %s87, %s88
    %p92 = pneg %p86
    %p93 = scmp.eq.s32.totalorder %s9, 1
    %p94 = por %p92, %p93
    %p95 = scmp.ne.s32.totalorder %s87, %s90
    %p96 = scmp.eq.s32.totalorder %s9, 0
    %p97 = por %p95, %p96
    %p98 = scmp.ne.s32.totalorder %s87, %s90
    %p99 = scmp.eq.s32.totalorder %s14, 1
    %p100 = por %p98, %p99
    %p101 = scmp.ne.s32.totalorder %s90, %s91
    %p102 = scmp.eq.s32.totalorder %s14, 0
    %p103 = por %p101, %p102
    %p104 = scmp.ne.s32.totalorder %s90, %s91
    %p105 = scmp.eq.s32.totalorder %s15, 1
    %p106 = por %p104, %p105
    %p108 = scmp.ne.s32.totalorder %s91, %s107
    %p109 = scmp.eq.s32.totalorder %s15, 0
    %p110 = por %p108, %p109
    %p111 = scmp.le.s32.totalorder 1, %s9
    %p112 = scmp.lt.s32.totalorder %s9, 3
    %p113 = pnand %p111, %p112
    %p114 = pneg %p113
    // Predicated region
    $region9: #{resnet_forward.23} parent=5 // pred_check
      _
    $region10: #{resnet_forward.23} parent=5 // pred_check_branch
      %116 = sbr.rel (%p113) target = $region12
    $region11: #{resnet_forward.23} parent=5 // pred_region
      %s117 = ssub.s32 %s9, 1
      // Predicated region
      $region13: #{resnet_forward.23} parent=11 // pred_check
        %p118 = pneg %p56
      $region14: #{resnet_forward.23} parent=11 // pred_check_branch
        %120 = sbr.rel (%p118) target = $region16
      $region15: #{resnet_forward.23} parent=11 // pred_region
        _
      $region16: #{resnet_forward.23} parent=11 // pred_fallthru
        _
      // Predicated region
      $region17: #{resnet_forward.23} parent=11 // pred_check
        %p121 = pneg %p77
      $region18: #{resnet_forward.23} parent=11 // pred_check_branch
        %123 = sbr.rel (%p121) target = $region20
      $region19: #{resnet_forward.23} parent=11 // pred_region
        _
      $region20: #{resnet_forward.23} parent=11 // pred_fallthru
        _
    $region12: #{resnet_forward.23} parent=5 // pred_fallthru
      _
    %p124 = scmp.lt.s32.totalorder %s9, 2
    // Predicated region
    $region21: #{resnet_forward.23} parent=5 // pred_check
      %p125 = pneg %p124
    $region22: #{resnet_forward.23} parent=5 // pred_check_branch
      %127 = sbr.rel (%p125) target = $region24
    $region23: #{resnet_forward.23} parent=5 // pred_region
      // Predicated region
      $region25: #{resnet_forward.23} parent=23 // pred_check
        %p128 = pneg %p29
      $region26: #{resnet_forward.23} parent=23 // pred_check_branch
        %130 = sbr.rel (%p128) target = $region28
      $region27: #{resnet_forward.23} parent=23 // pred_region
        %s131 = smul.u32 8, %s9
        %p132 = scmp.lt.s32.totalorder %s131, 15
        %s133 = scalar_select %p132, %s131, 15
        %s134 = smul.addr %s133, 3
        %s135 = smul.addr %s134, 4
        %s136 = scalar_lea.vmem %s0, %s135
        %s137 = smul.u32 8, %s9
      $region28: #{resnet_forward.23} parent=23 // pred_fallthru
        _
    $region24: #{resnet_forward.23} parent=5 // pred_fallthru
      _
    %p138 = scmp.le.s32.totalorder 1, %s9
    %p139 = scmp.lt.s32.totalorder %s9, 3
    %p140 = pnand %p138, %p139
    %p141 = pneg %p140
    // Predicated region
    $region29: #{resnet_forward.23} parent=5 // pred_check
      _
    $region30: #{resnet_forward.23} parent=5 // pred_check_branch
      %143 = sbr.rel (%p140) target = $region32
    $region31: #{resnet_forward.23} parent=5 // pred_region
      %s144 = ssub.s32 %s9, 1
      %s145 = smul.u32 8, %s14
      %p146 = scmp.lt.s32.totalorder %s145, 15
      %s147 = scalar_select %p146, %s145, 15
      %s148 = smul.addr %s147, 3
      %s149 = smul.addr %s148, 4
      %s150 = scalar_lea.vmem %s0, %s149
      %p151 = pneg %p35
      %p152 = pneg %p32
      %p153 = pneg %p56
      %p154 = pneg %p53
      %p155 = pneg %p77
      %p156 = pneg %p74
      %p157 = pneg %p103
      %p158 = pneg %p100
      %s159 = smul.u32 8, %s14
      %p160 = scmp.lt.s32.totalorder %s159, 15
      %s161 = scalar_select %p160, %s159, 15
      %s162 = smul.addr %s161, 4
      %s163 = scalar_lea.vmem %s3, %s162
      %s164 = smul.u32 8, %s14
      %p165 = scmp.lt.s32.totalorder %s164, 15
      %s166 = scalar_select %p165, %s164, 15
      %s167 = smul.addr %s166, 3
      %s168 = smul.addr %s167, 4
      %s169 = scalar_lea.vmem %s0, %s168
      %s170 = smul.u32 8, %s14
      %s171 = smul.u32 8, %s14
      %p172 = scmp.lt.s32.totalorder %s171, 15
      %s173 = scalar_select %p172, %s171, 15
      %s174 = smul.addr %s173, 4
      %s175 = scalar_lea.vmem %s3, %s174
      %s176 = smul.u32 8, %s14
      %v178 = vld [vmem:[%s169] sm:$0xff]
      %v179 = vld [vmem:[%s169 + $0x8] sm:$0xf]
      %v180 = vld [vmem:[%s169 + $0xc] sm:$0xff]
      %v181 = vld [vmem:[%s169 + $0x14] sm:$0xf]
      %v182 = vld [vmem:[%s169 + $0x18] sm:$0xff]
      %v183 = vld [vmem:[%s169 + $0x20] sm:$0xf]
      %v184 = vld [vmem:[%s169 + $0x24] sm:$0xff]
      %v185 = vld [vmem:[%s169 + $0x2c] sm:$0xf]
      %v186 = vld [vmem:[%s169 + $0x30] sm:$0xff]
      %v187 = vld [vmem:[%s169 + $0x38] sm:$0xf]
      %v188 = vld [vmem:[%s169 + $0x3c] sm:$0xff]
      %v189 = vld [vmem:[%s169 + $0x44] sm:$0xf]
      %v190 = vld [vmem:[%s169 + $0x48] sm:$0xff]
      %v191 = vld [vmem:[%s169 + $0x50] sm:$0xf]
      %v192 = vld [vmem:[%s169 + $0x54] sm:$0xff]
      %v193 = vld [vmem:[%s169 + $0x5c] sm:$0xf]
      %v194 = vld [vmem:[%s1] sm:$0xf]
      %v195 = vld [vmem:[%s1 + $0x4] sm:$0xf]
      %v196 = vld [vmem:[%s1 + $0x8] sm:$0xf]
      %v197 = vld [vmem:[%s1 + $0xc] sm:$0xf]
      %v198 = vld [vmem:[%s1 + $0x10] sm:$0xf]
      %v199 = vld [vmem:[%s1 + $0x14] sm:$0xf]
      %v200 = vld [vmem:[%s1 + $0x18] sm:$0xf]
      %v201 = vld [vmem:[%s1 + $0x1c] sm:$0xf]
      %v202 = vld [vmem:[%s1 + $0x20] sm:$0xf]
      %v203 = vld [vmem:[%s1 + $0x24] sm:$0xf]
      %v204 = vld [vmem:[%s1 + $0x28] sm:$0xf]
      %v205 = vld [vmem:[%s1 + $0x2c] sm:$0xf]
      %v206 = vld [vmem:[%s1 + $0x30] sm:$0xf]
      %v207 = vld [vmem:[%s1 + $0x34] sm:$0xf]
      %v208 = vld [vmem:[%s1 + $0x38] sm:$0xf]
      %v209 = vld [vmem:[%s1 + $0x3c] sm:$0xf]
      %v210 = vld [vmem:[%s1 + $0x40] sm:$0xf]
      %v211 = vld [vmem:[%s1 + $0x44] sm:$0xf]
      %v212 = vld [vmem:[%s1 + $0x48] sm:$0xf]
      %v213 = vld [vmem:[%s1 + $0x4c] sm:$0xf]
      %v214 = vld [vmem:[%s1 + $0x50] sm:$0xf]
      %v215 = vld [vmem:[%s1 + $0x54] sm:$0xf]
      %v216 = vld [vmem:[%s1 + $0x58] sm:$0xf]
      %v217 = vld [vmem:[%s1 + $0x5c] sm:$0xf]
      %v218 = vld [vmem:[%s1 + $0x60] sm:$0xf]
      %v219 = vld [vmem:[%s1 + $0x64] sm:$0xf]
      %v220 = vld [vmem:[%s1 + $0x68] sm:$0xf]
      %v221 = vld [vmem:[%s1 + $0x6c] sm:$0xf]
      %v222 = vld [vmem:[%s1 + $0x70] sm:$0xf]
      %v223 = vld [vmem:[%s1 + $0x74] sm:$0xf]
      %v224 = vld [vmem:[%s1 + $0x78] sm:$0xf]
      %v225 = vld [vmem:[%s1 + $0x7c] sm:$0xf]
      %v226 = vld [vmem:[%s1 + $0x80] sm:$0xf]
      %v227 = vld [vmem:[%s1 + $0x84] sm:$0xf]
      %v228 = vld [vmem:[%s1 + $0x88] sm:$0xf]
      %v229 = vld [vmem:[%s1 + $0x8c] sm:$0xf]
      %v230 = vld [vmem:[%s2] sm:$0x1]
      %v232 = vlaneseq
      %v233 = vshrl.u32 %v232, 7
      %v234 = vsub.s32 0, %v233
      %v235 = vrot.slane %v230, %v234
      %v253 = vunpack.c.l.b16 %v178
      %v254 = vunpack.c.h.b16 %v178
      %v255 = vunpack.c.l.b16 %v179
      %v256 = vunpack.c.l.b16 %v180
      %v257 = vunpack.c.h.b16 %v180
      %v258 = vunpack.c.l.b16 %v181
      %v259 = vunpack.c.l.b16 %v182
      %v260 = vunpack.c.h.b16 %v182
      %v261 = vunpack.c.l.b16 %v183
      %v262 = vunpack.c.l.b16 %v184
      %v263 = vunpack.c.h.b16 %v184
      %v264 = vunpack.c.l.b16 %v185
      %v265 = vunpack.c.l.b16 %v186
      %v266 = vunpack.c.h.b16 %v186
      %v267 = vunpack.c.l.b16 %v187
      %v268 = vunpack.c.l.b16 %v188
      %v269 = vunpack.c.h.b16 %v188
      %v270 = vunpack.c.l.b16 %v189
      %v271 = vunpack.c.l.b16 %v190
      %v272 = vunpack.c.h.b16 %v190
      %v273 = vunpack.c.l.b16 %v191
      %v274 = vunpack.c.l.b16 %v192
      %v275 = vunpack.c.h.b16 %v192
      %v276 = vunpack.c.l.b16 %v193
      %v277 = vpack.c.b16 %v256, %v253
      %v278 = vpack.c.b16 %v257, %v254
      %v279 = vpack.c.b16 %v258, %v255
      %v280 = vpack.c.b16 %v262, %v259
      %v281 = vpack.c.b16 %v263, %v260
      %v282 = vpack.c.b16 %v264, %v261
      %v283 = vpack.c.b16 %v268, %v265
      %v284 = vpack.c.b16 %v269, %v266
      %v285 = vpack.c.b16 %v270, %v267
      %v286 = vpack.c.b16 %v274, %v271
      %v287 = vpack.c.b16 %v275, %v272
      %v288 = vpack.c.b16 %v276, %v273
      %v333 = vunpack.c.l.b16 %v194
      %v334 = vunpack.c.l.b16 %v195
      %v335 = vunpack.c.l.b16 %v196
      %v336 = vunpack.c.l.b16 %v197
      %v337 = vunpack.c.l.b16 %v198
      %v338 = vunpack.c.l.b16 %v199
      %v339 = vunpack.c.l.b16 %v200
      %v340 = vunpack.c.l.b16 %v201
      %v341 = vunpack.c.l.b16 %v202
      %v342 = vunpack.c.l.b16 %v203
      %v343 = vunpack.c.l.b16 %v204
      %v344 = vunpack.c.l.b16 %v205
      %v345 = vunpack.c.l.b16 %v206
      %v346 = vunpack.c.l.b16 %v207
      %v347 = vunpack.c.l.b16 %v208
      %v348 = vunpack.c.l.b16 %v209
      %v349 = vunpack.c.l.b16 %v210
      %v350 = vunpack.c.l.b16 %v211
      %v351 = vunpack.c.l.b16 %v212
      %v352 = vunpack.c.l.b16 %v213
      %v353 = vunpack.c.l.b16 %v214
      %v354 = vunpack.c.l.b16 %v215
      %v355 = vunpack.c.l.b16 %v216
      %v356 = vunpack.c.l.b16 %v217
      %v357 = vunpack.c.l.b16 %v218
      %v358 = vunpack.c.l.b16 %v219
      %v359 = vunpack.c.l.b16 %v220
      %v360 = vunpack.c.l.b16 %v221
      %v361 = vunpack.c.l.b16 %v222
      %v362 = vunpack.c.l.b16 %v223
      %v363 = vunpack.c.l.b16 %v224
      %v364 = vunpack.c.l.b16 %v225
      %v365 = vunpack.c.l.b16 %v226
      %v366 = vunpack.c.l.b16 %v227
      %v367 = vunpack.c.l.b16 %v228
      %v368 = vunpack.c.l.b16 %v229
      %v369 = vpack.c.b16 %v334, %v333
      %v370 = vpack.c.b16 %v336, %v335
      %v371 = vpack.c.b16 %v338, %v337
      %v372 = vpack.c.b16 %v340, %v339
      %v373 = vpack.c.b16 %v342, %v341
      %v374 = vpack.c.b16 %v344, %v343
      %v375 = vpack.c.b16 %v346, %v345
      %v376 = vpack.c.b16 %v348, %v347
      %v377 = vpack.c.b16 %v350, %v349
      %v378 = vpack.c.b16 %v352, %v351
      %v379 = vpack.c.b16 %v354, %v353
      %v380 = vpack.c.b16 %v356, %v355
      %v381 = vpack.c.b16 %v358, %v357
      %v382 = vpack.c.b16 %v360, %v359
      %v383 = vpack.c.b16 %v362, %v361
      %v384 = vpack.c.b16 %v364, %v363
      %v385 = vpack.c.b16 %v366, %v365
      %v386 = vpack.c.b16 %v368, %v367
      %vm405 = vcmask 261120
      %v407 = vsel %vm405, %v279, 0
      %v410 = vsel %vm405, %v282, 0
      %v413 = vsel %vm405, %v285, 0
      %v416 = vsel %vm405, %v288, 0
      %418 = vmatprep.subr.bf16.mxu0 0
      %419 = vmatpush1.bf16.msra.mxu0 %v376
      %420 = vmatprep.subr.bf16.mxu0 0
      %421 = vmatpush1.bf16.msra.mxu0 %v375
      %422 = vmatprep.subr.bf16.mxu0 0
      %423 = vmatpush1.bf16.msra.mxu0 %v374
      %424 = vmatprep.subr.bf16.mxu0 0
      %425 = vmatpush1.bf16.msra.mxu0 %v373
      %426 = vmatprep.subr.bf16.mxu0 0
      %427 = vmatpush1.bf16.msra.mxu0 %v372
      %428 = vmatprep.subr.bf16.mxu0 0
      %429 = vmatpush1.bf16.msra.mxu0 %v371
      %430 = vmatprep.subr.bf16.mxu0 0
      %431 = vmatpush1.bf16.msra.mxu0 %v370
      %432 = vmatprep.subr.bf16.mxu0 0
      %433 = vmatpush1.bf16.msra.mxu0 %v369
      %434 = vmatprep.subr.bf16.mxu0 0
      %435 = vmatpush2.bf16.msra.mxu0 %v384
      %436 = vmatprep.subr.bf16.mxu0 0
      %437 = vmatpush2.bf16.msra.mxu0 %v383
      %438 = vmatprep.subr.bf16.mxu0 0
      %439 = vmatpush2.bf16.msra.mxu0 %v382
      %440 = vmatprep.subr.bf16.mxu0 0
      %441 = vmatpush2.bf16.msra.mxu0 %v381
      %442 = vmatprep.subr.bf16.mxu0 0
      %443 = vmatpush2.bf16.msra.mxu0 %v380
      %444 = vmatprep.subr.bf16.mxu0 0
      %445 = vmatpush2.bf16.msra.mxu0 %v379
      %446 = vmatprep.subr.bf16.mxu0 0
      %447 = vmatpush2.bf16.msra.mxu0 %v378
      %448 = vmatprep.subr.bf16.mxu0 0
      %449 = vmatpush2.bf16.msra.mxu0 %v377
      %450 = vmatprep.mubr.bf16.mxu0 %v278
      %451 = vmatmul.mubr.bf16.gmra.mxu0 %v277
      %v452 = vpop.f32.mrf.mxu0
      %v453 = vadd.f32 %v235, %v452
      %v454 = vpop.f32.mrf.mxu0
      %v455 = vpop.f32.mrf.mxu0
      %v456 = vadd.f32 %v235, %v455
      %v457 = vpop.f32.mrf.mxu0
      %458 = vmatprep.mubr.bf16.mxu0 %v281
      %459 = vmatmul.mubr.bf16.gmra.mxu0 %v280
      %v460 = vpop.f32.mrf.mxu0
      %v461 = vadd.f32 %v235, %v460
      %v462 = vpop.f32.mrf.mxu0
      %v463 = vpop.f32.mrf.mxu0
      %v464 = vadd.f32 %v235, %v463
      %v465 = vpop.f32.mrf.mxu0
      %466 = vmatprep.mubr.bf16.mxu0 %v284
      %467 = vmatmul.mubr.bf16.gmra.mxu0 %v283
      %v468 = vpop.f32.mrf.mxu0
      %v469 = vadd.f32 %v235, %v468
      %v470 = vpop.f32.mrf.mxu0
      %v471 = vpop.f32.mrf.mxu0
      %v472 = vadd.f32 %v235, %v471
      %v473 = vpop.f32.mrf.mxu0
      %474 = vmatprep.mubr.bf16.mxu0 %v287
      %475 = vmatmul.mubr.bf16.gmra.mxu0 %v286
      %v476 = vpop.f32.mrf.mxu0
      %v477 = vadd.f32 %v235, %v476
      %v478 = vpop.f32.mrf.mxu0
      %v479 = vpop.f32.mrf.mxu0
      %v480 = vadd.f32 %v235, %v479
      %v481 = vpop.f32.mrf.mxu0
      %482 = vdwg.mxu0
      %483 = vmatprep.subr.bf16.mxu0 0
      %484 = vmatpush1.bf16.msra.mxu0 0
      %485 = vmatprep.subr.bf16.mxu0 0
      %486 = vmatpush1.bf16.msra.mxu0 0
      %487 = vmatprep.subr.bf16.mxu0 0
      %488 = vmatpush1.bf16.msra.mxu0 0
      %489 = vmatprep.subr.bf16.mxu0 0
      %490 = vmatpush1.bf16.msra.mxu0 0
      %491 = vmatprep.subr.bf16.mxu0 0
      %492 = vmatpush1.bf16.msra.mxu0 0
      %493 = vmatprep.subr.bf16.mxu0 0
      %494 = vmatpush1.bf16.msra.mxu0 0
      %495 = vmatprep.subr.bf16.mxu0 0
      %496 = vmatpush1.bf16.msra.mxu0 %v386
      %497 = vmatprep.subr.bf16.mxu0 0
      %498 = vmatpush1.bf16.msra.mxu0 %v385
      %499 = vmatprep.subr.bf16.mxu0 0
      %500 = vmatpush2.bf16.msra.mxu0 0
      %501 = vmatprep.subr.bf16.mxu0 0
      %502 = vmatpush2.bf16.msra.mxu0 0
      %503 = vmatprep.subr.bf16.mxu0 0
      %504 = vmatpush2.bf16.msra.mxu0 0
      %505 = vmatprep.subr.bf16.mxu0 0
      %506 = vmatpush2.bf16.msra.mxu0 0
      %507 = vmatprep.subr.bf16.mxu0 0
      %508 = vmatpush2.bf16.msra.mxu0 0
      %509 = vmatprep.subr.bf16.mxu0 0
      %510 = vmatpush2.bf16.msra.mxu0 0
      %511 = vmatprep.subr.bf16.mxu0 0
      %512 = vmatpush2.bf16.msra.mxu0 0
      %513 = vmatprep.subr.bf16.mxu0 0
      %514 = vmatpush2.bf16.msra.mxu0 0
      %515 = vmatprep.mubr.bf16.mxu0 0
      %516 = vmatmul.mubr.bf16.gmra.mxu0 %v407
      %v517 = vpop.f32.mrf.mxu0
      %v518 = vadd.f32 %v453, %v517
      %v519 = vpop.f32.mrf.mxu0
      %v520 = vpop.f32.mrf.mxu0
      %v521 = vadd.f32 %v456, %v520
      %v522 = vpop.f32.mrf.mxu0
      %523 = vmatprep.mubr.bf16.mxu0 0
      %524 = vmatmul.mubr.bf16.gmra.mxu0 %v410
      %v525 = vpop.f32.mrf.mxu0
      %v526 = vadd.f32 %v461, %v525
      %v527 = vpop.f32.mrf.mxu0
      %v528 = vpop.f32.mrf.mxu0
      %v529 = vadd.f32 %v464, %v528
      %v530 = vpop.f32.mrf.mxu0
      %531 = vmatprep.mubr.bf16.mxu0 0
      %532 = vmatmul.mubr.bf16.gmra.mxu0 %v413
      %v533 = vpop.f32.mrf.mxu0
      %v534 = vadd.f32 %v469, %v533
      %v535 = vpop.f32.mrf.mxu0
      %v536 = vpop.f32.mrf.mxu0
      %v537 = vadd.f32 %v472, %v536
      %v538 = vpop.f32.mrf.mxu0
      %539 = vmatprep.mubr.bf16.mxu0 0
      %540 = vmatmul.mubr.bf16.gmra.mxu0 %v416
      %v541 = vpop.f32.mrf.mxu0
      %v542 = vadd.f32 %v477, %v541
      %v543 = vpop.f32.mrf.mxu0
      %v544 = vpop.f32.mrf.mxu0
      %v545 = vadd.f32 %v480, %v544
      %v546 = vpop.f32.mrf.mxu0
      %547 = vdwg.mxu0
      %v548 = vmax.f32 %v518, 0.0
      %v549 = vmax.f32 %v521, 0.0
      %v550 = vmax.f32 %v526, 0.0
      %v551 = vmax.f32 %v529, 0.0
      %v552 = vmax.f32 %v534, 0.0
      %v553 = vmax.f32 %v537, 0.0
      %v554 = vmax.f32 %v542, 0.0
      %v555 = vmax.f32 %v545, 0.0
      %v556 = vpack.c.bf16 %v549, %v548
      %v557 = vpack.c.bf16 %v551, %v550
      %v558 = vpack.c.bf16 %v553, %v552
      %v559 = vpack.c.bf16 %v555, %v554
      %v564 = vunpack.c.l.b16 %v556
      %v565 = vunpack.c.h.b16 %v556
      %v566 = vunpack.c.l.b16 %v557
      %v567 = vunpack.c.h.b16 %v557
      %v568 = vunpack.c.l.b16 %v558
      %v569 = vunpack.c.h.b16 %v558
      %v570 = vunpack.c.l.b16 %v559
      %v571 = vunpack.c.h.b16 %v559
      %v572 = vpack.c.b16 %v564, %v564
      %v573 = vpack.c.b16 %v565, %v565
      %v574 = vpack.c.b16 %v566, %v566
      %v575 = vpack.c.b16 %v567, %v567
      %v576 = vpack.c.b16 %v568, %v568
      %v577 = vpack.c.b16 %v569, %v569
      %v578 = vpack.c.b16 %v570, %v570
      %v579 = vpack.c.b16 %v571, %v571
      %588 = vst [vmem:[%s175] sm:$0xf] %v572
      %589 = vst [vmem:[%s175 + $0x4] sm:$0xf] %v573
      %590 = vst [vmem:[%s175 + $0x8] sm:$0xf] %v574
      %591 = vst [vmem:[%s175 + $0xc] sm:$0xf] %v575
      %592 = vst [vmem:[%s175 + $0x10] sm:$0xf] %v576
      %593 = vst [vmem:[%s175 + $0x14] sm:$0xf] %v577
      %594 = vst [vmem:[%s175 + $0x18] sm:$0xf] %v578
      %595 = vst [vmem:[%s175 + $0x1c] sm:$0xf] %v579
      %s596 = smul.u32 8, %s14
      %p597 = scmp.lt.s32.totalorder %s596, 15
      %s598 = scalar_select %p597, %s596, 15
      %s599 = smul.addr %s598, 4
      %s600 = scalar_lea.vmem %s3, %s599
      // Predicated region
      $region33: #{resnet_forward.23} parent=31 // pred_check
        %p601 = pneg %p100
      $region34: #{resnet_forward.23} parent=31 // pred_check_branch
        %603 = sbr.rel (%p601) target = $region36
      $region35: #{resnet_forward.23} parent=31 // pred_region
        %s604 = smul.u32 8, %s14
      $region36: #{resnet_forward.23} parent=31 // pred_fallthru
        _
    $region32: #{resnet_forward.23} parent=5 // pred_fallthru
      _
    %p605 = scmp.le.s32.totalorder 2, %s9
    // Predicated region
    $region37: #{resnet_forward.23} parent=5 // pred_check
      %p606 = pneg %p605
    $region38: #{resnet_forward.23} parent=5 // pred_check_branch
      %608 = sbr.rel (%p606) target = $region40
    $region39: #{resnet_forward.23} parent=5 // pred_region
      %s609 = ssub.s32 %s9, 2
      // Predicated region
      $region41: #{resnet_forward.23} parent=39 // pred_check
        %p610 = pneg %p106
      $region42: #{resnet_forward.23} parent=39 // pred_check_branch
        %612 = sbr.rel (%p610) target = $region44
      $region43: #{resnet_forward.23} parent=39 // pred_region
        %s613 = smul.u32 8, %s15
        %p614 = scmp.lt.s32.totalorder %s613, 15
        %s615 = scalar_select %p614, %s613, 15
        %s616 = smul.addr %s615, 4
        %s617 = scalar_lea.vmem %s3, %s616
      $region44: #{resnet_forward.23} parent=39 // pred_fallthru
        _
    $region40: #{resnet_forward.23} parent=5 // pred_fallthru
      _
  $region6: #{resnet_forward.23} parent=0 // loop_footer
    %s13 = sadd.s32 1, %s9
  $region7: #{resnet_forward.23} parent=0 // loop_footer_branch
    %8 = sbr.rel target = $region3
  $region8: #{resnet_forward.23} parent=0 // loop_exit
    _

// kernel: resnet_forward.22
$region0: #{resnet_forward.22}
  #allocation0 [shape = 'u32[]', space=smem, size = 0x4, offset = 0x4, fixed_abs, tag = 'smem constant byte address 0x4 - core index']
  #allocation1 [shape = 'u32[144,128]{1,0:T(1,128)}', space=vmem, size = 0x12000, scoped, tag = 'internal scratch']
  %s0 = inlined_call_operand.vmem [shape: bf16[128,32], index: 0, kind: input, shape index: {}]
  %s1 = inlined_call_operand.vmem [shape: bf16[32,128], index: 1, kind: input, shape index: {}]
  %s2 = inlined_call_operand.vmem [shape: f32[1,128], index: 2, kind: input, shape index: {}]
  %s3 = inlined_call_operand.vmem [shape: bf16[128,128], index: 3, kind: output, shape index: {}]
  %s4 = sld [smem:[#allocation0]]
  $region45: #{resnet_forward.22} parent=0
    _
  %s6 = ssub.s32 1, %s4
  %s7 = scalar_select 0, %s6, %s4
  loop: start=0, step=1, limit=4
  $region2: #{resnet_forward.22} parent=0 // loop_pre_header
    _
  $region3: #{resnet_forward.22} parent=0 // loop_header
    %s9 = sphi 0, %s13
    %p10 = scmp.ge.s32.totalorder %s9, 4
    %s19 = sphi 0, %s21
    %s22 = sphi 0, %s19
    %s23 = sphi 0, %s22
    %s39 = sphi 0, %s23
    %s43 = sphi 0, %s43
    %s45 = sphi 0, %s43
    %s46 = sphi 0, %s45
    %s60 = sphi 0, %s46
    %s64 = sphi 0, %s64
    %s66 = sphi 0, %s64
    %s67 = sphi 0, %s66
    %s81 = sphi 0, %s67
    %s87 = sphi 0, %s89
    %s90 = sphi 0, %s87
    %s91 = sphi 0, %s90
    %s107 = sphi 0, %s91
  $region4: #{resnet_forward.22} parent=0 // loop_header_branch
    %12 = sbr.rel (%p10) target = $region8
  $region5: #{resnet_forward.22} parent=0 // loop_body
    %s14 = ssub.s32 %s9, 1
    %s15 = ssub.s32 %s9, 2
    %s16 = sadd.s32 %s9, 1
    %s17 = ssub.s32 %s9, %s16
    %p18 = scmp.eq.s32.totalorder %s17, 0
    %s20 = sadd.s32 %s19, 1
    %s21 = scalar_select %p18, %s19, %s20
    %p24 = pneg %p18
    %p25 = scmp.eq.s32.totalorder %s9, 1
    %p26 = por %p24, %p25
    %p27 = scmp.ne.s32.totalorder %s19, %s22
    %p28 = scmp.eq.s32.totalorder %s9, 0
    %p29 = por %p27, %p28
    %p30 = scmp.ne.s32.totalorder %s19, %s22
    %p31 = scmp.eq.s32.totalorder %s14, 1
    %p32 = por %p30, %p31
    %p33 = scmp.ne.s32.totalorder %s22, %s23
    %p34 = scmp.eq.s32.totalorder %s14, 0
    %p35 = por %p33, %p34
    %p36 = scmp.ne.s32.totalorder %s22, %s23
    %p37 = scmp.eq.s32.totalorder %s15, 1
    %p38 = por %p36, %p37
    %p40 = scmp.ne.s32.totalorder %s23, %s39
    %p41 = scmp.eq.s32.totalorder %s15, 0
    %p42 = por %p40, %p41
    %s44 = sadd.s32 %s43, 1
    %p47 = scmp.eq.s32.totalorder %s9, 1
    %p48 = scmp.ne.s32.totalorder %s43, %s45
    %p49 = scmp.eq.s32.totalorder %s9, 0
    %p50 = por %p48, %p49
    %p51 = scmp.ne.s32.totalorder %s43, %s45
    %p52 = scmp.eq.s32.totalorder %s14, 1
    %p53 = por %p51, %p52
    %p54 = scmp.ne.s32.totalorder %s45, %s46
    %p55 = scmp.eq.s32.totalorder %s14, 0
    %p56 = por %p54, %p55
    %p57 = scmp.ne.s32.totalorder %s45, %s46
    %p58 = scmp.eq.s32.totalorder %s15, 1
    %p59 = por %p57, %p58
    %p61 = scmp.ne.s32.totalorder %s46, %s60
    %p62 = scmp.eq.s32.totalorder %s15, 0
    %p63 = por %p61, %p62
    %s65 = sadd.s32 %s64, 1
    %p68 = scmp.eq.s32.totalorder %s9, 1
    %p69 = scmp.ne.s32.totalorder %s64, %s66
    %p70 = scmp.eq.s32.totalorder %s9, 0
    %p71 = por %p69, %p70
    %p72 = scmp.ne.s32.totalorder %s64, %s66
    %p73 = scmp.eq.s32.totalorder %s14, 1
    %p74 = por %p72, %p73
    %p75 = scmp.ne.s32.totalorder %s66, %s67
    %p76 = scmp.eq.s32.totalorder %s14, 0
    %p77 = por %p75, %p76
    %p78 = scmp.ne.s32.totalorder %s66, %s67
    %p79 = scmp.eq.s32.totalorder %s15, 1
    %p80 = por %p78, %p79
    %p82 = scmp.ne.s32.totalorder %s67, %s81
    %p83 = scmp.eq.s32.totalorder %s15, 0
    %p84 = por %p82, %p83
    %s85 = ssub.s32 %s9, %s16
    %p86 = scmp.eq.s32.totalorder %s85, 0
    %s88 = sadd.s32 %s87, 1
    %s89 = scalar_select %p86, %s87, %s88
    %p92 = pneg %p86
    %p93 = scmp.eq.s32.totalorder %s9, 1
    %p94 = por %p92, %p93
    %p95 = scmp.ne.s32.totalorder %s87, %s90
    %p96 = scmp.eq.s32.totalorder %s9, 0
    %p97 = por %p95, %p96
    %p98 = scmp.ne.s32.totalorder %s87, %s90
    %p99 = scmp.eq.s32.totalorder %s14, 1
    %p100 = por %p98, %p99
    %p101 = scmp.ne.s32.totalorder %s90, %s91
    %p102 = scmp.eq.s32.totalorder %s14, 0
    %p103 = por %p101, %p102
    %p104 = scmp.ne.s32.totalorder %s90, %s91
    %p105 = scmp.eq.s32.totalorder %s15, 1
    %p106 = por %p104, %p105
    %p108 = scmp.ne.s32.totalorder %s91, %s107
    %p109 = scmp.eq.s32.totalorder %s15, 0
    %p110 = por %p108, %p109
    %p111 = scmp.le.s32.totalorder 1, %s9
    %p112 = scmp.lt.s32.totalorder %s9, 3
    %p113 = pnand %p111, %p112
    %p114 = pneg %p113
    // Predicated region
    $region9: #{resnet_forward.22} parent=5 // pred_check
      _
    $region10: #{resnet_forward.22} parent=5 // pred_check_branch
      %116 = sbr.rel (%p113) target = $region12
    $region11: #{resnet_forward.22} parent=5 // pred_region
      %s117 = ssub.s32 %s9, 1
      // Predicated region
      $region13: #{resnet_forward.22} parent=11 // pred_check
        %p118 = pneg %p56
      $region14: #{resnet_forward.22} parent=11 // pred_check_branch
        %120 = sbr.rel (%p118) target = $region16
      $region15: #{resnet_forward.22} parent=11 // pred_region
        _
      $region16: #{resnet_forward.22} parent=11 // pred_fallthru
        _
      // Predicated region
      $region17: #{resnet_forward.22} parent=11 // pred_check
        %p121 = pneg %p77
      $region18: #{resnet_forward.22} parent=11 // pred_check_branch
        %123 = sbr.rel (%p121) target = $region20
      $region19: #{resnet_forward.22} parent=11 // pred_region
        _
      $region20: #{resnet_forward.22} parent=11 // pred_fallthru
        _
    $region12: #{resnet_forward.22} parent=5 // pred_fallthru
      _
    %p124 = scmp.lt.s32.totalorder %s9, 2
    // Predicated region
    $region21: #{resnet_forward.22} parent=5 // pred_check
      %p125 = pneg %p124
    $region22: #{resnet_forward.22} parent=5 // pred_check_branch
      %127 = sbr.rel (%p125) target = $region24
    $region23: #{resnet_forward.22} parent=5 // pred_region
      // Predicated region
      $region25: #{resnet_forward.22} parent=23 // pred_check
        %p128 = pneg %p29
      $region26: #{resnet_forward.22} parent=23 // pred_check_branch
        %130 = sbr.rel (%p128) target = $region28
      $region27: #{resnet_forward.22} parent=23 // pred_region
        %s131 = smul.u32 8, %s9
        %p132 = scmp.lt.s32.totalorder %s131, 15
        %s133 = scalar_select %p132, %s131, 15
        %s134 = smul.addr %s133, 4
        %s135 = scalar_lea.vmem %s0, %s134
        %s136 = smul.u32 8, %s9
      $region28: #{resnet_forward.22} parent=23 // pred_fallthru
        _
    $region24: #{resnet_forward.22} parent=5 // pred_fallthru
      _
    %p137 = scmp.le.s32.totalorder 1, %s9
    %p138 = scmp.lt.s32.totalorder %s9, 3
    %p139 = pnand %p137, %p138
    %p140 = pneg %p139
    // Predicated region
    $region29: #{resnet_forward.22} parent=5 // pred_check
      _
    $region30: #{resnet_forward.22} parent=5 // pred_check_branch
      %142 = sbr.rel (%p139) target = $region32
    $region31: #{resnet_forward.22} parent=5 // pred_region
      %s143 = ssub.s32 %s9, 1
      %s144 = smul.u32 8, %s14
      %p145 = scmp.lt.s32.totalorder %s144, 15
      %s146 = scalar_select %p145, %s144, 15
      %s147 = smul.addr %s146, 4
      %s148 = scalar_lea.vmem %s0, %s147
      %p149 = pneg %p35
      %p150 = pneg %p32
      %p151 = pneg %p56
      %p152 = pneg %p53
      %p153 = pneg %p77
      %p154 = pneg %p74
      %p155 = pneg %p103
      %p156 = pneg %p100
      %s157 = smul.u32 8, %s14
      %p158 = scmp.lt.s32.totalorder %s157, 15
      %s159 = scalar_select %p158, %s157, 15
      %s160 = smul.addr %s159, 4
      %s161 = scalar_lea.vmem %s3, %s160
      %s162 = smul.u32 8, %s14
      %p163 = scmp.lt.s32.totalorder %s162, 15
      %s164 = scalar_select %p163, %s162, 15
      %s165 = smul.addr %s164, 4
      %s166 = scalar_lea.vmem %s0, %s165
      %s167 = smul.u32 8, %s14
      %s168 = smul.u32 8, %s14
      %p169 = scmp.lt.s32.totalorder %s168, 15
      %s170 = scalar_select %p169, %s168, 15
      %s171 = smul.addr %s170, 4
      %s172 = scalar_lea.vmem %s3, %s171
      %s173 = smul.u32 8, %s14
      %v175 = vld [vmem:[%s166] sm:$0xf]
      %v176 = vld [vmem:[%s166 + $0x4] sm:$0xf]
      %v177 = vld [vmem:[%s166 + $0x8] sm:$0xf]
      %v178 = vld [vmem:[%s166 + $0xc] sm:$0xf]
      %v179 = vld [vmem:[%s166 + $0x10] sm:$0xf]
      %v180 = vld [vmem:[%s166 + $0x14] sm:$0xf]
      %v181 = vld [vmem:[%s166 + $0x18] sm:$0xf]
      %v182 = vld [vmem:[%s166 + $0x1c] sm:$0xf]
      %v183 = vld [vmem:[%s1] sm:$0xf]
      %v184 = vld [vmem:[%s1 + $0x4] sm:$0xf]
      %v185 = vld [vmem:[%s1 + $0x8] sm:$0xf]
      %v186 = vld [vmem:[%s1 + $0xc] sm:$0xf]
      %v187 = vld [vmem:[%s2] sm:$0x1]
      %v189 = vlaneseq
      %v190 = vshrl.u32 %v189, 7
      %v191 = vsub.s32 0, %v190
      %v192 = vrot.slane %v187, %v191
      %v202 = vunpack.c.l.b16 %v175
      %v203 = vunpack.c.l.b16 %v176
      %v204 = vunpack.c.l.b16 %v177
      %v205 = vunpack.c.l.b16 %v178
      %v206 = vunpack.c.l.b16 %v179
      %v207 = vunpack.c.l.b16 %v180
      %v208 = vunpack.c.l.b16 %v181
      %v209 = vunpack.c.l.b16 %v182
      %v210 = vpack.c.b16 %v203, %v202
      %v211 = vpack.c.b16 %v205, %v204
      %v212 = vpack.c.b16 %v207, %v206
      %v213 = vpack.c.b16 %v209, %v208
      %v218 = vunpack.c.l.b16 %v183
      %v219 = vunpack.c.l.b16 %v184
      %v220 = vunpack.c.l.b16 %v185
      %v221 = vunpack.c.l.b16 %v186
      %v222 = vpack.c.b16 %v219, %v218
      %v223 = vpack.c.b16 %v221, %v220
      %vm226 = vcmask 261120
      %v228 = vsel %vm226, %v210, 0
      %v231 = vsel %vm226, %v211, 0
      %v234 = vsel %vm226, %v212, 0
      %v237 = vsel %vm226, %v213, 0
      %239 = vmatprep.subr.bf16.mxu0 0
      %240 = vmatpush1.bf16.msra.mxu0 0
      %241 = vmatprep.subr.bf16.mxu0 0
      %242 = vmatpush1.bf16.msra.mxu0 0
      %243 = vmatprep.subr.bf16.mxu0 0
      %244 = vmatpush1.bf16.msra.mxu0 0
      %245 = vmatprep.subr.bf16.mxu0 0
      %246 = vmatpush1.bf16.msra.mxu0 0
      %247 = vmatprep.subr.bf16.mxu0 0
      %248 = vmatpush1.bf16.msra.mxu0 0
      %249 = vmatprep.subr.bf16.mxu0 0
      %250 = vmatpush1.bf16.msra.mxu0 0
      %251 = vmatprep.subr.bf16.mxu0 0
      %252 = vmatpush1.bf16.msra.mxu0 %v223
      %253 = vmatprep.subr.bf16.mxu0 0
      %254 = vmatpush1.bf16.msra.mxu0 %v222
      %255 = vmatprep.subr.bf16.mxu0 0
      %256 = vmatpush2.bf16.msra.mxu0 0
      %257 = vmatprep.subr.bf16.mxu0 0
      %258 = vmatpush2.bf16.msra.mxu0 0
      %259 = vmatprep.subr.bf16.mxu0 0
      %260 = vmatpush2.bf16.msra.mxu0 0
      %261 = vmatprep.subr.bf16.mxu0 0
      %262 = vmatpush2.bf16.msra.mxu0 0
      %263 = vmatprep.subr.bf16.mxu0 0
      %264 = vmatpush2.bf16.msra.mxu0 0
      %265 = vmatprep.subr.bf16.mxu0 0
      %266 = vmatpush2.bf16.msra.mxu0 0
      %267 = vmatprep.subr.bf16.mxu0 0
      %268 = vmatpush2.bf16.msra.mxu0 0
      %269 = vmatprep.subr.bf16.mxu0 0
      %270 = vmatpush2.bf16.msra.mxu0 0
      %271 = vmatprep.mubr.bf16.mxu0 0
      %272 = vmatmul.mubr.bf16.gmra.mxu0 %v228
      %v273 = vpop.f32.mrf.mxu0
      %v274 = vadd.f32 %v192, %v273
      %v275 = vpop.f32.mrf.mxu0
      %v276 = vpop.f32.mrf.mxu0
      %v277 = vadd.f32 %v192, %v276
      %v278 = vpop.f32.mrf.mxu0
      %279 = vmatprep.mubr.bf16.mxu0 0
      %280 = vmatmul.mubr.bf16.gmra.mxu0 %v231
      %v281 = vpop.f32.mrf.mxu0
      %v282 = vadd.f32 %v192, %v281
      %v283 = vpop.f32.mrf.mxu0
      %v284 = vpop.f32.mrf.mxu0
      %v285 = vadd.f32 %v192, %v284
      %v286 = vpop.f32.mrf.mxu0
      %287 = vmatprep.mubr.bf16.mxu0 0
      %288 = vmatmul.mubr.bf16.gmra.mxu0 %v234
      %v289 = vpop.f32.mrf.mxu0
      %v290 = vadd.f32 %v192, %v289
      %v291 = vpop.f32.mrf.mxu0
      %v292 = vpop.f32.mrf.mxu0
      %v293 = vadd.f32 %v192, %v292
      %v294 = vpop.f32.mrf.mxu0
      %295 = vmatprep.mubr.bf16.mxu0 0
      %296 = vmatmul.mubr.bf16.gmra.mxu0 %v237
      %v297 = vpop.f32.mrf.mxu0
      %v298 = vadd.f32 %v192, %v297
      %v299 = vpop.f32.mrf.mxu0
      %v300 = vpop.f32.mrf.mxu0
      %v301 = vadd.f32 %v192, %v300
      %v302 = vpop.f32.mrf.mxu0
      %303 = vdwg.mxu0
      %v304 = vpack.c.bf16 %v277, %v274
      %v305 = vpack.c.bf16 %v285, %v282
      %v306 = vpack.c.bf16 %v293, %v290
      %v307 = vpack.c.bf16 %v301, %v298
      %v312 = vunpack.c.l.b16 %v304
      %v313 = vunpack.c.h.b16 %v304
      %v314 = vunpack.c.l.b16 %v305
      %v315 = vunpack.c.h.b16 %v305
      %v316 = vunpack.c.l.b16 %v306
      %v317 = vunpack.c.h.b16 %v306
      %v318 = vunpack.c.l.b16 %v307
      %v319 = vunpack.c.h.b16 %v307
      %v320 = vpack.c.b16 %v312, %v312
      %v321 = vpack.c.b16 %v313, %v313
      %v322 = vpack.c.b16 %v314, %v314
      %v323 = vpack.c.b16 %v315, %v315
      %v324 = vpack.c.b16 %v316, %v316
      %v325 = vpack.c.b16 %v317, %v317
      %v326 = vpack.c.b16 %v318, %v318
      %v327 = vpack.c.b16 %v319, %v319
      %336 = vst [vmem:[%s172] sm:$0xf] %v320
      %337 = vst [vmem:[%s172 + $0x4] sm:$0xf] %v321
      %338 = vst [vmem:[%s172 + $0x8] sm:$0xf] %v322
      %339 = vst [vmem:[%s172 + $0xc] sm:$0xf] %v323
      %340 = vst [vmem:[%s172 + $0x10] sm:$0xf] %v324
      %341 = vst [vmem:[%s172 + $0x14] sm:$0xf] %v325
      %342 = vst [vmem:[%s172 + $0x18] sm:$0xf] %v326
      %343 = vst [vmem:[%s172 + $0x1c] sm:$0xf] %v327
      %s344 = smul.u32 8, %s14
      %p345 = scmp.lt.s32.totalorder %s344, 15
      %s346 = scalar_select %p345, %s344, 15
      %s347 = smul.addr %s346, 4
      %s348 = scalar_lea.vmem %s3, %s347
      // Predicated region
      $region33: #{resnet_forward.22} parent=31 // pred_check
        %p349 = pneg %p100
      $region34: #{resnet_forward.22} parent=31 // pred_check_branch
        %351 = sbr.rel (%p349) target = $region36
      $region35: #{resnet_forward.22} parent=31 // pred_region
        %s352 = smul.u32 8, %s14
      $region36: #{resnet_forward.22} parent=31 // pred_fallthru
        _
    $region32: #{resnet_forward.22} parent=5 // pred_fallthru
      _
    %p353 = scmp.le.s32.totalorder 2, %s9
    // Predicated region
    $region37: #{resnet_forward.22} parent=5 // pred_check
      %p354 = pneg %p353
    $region38: #{resnet_forward.22} parent=5 // pred_check_branch
      %356 = sbr.rel (%p354) target = $region40
    $region39: #{resnet_forward.22} parent=5 // pred_region
      %s357 = ssub.s32 %s9, 2
      // Predicated region
      $region41: #{resnet_forward.22} parent=39 // pred_check
        %p358 = pneg %p106
      $region42: #{resnet_forward.22} parent=39 // pred_check_branch
        %360 = sbr.rel (%p358) target = $region44
      $region43: #{resnet_forward.22} parent=39 // pred_region
        %s361 = smul.u32 8, %s15
        %p362 = scmp.lt.s32.totalorder %s361, 15
        %s363 = scalar_select %p362, %s361, 15
        %s364 = smul.addr %s363, 4
        %s365 = scalar_lea.vmem %s3, %s364
      $region44: #{resnet_forward.22} parent=39 // pred_fallthru
        _
    $region40: #{resnet_forward.22} parent=5 // pred_fallthru
      _
  $region6: #{resnet_forward.22} parent=0 // loop_footer
    %s13 = sadd.s32 1, %s9
  $region7: #{resnet_forward.22} parent=0 // loop_footer_branch
    %8 = sbr.rel target = $region3
  $region8: #{resnet_forward.22} parent=0 // loop_exit
    _

// kernel: resnet_forward.25
$region0: #{resnet_forward.25}
  #allocation0 [shape = 'u32[]', space=smem, size = 0x4, offset = 0x4, fixed_abs, tag = 'smem constant byte address 0x4 - core index']
  #allocation1 [shape = 'u32[144,128]{1,0:T(1,128)}', space=vmem, size = 0x12000, scoped, tag = 'internal scratch']
  %s0 = inlined_call_operand.vmem [shape: bf16[2,64,64], index: 0, kind: input, shape index: {}]
  %s1 = inlined_call_operand.vmem [shape: f32[64,10], index: 1, kind: input, shape index: {}]
  %s2 = inlined_call_operand.vmem [shape: f32[1,10], index: 2, kind: input, shape index: {}]
  %s3 = inlined_call_operand.hbm [shape: f32[2,10], index: 3, kind: output, shape index: {0}]
  %s4 = inlined_call_operand.hbm [shape: f32[2,64], index: 4, kind: output, shape index: {1}]
  %5 = xla_tuple %s3, %s4
  %s6 = sld [smem:[#allocation0]]
  $region30: #{resnet_forward.25} parent=0
    _
  %s8 = ssub.s32 1, %s6
  %s9 = scalar_select 0, %s8, %s6
  $region1: #{resnet_forward.25} parent=0
    #allocation2 [shape = 'u8[1024]{0}', space=vmem, size = 0x400, scoped, tag = 'output window, operand 0, single buffered']
    #allocation3 [shape = 's32[1]{0}', space=sflag, size = 0x4, scoped, tag = 'scoped memory for resnet_forward.25']
    #allocation4 [shape = 'u8[1024]{0}', space=vmem, size = 0x400, scoped, tag = 'output window, operand 1, single buffered']
    #allocation5 [shape = 's32[1]{0}', space=sflag, size = 0x4, scoped, tag = 'scoped memory for resnet_forward.25']
    %10 = vsyncpa [#allocation3], 0
    %11 = vsyncpa [#allocation5], 0
    // Predicated region
    $region2: #{resnet_forward.25} parent=1 // pred_check
      _
    $region3: #{resnet_forward.25} parent=1 // pred_check_branch
      %13 = sbr.rel (0) target = $region5
    $region4: #{resnet_forward.25} parent=1 // pred_region
      _
    $region5: #{resnet_forward.25} parent=1 // pred_fallthru
      _
    // Predicated region
    $region6: #{resnet_forward.25} parent=1 // pred_check
      _
    $region7: #{resnet_forward.25} parent=1 // pred_check_branch
      %15 = sbr.rel (0) target = $region9
    $region8: #{resnet_forward.25} parent=1 // pred_region
      _
    $region9: #{resnet_forward.25} parent=1 // pred_fallthru
      _
    // Predicated region
    $region10: #{resnet_forward.25} parent=1 // pred_check
      _
    $region11: #{resnet_forward.25} parent=1 // pred_check_branch
      %17 = sbr.rel (0) target = $region13
    $region12: #{resnet_forward.25} parent=1 // pred_region
      _
    $region13: #{resnet_forward.25} parent=1 // pred_fallthru
      _
    %v18 = vld [vmem:[%s0] sm:$0xf]
    %v19 = vld [vmem:[%s0 + $0x4] sm:$0xf]
    %v20 = vld [vmem:[%s0 + $0x8] sm:$0xf]
    %v21 = vld [vmem:[%s0 + $0xc] sm:$0xf]
    %v22 = vld [vmem:[%s0 + $0x10] sm:$0xf]
    %v23 = vld [vmem:[%s0 + $0x14] sm:$0xf]
    %v24 = vld [vmem:[%s0 + $0x18] sm:$0xf]
    %v25 = vld [vmem:[%s0 + $0x1c] sm:$0xf]
    %v26 = vld [vmem:[%s0 + $0x20] sm:$0xf]
    %v27 = vld [vmem:[%s0 + $0x24] sm:$0xf]
    %v28 = vld [vmem:[%s0 + $0x28] sm:$0xf]
    %v29 = vld [vmem:[%s0 + $0x2c] sm:$0xf]
    %v30 = vld [vmem:[%s0 + $0x30] sm:$0xf]
    %v31 = vld [vmem:[%s0 + $0x34] sm:$0xf]
    %v32 = vld [vmem:[%s0 + $0x38] sm:$0xf]
    %v33 = vld [vmem:[%s0 + $0x3c] sm:$0xf]
    %v34 = vunpack.c.l.bf16 %v18
    %v35 = vunpack.c.l.bf16 %v19
    %v36 = vunpack.c.l.bf16 %v20
    %v37 = vunpack.c.l.bf16 %v21
    %v38 = vunpack.c.l.bf16 %v22
    %v39 = vunpack.c.l.bf16 %v23
    %v40 = vunpack.c.l.bf16 %v24
    %v41 = vunpack.c.l.bf16 %v25
    %v42 = vunpack.c.l.bf16 %v26
    %v43 = vunpack.c.l.bf16 %v27
    %v44 = vunpack.c.l.bf16 %v28
    %v45 = vunpack.c.l.bf16 %v29
    %v46 = vunpack.c.l.bf16 %v30
    %v47 = vunpack.c.l.bf16 %v31
    %v48 = vunpack.c.l.bf16 %v32
    %v49 = vunpack.c.l.bf16 %v33
    %vm50 = vcmask 523264
    %v51 = vsel %vm50, %v34, 0.0
    %v52 = vsel %vm50, %v35, 0.0
    %v53 = vadd.f32 %v51, %v52
    %v54 = vsel %vm50, %v36, 0.0
    %v55 = vadd.f32 %v53, %v54
    %v56 = vsel %vm50, %v37, 0.0
    %v57 = vadd.f32 %v55, %v56
    %v58 = vsel %vm50, %v38, 0.0
    %v59 = vadd.f32 %v57, %v58
    %v60 = vsel %vm50, %v39, 0.0
    %v61 = vadd.f32 %v59, %v60
    %v62 = vsel %vm50, %v40, 0.0
    %v63 = vadd.f32 %v61, %v62
    %v64 = vsel %vm50, %v41, 0.0
    %v65 = vadd.f32 %v63, %v64
    %v66 = vrot.slane %v65, 4
    %v67 = vadd.f32 %v65, %v66
    %v68 = vrot.slane %v67, 2
    %v69 = vadd.f32 %v67, %v68
    %v70 = vrot.slane %v69, 1
    %v71 = vadd.f32 %v69, %v70
    %v72 = vsel %vm50, %v42, 0.0
    %v73 = vsel %vm50, %v43, 0.0
    %v74 = vadd.f32 %v72, %v73
    %v75 = vsel %vm50, %v44, 0.0
    %v76 = vadd.f32 %v74, %v75
    %v77 = vsel %vm50, %v45, 0.0
    %v78 = vadd.f32 %v76, %v77
    %v79 = vsel %vm50, %v46, 0.0
    %v80 = vadd.f32 %v78, %v79
    %v81 = vsel %vm50, %v47, 0.0
    %v82 = vadd.f32 %v80, %v81
    %v83 = vsel %vm50, %v48, 0.0
    %v84 = vadd.f32 %v82, %v83
    %v85 = vsel %vm50, %v49, 0.0
    %v86 = vadd.f32 %v84, %v85
    %v87 = vrot.slane %v86, 4
    %v88 = vadd.f32 %v86, %v87
    %v89 = vrot.slane %v88, 2
    %v90 = vadd.f32 %v88, %v89
    %v91 = vrot.slane %v90, 1
    %v92 = vadd.f32 %v90, %v91
    %v93 = vrcp.pop 64.0
    %v94 = vmul.f32 %v71, %v93
    %v95 = vmul.f32 %v92, %v93
    %vm98 = vcmask 1041409
    %v99 = vsel %vm98, %v95, %v94
    %vm101 = vcmask 517120
    %102 = vst.msk [vmem:[#allocation4] sm:$0x3] %vm101, %v99
    %v103 = vld [vmem:[%s1] sm:$0xff]
    %v104 = vld [vmem:[%s1 + $0x8] sm:$0xff]
    %v105 = vld [vmem:[%s1 + $0x10] sm:$0xff]
    %v106 = vld [vmem:[%s1 + $0x18] sm:$0xff]
    %v107 = vld [vmem:[%s1 + $0x20] sm:$0xff]
    %v108 = vld [vmem:[%s1 + $0x28] sm:$0xff]
    %v109 = vld [vmem:[%s1 + $0x30] sm:$0xff]
    %v110 = vld [vmem:[%s1 + $0x38] sm:$0xff]
    %v111 = vld [vmem:[%s2] sm:$0x1]
    %v113 = vlaneseq
    %v114 = vshrl.u32 %v113, 7
    %v115 = vsub.s32 0, %v114
    %v116 = vrot.slane %v111, %v115
    %v118 = vsel %vm50, %v99, 0
    %120 = vmatprep.subr.mxu0 0.0
    %121 = vmatpush1.msra.mxu0 0.0
    %122 = vmatprep.subr.mxu0 0.0
    %123 = vmatpush1.msra.mxu0 0.0
    %124 = vmatprep.subr.mxu0 0.0
    %125 = vmatpush1.msra.mxu0 0.0
    %126 = vmatprep.subr.mxu0 0.0
    %127 = vmatpush1.msra.mxu0 0.0
    %128 = vmatprep.subr.mxu0 0.0
    %129 = vmatpush1.msra.mxu0 0.0
    %130 = vmatprep.subr.mxu0 0.0
    %131 = vmatpush1.msra.mxu0 0.0
    %132 = vmatprep.subr.mxu0 0.0
    %133 = vmatpush1.msra.mxu0 0.0
    %134 = vmatprep.subr.mxu0 0.0
    %135 = vmatpush1.msra.mxu0 0.0
    %136 = vmatprep.subr.mxu0 0.0
    %137 = vmatpush1.msra.mxu0 %v110
    %138 = vmatprep.subr.mxu0 0.0
    %139 = vmatpush1.msra.mxu0 %v109
    %140 = vmatprep.subr.mxu0 0.0
    %141 = vmatpush1.msra.mxu0 %v108
    %142 = vmatprep.subr.mxu0 0.0
    %143 = vmatpush1.msra.mxu0 %v107
    %144 = vmatprep.subr.mxu0 0.0
    %145 = vmatpush1.msra.mxu0 %v106
    %146 = vmatprep.subr.mxu0 0.0
    %147 = vmatpush1.msra.mxu0 %v105
    %148 = vmatprep.subr.mxu0 0.0
    %149 = vmatpush1.msra.mxu0 %v104
    %150 = vmatprep.subr.mxu0 0.0
    %151 = vmatpush1.msra.mxu0 %v103
    %152 = vmatprep.subr.mxu0 0.0
    %153 = vmatpush2.msra.mxu0 0.0
    %154 = vmatprep.subr.mxu0 0.0
    %155 = vmatpush2.msra.mxu0 0.0
    %156 = vmatprep.subr.mxu0 0.0
    %157 = vmatpush2.msra.mxu0 0.0
    %158 = vmatprep.subr.mxu0 0.0
    %159 = vmatpush2.msra.mxu0 0.0
    %160 = vmatprep.subr.mxu0 0.0
    %161 = vmatpush2.msra.mxu0 0.0
    %162 = vmatprep.subr.mxu0 0.0
    %163 = vmatpush2.msra.mxu0 0.0
    %164 = vmatprep.subr.mxu0 0.0
    %165 = vmatpush2.msra.mxu0 0.0
    %166 = vmatprep.subr.mxu0 0.0
    %167 = vmatpush2.msra.mxu0 0.0
    %168 = vmatprep.subr.mxu0 0.0
    %169 = vmatpush2.msra.mxu0 0.0
    %170 = vmatprep.subr.mxu0 0.0
    %171 = vmatpush2.msra.mxu0 0.0
    %172 = vmatprep.subr.mxu0 0.0
    %173 = vmatpush2.msra.mxu0 0.0
    %174 = vmatprep.subr.mxu0 0.0
    %175 = vmatpush2.msra.mxu0 0.0
    %176 = vmatprep.subr.mxu0 0.0
    %177 = vmatpush2.msra.mxu0 0.0
    %178 = vmatprep.subr.mxu0 0.0
    %179 = vmatpush2.msra.mxu0 0.0
    %180 = vmatprep.subr.mxu0 0.0
    %181 = vmatpush2.msra.mxu0 0.0
    %182 = vmatprep.subr.mxu0 0.0
    %183 = vmatpush2.msra.mxu0 0.0
    %184 = vmatprep.mubr.f32.mxu0 0.0
    %185 = vmatmul.mubr.f32.gmra.mxu0 %v118
    %v186 = vpop.f32.mrf.mxu0
    %v187 = vadd.f32 %v116, %v186
    %v188 = vpop.f32.mrf.mxu0
    %189 = vdwg.mxu0
    %vm190 = vcmask 74752
    %191 = vst.msk [vmem:[#allocation2] sm:$0x3] %vm190, %v187
    // Predicated region
    $region14: #{resnet_forward.25} parent=1 // pred_check
      _
    $region15: #{resnet_forward.25} parent=1 // pred_check_branch
      %193 = sbr.rel (0) target = $region17
    $region16: #{resnet_forward.25} parent=1 // pred_region
      %s195 = ssub.s32 32, 32
      %196 = vsyncadd [#allocation3], %s195
      %s198 = sshll.u32 [#allocation2], 4
      %s199 = int_to_ptr.vmem [resolvable:$true] %s198
      %201 = dma.vmem_to_hbm [thread:$0]  %s199, 32, %s3, [#allocation3]
    $region17: #{resnet_forward.25} parent=1 // pred_fallthru
      _
    // Predicated region
    $region18: #{resnet_forward.25} parent=1 // pred_check
      _
    $region19: #{resnet_forward.25} parent=1 // pred_check_branch
      %203 = sbr.rel (0) target = $region21
    $region20: #{resnet_forward.25} parent=1 // pred_region
      %s205 = ssub.s32 32, 32
      %206 = vsyncadd [#allocation5], %s205
      %s208 = sshll.u32 [#allocation4], 4
      %s209 = int_to_ptr.vmem [resolvable:$true] %s208
      %211 = dma.vmem_to_hbm [thread:$0]  %s209, 32, %s4, [#allocation5]
    $region21: #{resnet_forward.25} parent=1 // pred_fallthru
      _
    // Predicated region
    $region22: #{resnet_forward.25} parent=1 // pred_check
      _
    $region23: #{resnet_forward.25} parent=1 // pred_check_branch
      %213 = sbr.rel (0) target = $region25
    $region24: #{resnet_forward.25} parent=1 // pred_region
      %214 = dma.done [#allocation3], 32
    $region25: #{resnet_forward.25} parent=1 // pred_fallthru
      _
    // Predicated region
    $region26: #{resnet_forward.25} parent=1 // pred_check
      _
    $region27: #{resnet_forward.25} parent=1 // pred_check_branch
      %216 = sbr.rel (0) target = $region29
    $region28: #{resnet_forward.25} parent=1 // pred_region
      %217 = dma.done [#allocation5], 32
    $region29: #{resnet_forward.25} parent=1 // pred_fallthru
      _
    %218 = vsyncpa [#allocation3], 1
    %219 = vsyncpa [#allocation5], 1

// kernel: resnet_forward.24
$region0: #{resnet_forward.24}
  #allocation0 [shape = 'u32[]', space=smem, size = 0x4, offset = 0x4, fixed_abs, tag = 'smem constant byte address 0x4 - core index']
  #allocation1 [shape = 'u32[144,128]{1,0:T(1,128)}', space=vmem, size = 0x12000, scoped, tag = 'internal scratch']
  %s0 = inlined_call_operand.vmem [shape: bf16[128,576], index: 0, kind: input, shape index: {}]
  %s1 = inlined_call_operand.vmem [shape: bf16[576,128], index: 1, kind: input, shape index: {}]
  %s2 = inlined_call_operand.vmem [shape: f32[1,128], index: 2, kind: input, shape index: {}]
  %s3 = inlined_call_operand.vmem [shape: bf16[128,128], index: 3, kind: input, shape index: {}]
  %s4 = inlined_call_operand.vmem [shape: bf16[128,128], index: 4, kind: output, shape index: {}]
  %s5 = sld [smem:[#allocation0]]
  $region49: #{resnet_forward.24} parent=0
    _
  %s7 = ssub.s32 1, %s5
  %s8 = scalar_select 0, %s7, %s5
  loop: start=0, step=1, limit=4
  $region2: #{resnet_forward.24} parent=0 // loop_pre_header
    _
  $region3: #{resnet_forward.24} parent=0 // loop_header
    %s10 = sphi 0, %s14
    %p11 = scmp.ge.s32.totalorder %s10, 4
    %s20 = sphi 0, %s22
    %s23 = sphi 0, %s20
    %s24 = sphi 0, %s23
    %s40 = sphi 0, %s24
    %s44 = sphi 0, %s44
    %s46 = sphi 0, %s44
    %s47 = sphi 0, %s46
    %s61 = sphi 0, %s47
    %s65 = sphi 0, %s65
    %s67 = sphi 0, %s65
    %s68 = sphi 0, %s67
    %s82 = sphi 0, %s68
    %s88 = sphi 0, %s90
    %s91 = sphi 0, %s88
    %s92 = sphi 0, %s91
    %s108 = sphi 0, %s92
    %s114 = sphi 0, %s116
    %s117 = sphi 0, %s114
    %s118 = sphi 0, %s117
    %s134 = sphi 0, %s118
  $region4: #{resnet_forward.24} parent=0 // loop_header_branch
    %13 = sbr.rel (%p11) target = $region8
  $region5: #{resnet_forward.24} parent=0 // loop_body
    %s15 = ssub.s32 %s10, 1
    %s16 = ssub.s32 %s10, 2
    %s17 = sadd.s32 %s10, 1
    %s18 = ssub.s32 %s10, %s17
    %p19 = scmp.eq.s32.totalorder %s18, 0
    %s21 = sadd.s32 %s20, 1
    %s22 = scalar_select %p19, %s20, %s21
    %p25 = pneg %p19
    %p26 = scmp.eq.s32.totalorder %s10, 1
    %p27 = por %p25, %p26
    %p28 = scmp.ne.s32.totalorder %s20, %s23
    %p29 = scmp.eq.s32.totalorder %s10, 0
    %p30 = por %p28, %p29
    %p31 = scmp.ne.s32.totalorder %s20, %s23
    %p32 = scmp.eq.s32.totalorder %s15, 1
    %p33 = por %p31, %p32
    %p34 = scmp.ne.s32.totalorder %s23, %s24
    %p35 = scmp.eq.s32.totalorder %s15, 0
    %p36 = por %p34, %p35
    %p37 = scmp.ne.s32.totalorder %s23, %s24
    %p38 = scmp.eq.s32.totalorder %s16, 1
    %p39 = por %p37, %p38
    %p41 = scmp.ne.s32.totalorder %s24, %s40
    %p42 = scmp.eq.s32.totalorder %s16, 0
    %p43 = por %p41, %p42
    %s45 = sadd.s32 %s44, 1
    %p48 = scmp.eq.s32.totalorder %s10, 1
    %p49 = scmp.ne.s32.totalorder %s44, %s46
    %p50 = scmp.eq.s32.totalorder %s10, 0
    %p51 = por %p49, %p50
    %p52 = scmp.ne.s32.totalorder %s44, %s46
    %p53 = scmp.eq.s32.totalorder %s15, 1
    %p54 = por %p52, %p53
    %p55 = scmp.ne.s32.totalorder %s46, %s47
    %p56 = scmp.eq.s32.totalorder %s15, 0
    %p57 = por %p55, %p56
    %p58 = scmp.ne.s32.totalorder %s46, %s47
    %p59 = scmp.eq.s32.totalorder %s16, 1
    %p60 = por %p58, %p59
    %p62 = scmp.ne.s32.totalorder %s47, %s61
    %p63 = scmp.eq.s32.totalorder %s16, 0
    %p64 = por %p62, %p63
    %s66 = sadd.s32 %s65, 1
    %p69 = scmp.eq.s32.totalorder %s10, 1
    %p70 = scmp.ne.s32.totalorder %s65, %s67
    %p71 = scmp.eq.s32.totalorder %s10, 0
    %p72 = por %p70, %p71
    %p73 = scmp.ne.s32.totalorder %s65, %s67
    %p74 = scmp.eq.s32.totalorder %s15, 1
    %p75 = por %p73, %p74
    %p76 = scmp.ne.s32.totalorder %s67, %s68
    %p77 = scmp.eq.s32.totalorder %s15, 0
    %p78 = por %p76, %p77
    %p79 = scmp.ne.s32.totalorder %s67, %s68
    %p80 = scmp.eq.s32.totalorder %s16, 1
    %p81 = por %p79, %p80
    %p83 = scmp.ne.s32.totalorder %s68, %s82
    %p84 = scmp.eq.s32.totalorder %s16, 0
    %p85 = por %p83, %p84
    %s86 = ssub.s32 %s10, %s17
    %p87 = scmp.eq.s32.totalorder %s86, 0
    %s89 = sadd.s32 %s88, 1
    %s90 = scalar_select %p87, %s88, %s89
    %p93 = pneg %p87
    %p94 = scmp.eq.s32.totalorder %s10, 1
    %p95 = por %p93, %p94
    %p96 = scmp.ne.s32.totalorder %s88, %s91
    %p97 = scmp.eq.s32.totalorder %s10, 0
    %p98 = por %p96, %p97
    %p99 = scmp.ne.s32.totalorder %s88, %s91
    %p100 = scmp.eq.s32.totalorder %s15, 1
    %p101 = por %p99, %p100
    %p102 = scmp.ne.s32.totalorder %s91, %s92
    %p103 = scmp.eq.s32.totalorder %s15, 0
    %p104 = por %p102, %p103
    %p105 = scmp.ne.s32.totalorder %s91, %s92
    %p106 = scmp.eq.s32.totalorder %s16, 1
    %p107 = por %p105, %p106
    %p109 = scmp.ne.s32.totalorder %s92, %s108
    %p110 = scmp.eq.s32.totalorder %s16, 0
    %p111 = por %p109, %p110
    %s112 = ssub.s32 %s10, %s17
    %p113 = scmp.eq.s32.totalorder %s112, 0
    %s115 = sadd.s32 %s114, 1
    %s116 = scalar_select %p113, %s114, %s115
    %p119 = pneg %p113
    %p120 = scmp.eq.s32.totalorder %s10, 1
    %p121 = por %p119, %p120
    %p122 = scmp.ne.s32.totalorder %s114, %s117
    %p123 = scmp.eq.s32.totalorder %s10, 0
    %p124 = por %p122, %p123
    %p125 = scmp.ne.s32.totalorder %s114, %s117
    %p126 = scmp.eq.s32.totalorder %s15, 1
    %p127 = por %p125, %p126
    %p128 = scmp.ne.s32.totalorder %s117, %s118
    %p129 = scmp.eq.s32.totalorder %s15, 0
    %p130 = por %p128, %p129
    %p131 = scmp.ne.s32.totalorder %s117, %s118
    %p132 = scmp.eq.s32.totalorder %s16, 1
    %p133 = por %p131, %p132
    %p135 = scmp.ne.s32.totalorder %s118, %s134
    %p136 = scmp.eq.s32.totalorder %s16, 0
    %p137 = por %p135, %p136
    %p138 = scmp.le.s32.totalorder 1, %s10
    %p139 = scmp.lt.s32.totalorder %s10, 3
    %p140 = pnand %p138, %p139
    %p141 = pneg %p140
    // Predicated region
    $region9: #{resnet_forward.24} parent=5 // pred_check
      _
    $region10: #{resnet_forward.24} parent=5 // pred_check_branch
      %143 = sbr.rel (%p140) target = $region12
    $region11: #{resnet_forward.24} parent=5 // pred_region
      %s144 = ssub.s32 %s10, 1
      // Predicated region
      $region13: #{resnet_forward.24} parent=11 // pred_check
        %p145 = pneg %p57
      $region14: #{resnet_forward.24} parent=11 // pred_check_branch
        %147 = sbr.rel (%p145) target = $region16
      $region15: #{resnet_forward.24} parent=11 // pred_region
        _
      $region16: #{resnet_forward.24} parent=11 // pred_fallthru
        _
      // Predicated region
      $region17: #{resnet_forward.24} parent=11 // pred_check
        %p148 = pneg %p78
      $region18: #{resnet_forward.24} parent=11 // pred_check_branch
        %150 = sbr.rel (%p148) target = $region20
      $region19: #{resnet_forward.24} parent=11 // pred_region
        _
      $region20: #{resnet_forward.24} parent=11 // pred_fallthru
        _
    $region12: #{resnet_forward.24} parent=5 // pred_fallthru
      _
    %p151 = scmp.lt.s32.totalorder %s10, 2
    // Predicated region
    $region21: #{resnet_forward.24} parent=5 // pred_check
      %p152 = pneg %p151
    $region22: #{resnet_forward.24} parent=5 // pred_check_branch
      %154 = sbr.rel (%p152) target = $region24
    $region23: #{resnet_forward.24} parent=5 // pred_region
      // Predicated region
      $region25: #{resnet_forward.24} parent=23 // pred_check
        %p155 = pneg %p30
      $region26: #{resnet_forward.24} parent=23 // pred_check_branch
        %157 = sbr.rel (%p155) target = $region28
      $region27: #{resnet_forward.24} parent=23 // pred_region
        %s158 = smul.u32 8, %s10
        %p159 = scmp.lt.s32.totalorder %s158, 15
        %s160 = scalar_select %p159, %s158, 15
        %s161 = smul.addr %s160, 5
        %s162 = smul.addr %s161, 4
        %s163 = scalar_lea.vmem %s0, %s162
        %s164 = smul.u32 8, %s10
      $region28: #{resnet_forward.24} parent=23 // pred_fallthru
        _
      // Predicated region
      $region29: #{resnet_forward.24} parent=23 // pred_check
        %p165 = pneg %p98
      $region30: #{resnet_forward.24} parent=23 // pred_check_branch
        %167 = sbr.rel (%p165) target = $region32
      $region31: #{resnet_forward.24} parent=23 // pred_region
        %s168 = smul.u32 8, %s10
        %p169 = scmp.lt.s32.totalorder %s168, 15
        %s170 = scalar_select %p169, %s168, 15
        %s171 = smul.addr %s170, 4
        %s172 = scalar_lea.vmem %s3, %s171
        %s173 = smul.u32 8, %s10
      $region32: #{resnet_forward.24} parent=23 // pred_fallthru
        _
    $region24: #{resnet_forward.24} parent=5 // pred_fallthru
      _
    %p174 = scmp.le.s32.totalorder 1, %s10
    %p175 = scmp.lt.s32.totalorder %s10, 3
    %p176 = pnand %p174, %p175
    %p177 = pneg %p176
    // Predicated region
    $region33: #{resnet_forward.24} parent=5 // pred_check
      _
    $region34: #{resnet_forward.24} parent=5 // pred_check_branch
      %179 = sbr.rel (%p176) target = $region36
    $region35: #{resnet_forward.24} parent=5 // pred_region
      %s180 = ssub.s32 %s10, 1
      %s181 = smul.u32 8, %s15
      %p182 = scmp.lt.s32.totalorder %s181, 15
      %s183 = scalar_select %p182, %s181, 15
      %s184 = smul.addr %s183, 5
      %s185 = smul.addr %s184, 4
      %s186 = scalar_lea.vmem %s0, %s185
      %p187 = pneg %p36
      %p188 = pneg %p33
      %p189 = pneg %p57
      %p190 = pneg %p54
      %p191 = pneg %p78
      %p192 = pneg %p75
      %s193 = smul.u32 8, %s15
      %p194 = scmp.lt.s32.totalorder %s193, 15
      %s195 = scalar_select %p194, %s193, 15
      %s196 = smul.addr %s195, 4
      %s197 = scalar_lea.vmem %s3, %s196
      %p198 = pneg %p104
      %p199 = pneg %p101
      %p200 = pneg %p130
      %p201 = pneg %p127
      %s202 = smul.u32 8, %s15
      %p203 = scmp.lt.s32.totalorder %s202, 15
      %s204 = scalar_select %p203, %s202, 15
      %s205 = smul.addr %s204, 4
      %s206 = scalar_lea.vmem %s4, %s205
      %s207 = smul.u32 8, %s15
      %p208 = scmp.lt.s32.totalorder %s207, 15
      %s209 = scalar_select %p208, %s207, 15
      %s210 = smul.addr %s209, 5
      %s211 = smul.addr %s210, 4
      %s212 = scalar_lea.vmem %s0, %s211
      %s213 = smul.u32 8, %s15
      %s214 = smul.u32 8, %s15
      %p215 = scmp.lt.s32.totalorder %s214, 15
      %s216 = scalar_select %p215, %s214, 15
      %s217 = smul.addr %s216, 4
      %s218 = scalar_lea.vmem %s3, %s217
      %s219 = smul.u32 8, %s15
      %s220 = smul.u32 8, %s15
      %p221 = scmp.lt.s32.totalorder %s220, 15
      %s222 = scalar_select %p221, %s220, 15
      %s223 = smul.addr %s222, 4
      %s224 = scalar_lea.vmem %s4, %s223
      %s225 = smul.u32 8, %s15
      %v227 = vld [vmem:[%s212] sm:$0xff]
      %v228 = vld [vmem:[%s212 + $0x8] sm:$0xff]
      %v229 = vld [vmem:[%s212 + $0x10] sm:$0xf]
      %v230 = vld [vmem:[%s212 + $0x14] sm:$0xff]
      %v231 = vld [vmem:[%s212 + $0x1c] sm:$0xff]
      %v232 = vld [vmem:[%s212 + $0x24] sm:$0xf]
      %v233 = vld [vmem:[%s212 + $0x28] sm:$0xff]
      %v234 = vld [vmem:[%s212 + $0x30] sm:$0xff]
      %v235 = vld [vmem:[%s212 + $0x38] sm:$0xf]
      %v236 = vld [vmem:[%s212 + $0x3c] sm:$0xff]
      %v237 = vld [vmem:[%s212 + $0x44] sm:$0xff]
      %v238 = vld [vmem:[%s212 + $0x4c] sm:$0xf]
      %v239 = vld [vmem:[%s212 + $0x50] sm:$0xff]
      %v240 = vld [vmem:[%s212 + $0x58] sm:$0xff]
      %v241 = vld [vmem:[%s212 + $0x60] sm:$0xf]
      %v242 = vld [vmem:[%s212 + $0x64] sm:$0xff]
      %v243 = vld [vmem:[%s212 + $0x6c] sm:$0xff]
      %v244 = vld [vmem:[%s212 + $0x74] sm:$0xf]
      %v245 = vld [vmem:[%s212 + $0x78] sm:$0xff]
      %v246 = vld [vmem:[%s212 + $0x80] sm:$0xff]
      %v247 = vld [vmem:[%s212 + $0x88] sm:$0xf]
      %v248 = vld [vmem:[%s212 + $0x8c] sm:$0xff]
      %v249 = vld [vmem:[%s212 + $0x94] sm:$0xff]
      %v250 = vld [vmem:[%s212 + $0x9c] sm:$0xf]
      %v251 = vld [vmem:[%s1] sm:$0xf]
      %v252 = vld [vmem:[%s1 + $0x4] sm:$0xf]
      %v253 = vld [vmem:[%s1 + $0x8] sm:$0xf]
      %v254 = vld [vmem:[%s1 + $0xc] sm:$0xf]
      %v255 = vld [vmem:[%s1 + $0x10] sm:$0xf]
      %v256 = vld [vmem:[%s1 + $0x14] sm:$0xf]
      %v257 = vld [vmem:[%s1 + $0x18] sm:$0xf]
      %v258 = vld [vmem:[%s1 + $0x1c] sm:$0xf]
      %v259 = vld [vmem:[%s1 + $0x20] sm:$0xf]
      %v260 = vld [vmem:[%s1 + $0x24] sm:$0xf]
      %v261 = vld [vmem:[%s1 + $0x28] sm:$0xf]
      %v262 = vld [vmem:[%s1 + $0x2c] sm:$0xf]
      %v263 = vld [vmem:[%s1 + $0x30] sm:$0xf]
      %v264 = vld [vmem:[%s1 + $0x34] sm:$0xf]
      %v265 = vld [vmem:[%s1 + $0x38] sm:$0xf]
      %v266 = vld [vmem:[%s1 + $0x3c] sm:$0xf]
      %v267 = vld [vmem:[%s1 + $0x40] sm:$0xf]
      %v268 = vld [vmem:[%s1 + $0x44] sm:$0xf]
      %v269 = vld [vmem:[%s1 + $0x48] sm:$0xf]
      %v270 = vld [vmem:[%s1 + $0x4c] sm:$0xf]
      %v271 = vld [vmem:[%s1 + $0x50] sm:$0xf]
      %v272 = vld [vmem:[%s1 + $0x54] sm:$0xf]
      %v273 = vld [vmem:[%s1 + $0x58] sm:$0xf]
      %v274 = vld [vmem:[%s1 + $0x5c] sm:$0xf]
      %v275 = vld [vmem:[%s1 + $0x60] sm:$0xf]
      %v276 = vld [vmem:[%s1 + $0x64] sm:$0xf]
      %v277 = vld [vmem:[%s1 + $0x68] sm:$0xf]
      %v278 = vld [vmem:[%s1 + $0x6c] sm:$0xf]
      %v279 = vld [vmem:[%s1 + $0x70] sm:$0xf]
      %v280 = vld [vmem:[%s1 + $0x74] sm:$0xf]
      %v281 = vld [vmem:[%s1 + $0x78] sm:$0xf]
      %v282 = vld [vmem:[%s1 + $0x7c] sm:$0xf]
      %v283 = vld [vmem:[%s1 + $0x80] sm:$0xf]
      %v284 = vld [vmem:[%s1 + $0x84] sm:$0xf]
      %v285 = vld [vmem:[%s1 + $0x88] sm:$0xf]
      %v286 = vld [vmem:[%s1 + $0x8c] sm:$0xf]
      %v287 = vld [vmem:[%s1 + $0x90] sm:$0xf]
      %v288 = vld [vmem:[%s1 + $0x94] sm:$0xf]
      %v289 = vld [vmem:[%s1 + $0x98] sm:$0xf]
      %v290 = vld [vmem:[%s1 + $0x9c] sm:$0xf]
      %v291 = vld [vmem:[%s1 + $0xa0] sm:$0xf]
      %v292 = vld [vmem:[%s1 + $0xa4] sm:$0xf]
      %v293 = vld [vmem:[%s1 + $0xa8] sm:$0xf]
      %v294 = vld [vmem:[%s1 + $0xac] sm:$0xf]
      %v295 = vld [vmem:[%s1 + $0xb0] sm:$0xf]
      %v296 = vld [vmem:[%s1 + $0xb4] sm:$0xf]
      %v297 = vld [vmem:[%s1 + $0xb8] sm:$0xf]
      %v298 = vld [vmem:[%s1 + $0xbc] sm:$0xf]
      %v299 = vld [vmem:[%s1 + $0xc0] sm:$0xf]
      %v300 = vld [vmem:[%s1 + $0xc4] sm:$0xf]
      %v301 = vld [vmem:[%s1 + $0xc8] sm:$0xf]
      %v302 = vld [vmem:[%s1 + $0xcc] sm:$0xf]
      %v303 = vld [vmem:[%s1 + $0xd0] sm:$0xf]
      %v304 = vld [vmem:[%s1 + $0xd4] sm:$0xf]
      %v305 = vld [vmem:[%s1 + $0xd8] sm:$0xf]
      %v306 = vld [vmem:[%s1 + $0xdc] sm:$0xf]
      %v307 = vld [vmem:[%s1 + $0xe0] sm:$0xf]
      %v308 = vld [vmem:[%s1 + $0xe4] sm:$0xf]
      %v309 = vld [vmem:[%s1 + $0xe8] sm:$0xf]
      %v310 = vld [vmem:[%s1 + $0xec] sm:$0xf]
      %v311 = vld [vmem:[%s1 + $0xf0] sm:$0xf]
      %v312 = vld [vmem:[%s1 + $0xf4] sm:$0xf]
      %v313 = vld [vmem:[%s1 + $0xf8] sm:$0xf]
      %v314 = vld [vmem:[%s1 + $0xfc] sm:$0xf]
      %v315 = vld [vmem:[%s1 + $0x100] sm:$0xf]
      %v316 = vld [vmem:[%s1 + $0x104] sm:$0xf]
      %v317 = vld [vmem:[%s1 + $0x108] sm:$0xf]
      %v318 = vld [vmem:[%s1 + $0x10c] sm:$0xf]
      %v319 = vld [vmem:[%s1 + $0x110] sm:$0xf]
      %v320 = vld [vmem:[%s1 + $0x114] sm:$0xf]
      %v321 = vld [vmem:[%s1 + $0x118] sm:$0xf]
      %v322 = vld [vmem:[%s1 + $0x11c] sm:$0xf]
      %v323 = vld [vmem:[%s2] sm:$0x1]
      %v325 = vlaneseq
      %v326 = vshrl.u32 %v325, 7
      %v327 = vsub.s32 0, %v326
      %v328 = vrot.slane %v323, %v327
      %v354 = vunpack.c.l.b16 %v227
      %v355 = vunpack.c.h.b16 %v227
      %v356 = vunpack.c.l.b16 %v228
      %v357 = vunpack.c.h.b16 %v228
      %v358 = vunpack.c.l.b16 %v229
      %v359 = vunpack.c.l.b16 %v230
      %v360 = vunpack.c.h.b16 %v230
      %v361 = vunpack.c.l.b16 %v231
      %v362 = vunpack.c.h.b16 %v231
      %v363 = vunpack.c.l.b16 %v232
      %v364 = vunpack.c.l.b16 %v233
      %v365 = vunpack.c.h.b16 %v233
      %v366 = vunpack.c.l.b16 %v234
      %v367 = vunpack.c.h.b16 %v234
      %v368 = vunpack.c.l.b16 %v235
      %v369 = vunpack.c.l.b16 %v236
      %v370 = vunpack.c.h.b16 %v236
      %v371 = vunpack.c.l.b16 %v237
      %v372 = vunpack.c.h.b16 %v237
      %v373 = vunpack.c.l.b16 %v238
      %v374 = vunpack.c.l.b16 %v239
      %v375 = vunpack.c.h.b16 %v239
      %v376 = vunpack.c.l.b16 %v240
      %v377 = vunpack.c.h.b16 %v240
      %v378 = vunpack.c.l.b16 %v241
      %v379 = vunpack.c.l.b16 %v242
      %v380 = vunpack.c.h.b16 %v242
      %v381 = vunpack.c.l.b16 %v243
      %v382 = vunpack.c.h.b16 %v243
      %v383 = vunpack.c.l.b16 %v244
      %v384 = vunpack.c.l.b16 %v245
      %v385 = vunpack.c.h.b16 %v245
      %v386 = vunpack.c.l.b16 %v246
      %v387 = vunpack.c.h.b16 %v246
      %v388 = vunpack.c.l.b16 %v247
      %v389 = vunpack.c.l.b16 %v248
      %v390 = vunpack.c.h.b16 %v248
      %v391 = vunpack.c.l.b16 %v249
      %v392 = vunpack.c.h.b16 %v249
      %v393 = vunpack.c.l.b16 %v250
      %v394 = vpack.c.b16 %v359, %v354
      %v395 = vpack.c.b16 %v360, %v355
      %v396 = vpack.c.b16 %v361, %v356
      %v397 = vpack.c.b16 %v362, %v357
      %v398 = vpack.c.b16 %v363, %v358
      %v399 = vpack.c.b16 %v369, %v364
      %v400 = vpack.c.b16 %v370, %v365
      %v401 = vpack.c.b16 %v371, %v366
      %v402 = vpack.c.b16 %v372, %v367
      %v403 = vpack.c.b16 %v373, %v368
      %v404 = vpack.c.b16 %v379, %v374
      %v405 = vpack.c.b16 %v380, %v375
      %v406 = vpack.c.b16 %v381, %v376
      %v407 = vpack.c.b16 %v382, %v377
      %v408 = vpack.c.b16 %v383, %v378
      %v409 = vpack.c.b16 %v389, %v384
      %v410 = vpack.c.b16 %v390, %v385
      %v411 = vpack.c.b16 %v391, %v386
      %v412 = vpack.c.b16 %v392, %v387
      %v413 = vpack.c.b16 %v393, %v388
      %v502 = vunpack.c.l.b16 %v251
      %v503 = vunpack.c.l.b16 %v252
      %v504 = vunpack.c.l.b16 %v253
      %v505 = vunpack.c.l.b16 %v254
      %v506 = vunpack.c.l.b16 %v255
      %v507 = vunpack.c.l.b16 %v256
      %v508 = vunpack.c.l.b16 %v257
      %v509 = vunpack.c.l.b16 %v258
      %v510 = vunpack.c.l.b16 %v259
      %v511 = vunpack.c.l.b16 %v260
      %v512 = vunpack.c.l.b16 %v261
      %v513 = vunpack.c.l.b16 %v262
      %v514 = vunpack.c.l.b16 %v263
      %v515 = vunpack.c.l.b16 %v264
      %v516 = vunpack.c.l.b16 %v265
      %v517 = vunpack.c.l.b16 %v266
      %v518 = vunpack.c.l.b16 %v267
      %v519 = vunpack.c.l.b16 %v268
      %v520 = vunpack.c.l.b16 %v269
      %v521 = vunpack.c.l.b16 %v270
      %v522 = vunpack.c.l.b16 %v271
      %v523 = vunpack.c.l.b16 %v272
      %v524 = vunpack.c.l.b16 %v273
      %v525 = vunpack.c.l.b16 %v274
      %v526 = vunpack.c.l.b16 %v275
      %v527 = vunpack.c.l.b16 %v276
      %v528 = vunpack.c.l.b16 %v277
      %v529 = vunpack.c.l.b16 %v278
      %v530 = vunpack.c.l.b16 %v279
      %v531 = vunpack.c.l.b16 %v280
      %v532 = vunpack.c.l.b16 %v281
      %v533 = vunpack.c.l.b16 %v282
      %v534 = vunpack.c.l.b16 %v283
      %v535 = vunpack.c.l.b16 %v284
      %v536 = vunpack.c.l.b16 %v285
      %v537 = vunpack.c.l.b16 %v286
      %v538 = vunpack.c.l.b16 %v287
      %v539 = vunpack.c.l.b16 %v288
      %v540 = vunpack.c.l.b16 %v289
      %v541 = vunpack.c.l.b16 %v290
      %v542 = vunpack.c.l.b16 %v291
      %v543 = vunpack.c.l.b16 %v292
      %v544 = vunpack.c.l.b16 %v293
      %v545 = vunpack.c.l.b16 %v294
      %v546 = vunpack.c.l.b16 %v295
      %v547 = vunpack.c.l.b16 %v296
      %v548 = vunpack.c.l.b16 %v297
      %v549 = vunpack.c.l.b16 %v298
      %v550 = vunpack.c.l.b16 %v299
      %v551 = vunpack.c.l.b16 %v300
      %v552 = vunpack.c.l.b16 %v301
      %v553 = vunpack.c.l.b16 %v302
      %v554 = vunpack.c.l.b16 %v303
      %v555 = vunpack.c.l.b16 %v304
      %v556 = vunpack.c.l.b16 %v305
      %v557 = vunpack.c.l.b16 %v306
      %v558 = vunpack.c.l.b16 %v307
      %v559 = vunpack.c.l.b16 %v308
      %v560 = vunpack.c.l.b16 %v309
      %v561 = vunpack.c.l.b16 %v310
      %v562 = vunpack.c.l.b16 %v311
      %v563 = vunpack.c.l.b16 %v312
      %v564 = vunpack.c.l.b16 %v313
      %v565 = vunpack.c.l.b16 %v314
      %v566 = vunpack.c.l.b16 %v315
      %v567 = vunpack.c.l.b16 %v316
      %v568 = vunpack.c.l.b16 %v317
      %v569 = vunpack.c.l.b16 %v318
      %v570 = vunpack.c.l.b16 %v319
      %v571 = vunpack.c.l.b16 %v320
      %v572 = vunpack.c.l.b16 %v321
      %v573 = vunpack.c.l.b16 %v322
      %v574 = vpack.c.b16 %v503, %v502
      %v575 = vpack.c.b16 %v505, %v504
      %v576 = vpack.c.b16 %v507, %v506
      %v577 = vpack.c.b16 %v509, %v508
      %v578 = vpack.c.b16 %v511, %v510
      %v579 = vpack.c.b16 %v513, %v512
      %v580 = vpack.c.b16 %v515, %v514
      %v581 = vpack.c.b16 %v517, %v516
      %v582 = vpack.c.b16 %v519, %v518
      %v583 = vpack.c.b16 %v521, %v520
      %v584 = vpack.c.b16 %v523, %v522
      %v585 = vpack.c.b16 %v525, %v524
      %v586 = vpack.c.b16 %v527, %v526
      %v587 = vpack.c.b16 %v529, %v528
      %v588 = vpack.c.b16 %v531, %v530
      %v589 = vpack.c.b16 %v533, %v532
      %v590 = vpack.c.b16 %v535, %v534
      %v591 = vpack.c.b16 %v537, %v536
      %v592 = vpack.c.b16 %v539, %v538
      %v593 = vpack.c.b16 %v541, %v540
      %v594 = vpack.c.b16 %v543, %v542
      %v595 = vpack.c.b16 %v545, %v544
      %v596 = vpack.c.b16 %v547, %v546
      %v597 = vpack.c.b16 %v549, %v548
      %v598 = vpack.c.b16 %v551, %v550
      %v599 = vpack.c.b16 %v553, %v552
      %v600 = vpack.c.b16 %v555, %v554
      %v601 = vpack.c.b16 %v557, %v556
      %v602 = vpack.c.b16 %v559, %v558
      %v603 = vpack.c.b16 %v561, %v560
      %v604 = vpack.c.b16 %v563, %v562
      %v605 = vpack.c.b16 %v565, %v564
      %v606 = vpack.c.b16 %v567, %v566
      %v607 = vpack.c.b16 %v569, %v568
      %v608 = vpack.c.b16 %v571, %v570
      %v609 = vpack.c.b16 %v573, %v572
      %vm646 = vcmask 523264
      %v648 = vsel %vm646, %v398, 0
      %v651 = vsel %vm646, %v403, 0
      %v654 = vsel %vm646, %v408, 0
      %v657 = vsel %vm646, %v413, 0
      %659 = vmatprep.subr.bf16.mxu0 0
      %660 = vmatpush1.bf16.msra.mxu0 %v581
      %661 = vmatprep.subr.bf16.mxu0 0
      %662 = vmatpush1.bf16.msra.mxu0 %v580
      %663 = vmatprep.subr.bf16.mxu0 0
      %664 = vmatpush1.bf16.msra.mxu0 %v579
      %665 = vmatprep.subr.bf16.mxu0 0
      %666 = vmatpush1.bf16.msra.mxu0 %v578
      %667 = vmatprep.subr.bf16.mxu0 0
      %668 = vmatpush1.bf16.msra.mxu0 %v577
      %669 = vmatprep.subr.bf16.mxu0 0
      %670 = vmatpush1.bf16.msra.mxu0 %v576
      %671 = vmatprep.subr.bf16.mxu0 0
      %672 = vmatpush1.bf16.msra.mxu0 %v575
      %673 = vmatprep.subr.bf16.mxu0 0
      %674 = vmatpush1.bf16.msra.mxu0 %v574
      %675 = vmatprep.subr.bf16.mxu0 0
      %676 = vmatpush2.bf16.msra.mxu0 %v589
      %677 = vmatprep.subr.bf16.mxu0 0
      %678 = vmatpush2.bf16.msra.mxu0 %v588
      %679 = vmatprep.subr.bf16.mxu0 0
      %680 = vmatpush2.bf16.msra.mxu0 %v587
      %681 = vmatprep.subr.bf16.mxu0 0
      %682 = vmatpush2.bf16.msra.mxu0 %v586
      %683 = vmatprep.subr.bf16.mxu0 0
      %684 = vmatpush2.bf16.msra.mxu0 %v585
      %685 = vmatprep.subr.bf16.mxu0 0
      %686 = vmatpush2.bf16.msra.mxu0 %v584
      %687 = vmatprep.subr.bf16.mxu0 0
      %688 = vmatpush2.bf16.msra.mxu0 %v583
      %689 = vmatprep.subr.bf16.mxu0 0
      %690 = vmatpush2.bf16.msra.mxu0 %v582
      %691 = vmatprep.mubr.bf16.mxu0 %v395
      %692 = vmatmul.mubr.bf16.gmra.mxu0 %v394
      %v693 = vpop.f32.mrf.mxu0
      %v694 = vadd.f32 %v328, %v693
      %v695 = vpop.f32.mrf.mxu0
      %v696 = vpop.f32.mrf.mxu0
      %v697 = vadd.f32 %v328, %v696
      %v698 = vpop.f32.mrf.mxu0
      %699 = vmatprep.mubr.bf16.mxu0 %v400
      %700 = vmatmul.mubr.bf16.gmra.mxu0 %v399
      %v701 = vpop.f32.mrf.mxu0
      %v702 = vadd.f32 %v328, %v701
      %v703 = vpop.f32.mrf.mxu0
      %v704 = vpop.f32.mrf.mxu0
      %v705 = vadd.f32 %v328, %v704
      %v706 = vpop.f32.mrf.mxu0
      %707 = vmatprep.mubr.bf16.mxu0 %v405
      %708 = vmatmul.mubr.bf16.gmra.mxu0 %v404
      %v709 = vpop.f32.mrf.mxu0
      %v710 = vadd.f32 %v328, %v709
      %v711 = vpop.f32.mrf.mxu0
      %v712 = vpop.f32.mrf.mxu0
      %v713 = vadd.f32 %v328, %v712
      %v714 = vpop.f32.mrf.mxu0
      %715 = vmatprep.mubr.bf16.mxu0 %v410
      %716 = vmatmul.mubr.bf16.gmra.mxu0 %v409
      %v717 = vpop.f32.mrf.mxu0
      %v718 = vadd.f32 %v328, %v717
      %v719 = vpop.f32.mrf.mxu0
      %v720 = vpop.f32.mrf.mxu0
      %v721 = vadd.f32 %v328, %v720
      %v722 = vpop.f32.mrf.mxu0
      %723 = vdwg.mxu0
      %724 = vmatprep.subr.bf16.mxu0 0
      %725 = vmatpush1.bf16.msra.mxu0 %v597
      %726 = vmatprep.subr.bf16.mxu0 0
      %727 = vmatpush1.bf16.msra.mxu0 %v596
      %728 = vmatprep.subr.bf16.mxu0 0
      %729 = vmatpush1.bf16.msra.mxu0 %v595
      %730 = vmatprep.subr.bf16.mxu0 0
      %731 = vmatpush1.bf16.msra.mxu0 %v594
      %732 = vmatprep.subr.bf16.mxu0 0
      %733 = vmatpush1.bf16.msra.mxu0 %v593
      %734 = vmatprep.subr.bf16.mxu0 0
      %735 = vmatpush1.bf16.msra.mxu0 %v592
      %736 = vmatprep.subr.bf16.mxu0 0
      %737 = vmatpush1.bf16.msra.mxu0 %v591
      %738 = vmatprep.subr.bf16.mxu0 0
      %739 = vmatpush1.bf16.msra.mxu0 %v590
      %740 = vmatprep.subr.bf16.mxu0 0
      %741 = vmatpush2.bf16.msra.mxu0 %v605
      %742 = vmatprep.subr.bf16.mxu0 0
      %743 = vmatpush2.bf16.msra.mxu0 %v604
      %744 = vmatprep.subr.bf16.mxu0 0
      %745 = vmatpush2.bf16.msra.mxu0 %v603
      %746 = vmatprep.subr.bf16.mxu0 0
      %747 = vmatpush2.bf16.msra.mxu0 %v602
      %748 = vmatprep.subr.bf16.mxu0 0
      %749 = vmatpush2.bf16.msra.mxu0 %v601
      %750 = vmatprep.subr.bf16.mxu0 0
      %751 = vmatpush2.bf16.msra.mxu0 %v600
      %752 = vmatprep.subr.bf16.mxu0 0
      %753 = vmatpush2.bf16.msra.mxu0 %v599
      %754 = vmatprep.subr.bf16.mxu0 0
      %755 = vmatpush2.bf16.msra.mxu0 %v598
      %756 = vmatprep.mubr.bf16.mxu0 %v397
      %757 = vmatmul.mubr.bf16.gmra.mxu0 %v396
      %v758 = vpop.f32.mrf.mxu0
      %v759 = vadd.f32 %v694, %v758
      %v760 = vpop.f32.mrf.mxu0
      %v761 = vpop.f32.mrf.mxu0
      %v762 = vadd.f32 %v697, %v761
      %v763 = vpop.f32.mrf.mxu0
      %764 = vmatprep.mubr.bf16.mxu0 %v402
      %765 = vmatmul.mubr.bf16.gmra.mxu0 %v401
      %v766 = vpop.f32.mrf.mxu0
      %v767 = vadd.f32 %v702, %v766
      %v768 = vpop.f32.mrf.mxu0
      %v769 = vpop.f32.mrf.mxu0
      %v770 = vadd.f32 %v705, %v769
      %v771 = vpop.f32.mrf.mxu0
      %772 = vmatprep.mubr.bf16.mxu0 %v407
      %773 = vmatmul.mubr.bf16.gmra.mxu0 %v406
      %v774 = vpop.f32.mrf.mxu0
      %v775 = vadd.f32 %v710, %v774
      %v776 = vpop.f32.mrf.mxu0
      %v777 = vpop.f32.mrf.mxu0
      %v778 = vadd.f32 %v713, %v777
      %v779 = vpop.f32.mrf.mxu0
      %780 = vmatprep.mubr.bf16.mxu0 %v412
      %781 = vmatmul.mubr.bf16.gmra.mxu0 %v411
      %v782 = vpop.f32.mrf.mxu0
      %v783 = vadd.f32 %v718, %v782
      %v784 = vpop.f32.mrf.mxu0
      %v785 = vpop.f32.mrf.mxu0
      %v786 = vadd.f32 %v721, %v785
      %v787 = vpop.f32.mrf.mxu0
      %788 = vdwg.mxu0
      %789 = vmatprep.subr.bf16.mxu0 0
      %790 = vmatpush1.bf16.msra.mxu0 0
      %791 = vmatprep.subr.bf16.mxu0 0
      %792 = vmatpush1.bf16.msra.mxu0 0
      %793 = vmatprep.subr.bf16.mxu0 0
      %794 = vmatpush1.bf16.msra.mxu0 0
      %795 = vmatprep.subr.bf16.mxu0 0
      %796 = vmatpush1.bf16.msra.mxu0 0
      %797 = vmatprep.subr.bf16.mxu0 0
      %798 = vmatpush1.bf16.msra.mxu0 %v609
      %799 = vmatprep.subr.bf16.mxu0 0
      %800 = vmatpush1.bf16.msra.mxu0 %v608
      %801 = vmatprep.subr.bf16.mxu0 0
      %802 = vmatpush1.bf16.msra.mxu0 %v607
      %803 = vmatprep.subr.bf16.mxu0 0
      %804 = vmatpush1.bf16.msra.mxu0 %v606
      %805 = vmatprep.subr.bf16.mxu0 0
      %806 = vmatpush2.bf16.msra.mxu0 0
      %807 = vmatprep.subr.bf16.mxu0 0
      %808 = vmatpush2.bf16.msra.mxu0 0
      %809 = vmatprep.subr.bf16.mxu0 0
      %810 = vmatpush2.bf16.msra.mxu0 0
      %811 = vmatprep.subr.bf16.mxu0 0
      %812 = vmatpush2.bf16.msra.mxu0 0
      %813 = vmatprep.subr.bf16.mxu0 0
      %814 = vmatpush2.bf16.msra.mxu0 0
      %815 = vmatprep.subr.bf16.mxu0 0
      %816 = vmatpush2.bf16.msra.mxu0 0
      %817 = vmatprep.subr.bf16.mxu0 0
      %818 = vmatpush2.bf16.msra.mxu0 0
      %819 = vmatprep.subr.bf16.mxu0 0
      %820 = vmatpush2.bf16.msra.mxu0 0
      %821 = vmatprep.mubr.bf16.mxu0 0
      %822 = vmatmul.mubr.bf16.gmra.mxu0 %v648
      %v823 = vpop.f32.mrf.mxu0
      %v824 = vadd.f32 %v759, %v823
      %v825 = vpop.f32.mrf.mxu0
      %v826 = vpop.f32.mrf.mxu0
      %v827 = vadd.f32 %v762, %v826
      %v828 = vpop.f32.mrf.mxu0
      %829 = vmatprep.mubr.bf16.mxu0 0
      %830 = vmatmul.mubr.bf16.gmra.mxu0 %v651
      %v831 = vpop.f32.mrf.mxu0
      %v832 = vadd.f32 %v767, %v831
      %v833 = vpop.f32.mrf.mxu0
      %v834 = vpop.f32.mrf.mxu0
      %v835 = vadd.f32 %v770, %v834
      %v836 = vpop.f32.mrf.mxu0
      %837 = vmatprep.mubr.bf16.mxu0 0
      %838 = vmatmul.mubr.bf16.gmra.mxu0 %v654
      %v839 = vpop.f32.mrf.mxu0
      %v840 = vadd.f32 %v775, %v839
      %v841 = vpop.f32.mrf.mxu0
      %v842 = vpop.f32.mrf.mxu0
      %v843 = vadd.f32 %v778, %v842
      %v844 = vpop.f32.mrf.mxu0
      %845 = vmatprep.mubr.bf16.mxu0 0
      %846 = vmatmul.mubr.bf16.gmra.mxu0 %v657
      %v847 = vpop.f32.mrf.mxu0
      %v848 = vadd.f32 %v783, %v847
      %v849 = vpop.f32.mrf.mxu0
      %v850 = vpop.f32.mrf.mxu0
      %v851 = vadd.f32 %v786, %v850
      %v852 = vpop.f32.mrf.mxu0
      %853 = vdwg.mxu0
      %v854 = vld [vmem:[%s218] sm:$0xf]
      %v855 = vld [vmem:[%s218 + $0x4] sm:$0xf]
      %v856 = vld [vmem:[%s218 + $0x8] sm:$0xf]
      %v857 = vld [vmem:[%s218 + $0xc] sm:$0xf]
      %v858 = vld [vmem:[%s218 + $0x10] sm:$0xf]
      %v859 = vld [vmem:[%s218 + $0x14] sm:$0xf]
      %v860 = vld [vmem:[%s218 + $0x18] sm:$0xf]
      %v861 = vld [vmem:[%s218 + $0x1c] sm:$0xf]
      %v862 = vunpack.c.l.bf16 %v854
      %v863 = vunpack.c.l.bf16 %v855
      %v864 = vunpack.c.l.bf16 %v856
      %v865 = vunpack.c.l.bf16 %v857
      %v866 = vunpack.c.l.bf16 %v858
      %v867 = vunpack.c.l.bf16 %v859
      %v868 = vunpack.c.l.bf16 %v860
      %v869 = vunpack.c.l.bf16 %v861
      %v870 = vadd.f32 %v824, %v862
      %v871 = vadd.f32 %v827, %v863
      %v872 = vadd.f32 %v832, %v864
      %v873 = vadd.f32 %v835, %v865
      %v874 = vadd.f32 %v840, %v866
      %v875 = vadd.f32 %v843, %v867
      %v876 = vadd.f32 %v848, %v868
      %v877 = vadd.f32 %v851, %v869
      %v878 = vmax.f32 %v870, 0.0
      %v879 = vmax.f32 %v871, 0.0
      %v880 = vmax.f32 %v872, 0.0
      %v881 = vmax.f32 %v873, 0.0
      %v882 = vmax.f32 %v874, 0.0
      %v883 = vmax.f32 %v875, 0.0
      %v884 = vmax.f32 %v876, 0.0
      %v885 = vmax.f32 %v877, 0.0
      %v886 = vpack.c.bf16 %v879, %v878
      %v887 = vpack.c.bf16 %v881, %v880
      %v888 = vpack.c.bf16 %v883, %v882
      %v889 = vpack.c.bf16 %v885, %v884
      %v894 = vunpack.c.l.b16 %v886
      %v895 = vunpack.c.h.b16 %v886
      %v896 = vunpack.c.l.b16 %v887
      %v897 = vunpack.c.h.b16 %v887
      %v898 = vunpack.c.l.b16 %v888
      %v899 = vunpack.c.h.b16 %v888
      %v900 = vunpack.c.l.b16 %v889
      %v901 = vunpack.c.h.b16 %v889
      %v902 = vpack.c.b16 %v894, %v894
      %v903 = vpack.c.b16 %v895, %v895
      %v904 = vpack.c.b16 %v896, %v896
      %v905 = vpack.c.b16 %v897, %v897
      %v906 = vpack.c.b16 %v898, %v898
      %v907 = vpack.c.b16 %v899, %v899
      %v908 = vpack.c.b16 %v900, %v900
      %v909 = vpack.c.b16 %v901, %v901
      %918 = vst [vmem:[%s224] sm:$0xf] %v902
      %919 = vst [vmem:[%s224 + $0x4] sm:$0xf] %v903
      %920 = vst [vmem:[%s224 + $0x8] sm:$0xf] %v904
      %921 = vst [vmem:[%s224 + $0xc] sm:$0xf] %v905
      %922 = vst [vmem:[%s224 + $0x10] sm:$0xf] %v906
      %923 = vst [vmem:[%s224 + $0x14] sm:$0xf] %v907
      %924 = vst [vmem:[%s224 + $0x18] sm:$0xf] %v908
      %925 = vst [vmem:[%s224 + $0x1c] sm:$0xf] %v909
      %s926 = smul.u32 8, %s15
      %p927 = scmp.lt.s32.totalorder %s926, 15
      %s928 = scalar_select %p927, %s926, 15
      %s929 = smul.addr %s928, 4
      %s930 = scalar_lea.vmem %s4, %s929
      // Predicated region
      $region37: #{resnet_forward.24} parent=35 // pred_check
        %p931 = pneg %p127
      $region38: #{resnet_forward.24} parent=35 // pred_check_branch
        %933 = sbr.rel (%p931) target = $region40
      $region39: #{resnet_forward.24} parent=35 // pred_region
        %s934 = smul.u32 8, %s15
      $region40: #{resnet_forward.24} parent=35 // pred_fallthru
        _
    $region36: #{resnet_forward.24} parent=5 // pred_fallthru
      _
    %p935 = scmp.le.s32.totalorder 2, %s10
    // Predicated region
    $region41: #{resnet_forward.24} parent=5 // pred_check
      %p936 = pneg %p935
    $region42: #{resnet_forward.24} parent=5 // pred_check_branch
      %938 = sbr.rel (%p936) target = $region44
    $region43: #{resnet_forward.24} parent=5 // pred_region
      %s939 = ssub.s32 %s10, 2
      // Predicated region
      $region45: #{resnet_forward.24} parent=43 // pred_check
        %p940 = pneg %p133
      $region46: #{resnet_forward.24} parent=43 // pred_check_branch
        %942 = sbr.rel (%p940) target = $region48
      $region47: #{resnet_forward.24} parent=43 // pred_region
        %s943 = smul.u32 8, %s16
        %p944 = scmp.lt.s32.totalorder %s943, 15
        %s945 = scalar_select %p944, %s943, 15
        %s946 = smul.addr %s945, 4
        %s947 = scalar_lea.vmem %s4, %s946
      $region48: #{resnet_forward.24} parent=43 // pred_fallthru
        _
    $region44: #{resnet_forward.24} parent=5 // pred_fallthru
      _
  $region6: #{resnet_forward.24} parent=0 // loop_footer
    %s14 = sadd.s32 1, %s10
  $region7: #{resnet_forward.24} parent=0 // loop_footer_branch
    %9 = sbr.rel target = $region3
  $region8: #{resnet_forward.24} parent=0 // loop_exit
    _

</llo_original>
